<compile_context>
chip_gen: v6e
topology: v6e:2x2x1
jax: 0.10.0
libtpu: 0.0.40
codegen_flags: <defaults>
</compile_context>

<pallas_src>
import functools
import math

import jax
import jax.numpy as jnp
from jax.experimental import pallas as pl
from jax.experimental.pallas import tpu as pltpu


# ---------------------------------------------------------------------------
# SeqAllToAll4D emulation (world_size = 1 -> identity).
# TODO(synk): multi-device all-to-all would be jax.lax.all_to_all under
# shard_map; with a single process the exchange degenerates to identity.
# ---------------------------------------------------------------------------
def seq_all_to_all_4d(x, scatter_idx, gather_idx, world_size=1):
    assert x.shape[scatter_idx] % world_size == 0
    if world_size == 1:
        return x
    raise NotImplementedError("multi-device all-to-all not emulated in-script")


# ---------------------------------------------------------------------------
# Flash attention Pallas kernel (online softmax, all heads per grid step).
# ---------------------------------------------------------------------------
def _flash_kernel(q_ref, k_ref, v_ref, o_ref, m_sc, l_sc, acc_sc,
                  *, scale, causal, tq, tk, num_heads, head_dim):
    qi = pl.program_id(1)
    kv = pl.program_id(2)

    @pl.when(kv == 0)
    def _init():
        m_sc[...] = jnp.full_like(m_sc, -jnp.inf)
        l_sc[...] = jnp.zeros_like(l_sc)
        acc_sc[...] = jnp.zeros_like(acc_sc)

    def _update(apply_mask):
        q = q_ref[0]                               # (tq, H*D) compute dtype
        k = k_ref[0]                               # (tk, H*D)
        v = v_ref[0]                               # (tk, H*D)

        if apply_mask:
            row = qi * tq + jax.lax.broadcasted_iota(jnp.int32, (tq, tk), 0)
            col = kv * tk + jax.lax.broadcasted_iota(jnp.int32, (tq, tk), 1)
            mask = row >= col

        for h in range(num_heads):
            lo, hi = h * head_dim, (h + 1) * head_dim
            qh = q[:, lo:hi]                       # (tq, D)
            kh = k[:, lo:hi]                       # (tk, D)
            vh = v[:, lo:hi]                       # (tk, D)

            # Q @ K^T, native-dtype (bf16) operands, f32 accumulation on MXU.
            s = jax.lax.dot_general(
                qh, kh, (((1,), (1,)), ((), ())),
                preferred_element_type=jnp.float32)          # (tq, tk) f32
            if apply_mask:
                s = jnp.where(mask, s, -1e30)

            m_prev = m_sc[:, h:h + 1]                        # (tq, 1)
            m_new = jnp.maximum(m_prev, s.max(axis=-1, keepdims=True))
            # softmax_scale folded into the (f32) exp argument:
            #   softmax(scale*s) = exp(scale*(s - max(s))) / sum(...)
            alpha = jnp.exp((m_prev - m_new) * scale)
            p = jnp.exp((s - m_new) * scale)
            l_sc[:, h:h + 1] = alpha * l_sc[:, h:h + 1] + p.sum(
                axis=-1, keepdims=True)
            acc_sc[:, lo:hi] = alpha * acc_sc[:, lo:hi] + jnp.dot(
                p.astype(vh.dtype), vh, preferred_element_type=jnp.float32)
            m_sc[:, h:h + 1] = m_new

    if causal:
        q_end = (qi + 1) * tq
        needs_any = kv * tk < q_end                            # not fully masked
        fully_unmasked = qi * tq >= (kv + 1) * tk - 1          # fully below diag
        # Unmasked path (no iota/compare/select) for fully-allowed blocks;
        # masked path only for blocks straddling the diagonal.
        pl.when(jnp.logical_and(needs_any, fully_unmasked))(
            lambda: _update(False))
        pl.when(jnp.logical_and(needs_any, jnp.logical_not(fully_unmasked)))(
            lambda: _update(True))
    else:
        _update(False)

    @pl.when(kv == pl.num_programs(2) - 1)
    def _finalize():
        inv_l = pl.reciprocal(l_sc[...], approx=True)          # (tq, H)
        for h in range(num_heads):
            lo, hi = h * head_dim, (h + 1) * head_dim
            acc_sc[:, lo:hi] = acc_sc[:, lo:hi] * inv_l[:, h:h + 1]
        # Single lane-dense (tq, H*D) store.
        o_ref[0] = acc_sc[...].astype(o_ref.dtype)


def flash_attention(q, k, v, softmax_scale=None, causal=False,
                    block_q=256, block_k=512):
    """q, k, v: [B, S, H, D] (flash_attn_func convention). Returns [B, S, H, D]."""
    B, S, H, D = q.shape
    out_dtype = q.dtype
    if softmax_scale is None:
        softmax_scale = 1.0 / math.sqrt(D)

    # bf16 operands for the MXU (no native f32 MXU path); softmax statistics
    # and the accumulator stay f32 inside the kernel.
    compute_dtype = jnp.bfloat16 if q.dtype == jnp.float32 else q.dtype

    HD = H * D
    # Trailing-dim collapse is layout-preserving (no HBM transpose/copy).
    q3 = q.reshape(B, S, HD).astype(compute_dtype)
    k3 = k.reshape(B, S, HD).astype(compute_dtype)
    v3 = v.reshape(B, S, HD).astype(compute_dtype)

    tq = min(block_q, S)
    tk = min(block_k, S)
    assert S % tq == 0 and S % tk == 0, "sequence length must divide block sizes"

    def q_map(b, i, j):
        return (b, i, 0)

    def kv_map(b, i, j):
        if causal:
            # Clamp to the last KV block intersecting the causal mask for this
            # Q tile: fully-masked blocks re-use the resident block, so no
            # HBM->VMEM DMA is issued for them.
            j = jnp.minimum(j, ((i + 1) * tq - 1) // tk)
        return (b, j, 0)

    kern = functools.partial(_flash_kernel, scale=softmax_scale, causal=causal,
                             tq=tq, tk=tk, num_heads=H, head_dim=D)

    out = pl.pallas_call(
        kern,
        out_shape=jax.ShapeDtypeStruct((B, S, HD), out_dtype),
        grid_spec=pltpu.PrefetchScalarGridSpec(
            num_scalar_prefetch=0,
            grid=(B, S // tq, S // tk),
            in_specs=[
                pl.BlockSpec((1, tq, HD), q_map),
                pl.BlockSpec((1, tk, HD), kv_map),
                pl.BlockSpec((1, tk, HD), kv_map),
            ],
            out_specs=pl.BlockSpec((1, tq, HD), q_map),
            scratch_shapes=[
                pltpu.VMEM((tq, H), jnp.float32),    # running max m (per head)
                pltpu.VMEM((tq, H), jnp.float32),    # running denom l (per head)
                pltpu.VMEM((tq, HD), jnp.float32),   # running numerator acc
            ],
        ),
        compiler_params=pltpu.CompilerParams(
            dimension_semantics=("parallel", "parallel", "arbitrary"),
            vmem_limit_bytes=32 * 1024 * 1024),
    )(q3, k3, v3)

    return out.reshape(B, S, H, D)


# ---------------------------------------------------------------------------
# UlyssesAttention (JAX / Pallas version)
# ---------------------------------------------------------------------------
class UlyssesAttention:
    def __init__(self, scatter_idx: int = 2, gather_idx: int = 1):
        self.scatter_idx = scatter_idx
        self.gather_idx = gather_idx
        self.world_size = 1  # single-device sequence-parallel group

    def __call__(self, query, key, value, dropout_p=0.0, softmax_scale=None,
                 causal=False):
        assert dropout_p == 0.0  # TODO(synk): dropout inside kernel (pltpu.prng_*)
        q = seq_all_to_all_4d(query, self.scatter_idx, self.gather_idx, self.world_size)
        k = seq_all_to_all_4d(key, self.scatter_idx, self.gather_idx, self.world_size)
        v = seq_all_to_all_4d(value, self.scatter_idx, self.gather_idx, self.world_size)
        ctx = flash_attention(q, k, v, softmax_scale=softmax_scale, causal=causal)
        return seq_all_to_all_4d(ctx, self.gather_idx, self.scatter_idx, self.world_size)


# ---------------------------------------------------------------------------
# Reference (pure JAX, f32) attention for a correctness sanity check.
# ---------------------------------------------------------------------------
def _ref_attention(q, k, v, softmax_scale=None, causal=False):
    B, S, H, D = q.shape
    if softmax_scale is None:
        softmax_scale = 1.0 / math.sqrt(D)
    qf = q.astype(jnp.float32)
    kf = k.astype(jnp.float32)
    vf = v.astype(jnp.float32)
    s = jnp.einsum("bqhd,bkhd->bhqk", qf, kf) * softmax_scale
    if causal:
        mask = jnp.tril(jnp.ones((S, S), dtype=bool))
        s = jnp.where(mask[None, None], s, -jnp.inf)
    p = jax.nn.softmax(s, axis=-1)
    return jnp.einsum("bhqk,bkhd->bqhd", p, vf)


if __name__ == "__main__":
    key = jax.random.PRNGKey(0)
    kq, kk, kv_ = jax.random.split(key, 3)

    B, S, H, D = 2, 128, 4, 32  # [batch, seq(local shard), heads, head_dim]
    q = jax.random.normal(kq, (B, S, H, D), dtype=jnp.float32).astype(jnp.bfloat16)
    k = jax.random.normal(kk, (B, S, H, D), dtype=jnp.float32).astype(jnp.bfloat16)
    v = jax.random.normal(kv_, (B, S, H, D), dtype=jnp.float32).astype(jnp.bfloat16)

    attn = UlyssesAttention(scatter_idx=2, gather_idx=1)

    # Non-causal (module default) path.
    out = attn(q, k, v, dropout_p=0.0, softmax_scale=None, causal=False)
    out = jax.block_until_ready(out)
    ref = _ref_attention(q, k, v, softmax_scale=None, causal=False)
    assert out.shape == (B, S, H, D)
    assert out.dtype == q.dtype
    assert jnp.allclose(out.astype(jnp.float32), ref, atol=3e-2, rtol=3e-2)

    # Causal path with smaller blocks to exercise block skipping, the clamped
    # K/V index_map and both masked/unmasked branches.
    out_c = flash_attention(q, k, v, softmax_scale=None, causal=True,
                            block_q=64, block_k=64)
    out_c = jax.block_until_ready(out_c)
    ref_c = _ref_attention(q, k, v, softmax_scale=None, causal=True)
    assert jnp.allclose(out_c.astype(jnp.float32), ref_c, atol=3e-2, rtol=3e-2)

    print("KERNEL_OK")
</pallas_src>

<mosaic_0001>
module attributes {stable_mosaic.version = 11 : i64} {
  func.func @_flash_kernel(%arg0: i32, %arg1: i32, %arg2: i32, %arg3: memref<1x128x128xbf16, #tpu.memory_space<vmem>>, %arg4: memref<1x128x128xbf16, #tpu.memory_space<vmem>>, %arg5: memref<1x128x128xbf16, #tpu.memory_space<vmem>>, %arg6: memref<1x128x128xbf16, #tpu.memory_space<vmem>>, %arg7: memref<128x4xf32, #tpu.memory_space<vmem>>, %arg8: memref<128x4xf32, #tpu.memory_space<vmem>>, %arg9: memref<128x128xf32, #tpu.memory_space<vmem>>) attributes {dimension_semantics = [#tpu.dimension_semantics<parallel>, #tpu.dimension_semantics<parallel>, #tpu.dimension_semantics<arbitrary>], iteration_bounds = array<i64: 2, 1, 1>, scalar_prefetch = 0 : i64, scratch_operands = 3 : i64, tpu.core_type = #tpu.core_type<tc>, window_params = [{transform_indices = @transform_0, window_bounds = array<i64: 1, 128, 128>}, {transform_indices = @transform_1, window_bounds = array<i64: 1, 128, 128>}, {transform_indices = @transform_2, window_bounds = array<i64: 1, 128, 128>}, {transform_indices = @transform_3, window_bounds = array<i64: 1, 128, 128>}]} {
    %c0_i32 = arith.constant 0 : i32
    %0 = arith.cmpi eq, %arg2, %c0_i32 : i32
    %1 = arith.extui %0 : i1 to i32
    %c0_i32_0 = arith.constant 0 : i32
    %2 = arith.cmpi ne, %1, %c0_i32_0 : i32
    scf.if %2 {
      %cst_76 = arith.constant 0xFF800000 : f32
      %136 = vector.broadcast %cst_76 : f32 to vector<128x4xf32>
      %c0_77 = arith.constant 0 : index
      %c0_78 = arith.constant 0 : index
      %137 = vector.load %arg7[%c0_77, %c0_78] : memref<128x4xf32, #tpu.memory_space<vmem>>, vector<128x4xf32>
      tpu.vector_store %arg7[%c0_77, %c0_78], %136 {strides = array<i32>} : memref<128x4xf32, #tpu.memory_space<vmem>>, vector<128x4xf32>,
      %cst_79 = arith.constant 0.000000e+00 : f32
      %138 = vector.broadcast %cst_79 : f32 to vector<128x4xf32>
      %c0_80 = arith.constant 0 : index
      %c0_81 = arith.constant 0 : index
      %139 = vector.load %arg8[%c0_80, %c0_81] : memref<128x4xf32, #tpu.memory_space<vmem>>, vector<128x4xf32>
      tpu.vector_store %arg8[%c0_80, %c0_81], %138 {strides = array<i32>} : memref<128x4xf32, #tpu.memory_space<vmem>>, vector<128x4xf32>,
      %cst_82 = arith.constant 0.000000e+00 : f32
      %140 = vector.broadcast %cst_82 : f32 to vector<128x128xf32>
      %c0_83 = arith.constant 0 : index
      %c0_84 = arith.constant 0 : index
      %141 = vector.load %arg9[%c0_83, %c0_84] : memref<128x128xf32, #tpu.memory_space<vmem>>, vector<128x128xf32>
      tpu.vector_store %arg9[%c0_83, %c0_84], %140 {strides = array<i32>} : memref<128x128xf32, #tpu.memory_space<vmem>>, vector<128x128xf32>,
    } else {
    }
    %c0 = arith.constant 0 : index
    %c0_1 = arith.constant 0 : index
    %c0_2 = arith.constant 0 : index
    %3 = vector.load %arg3[%c0, %c0_1, %c0_2] : memref<1x128x128xbf16, #tpu.memory_space<vmem>>, vector<1x128x128xbf16>
    %4 = vector.shape_cast %3 : vector<1x128x128xbf16> to vector<128x128xbf16>
    %c0_3 = arith.constant 0 : index
    %c0_4 = arith.constant 0 : index
    %c0_5 = arith.constant 0 : index
    %5 = vector.load %arg4[%c0_3, %c0_4, %c0_5] : memref<1x128x128xbf16, #tpu.memory_space<vmem>>, vector<1x128x128xbf16>
    %6 = vector.shape_cast %5 : vector<1x128x128xbf16> to vector<128x128xbf16>
    %c0_6 = arith.constant 0 : index
    %c0_7 = arith.constant 0 : index
    %c0_8 = arith.constant 0 : index
    %7 = vector.load %arg5[%c0_6, %c0_7, %c0_8] : memref<1x128x128xbf16, #tpu.memory_space<vmem>>, vector<1x128x128xbf16>
    %8 = vector.shape_cast %7 : vector<1x128x128xbf16> to vector<128x128xbf16>
    %9 = vector.extract_strided_slice %4 {offsets = [0, 0], sizes = [128, 32], strides = [1, 1]} : vector<128x128xbf16> to vector<128x32xbf16>
    %10 = vector.extract_strided_slice %6 {offsets = [0, 0], sizes = [128, 32], strides = [1, 1]} : vector<128x128xbf16> to vector<128x32xbf16>
    %11 = vector.extract_strided_slice %8 {offsets = [0, 0], sizes = [128, 32], strides = [1, 1]} : vector<128x128xbf16> to vector<128x32xbf16>
    %cst = arith.constant dense<0.000000e+00> : vector<128x128xf32>
    %12 = tpu.matmul %9, %10, %cst {dimension_numbers = #tpu.dot_dimension_numbers<[1], [1], [0], [0], [0, 0, 1, 0], [], []>} : vector<128x32xbf16>, vector<128x32xbf16>, vector<128x128xf32> -> vector<128x128xf32>
    %c0_9 = arith.constant 0 : index
    %c0_10 = arith.constant 0 : index
    %13 = vector.load %arg7[%c0_9, %c0_10] : memref<128x4xf32, #tpu.memory_space<vmem>>, vector<128x1xf32>
    %cst_11 = arith.constant dense<0xFF800000> : vector<128xf32>
    %14 = vector.multi_reduction <maximumf>, %12, %cst_11 [1] : vector<128x128xf32> to vector<128xf32>
    %15 = vector.shape_cast %14 : vector<128xf32> to vector<128x1xf32>
    %16 = arith.maximumf %13, %15 : vector<128x1xf32>
    %17 = arith.subf %13, %16 : vector<128x1xf32>
    %cst_12 = arith.constant 0.176776692 : f32
    %18 = vector.broadcast %cst_12 : f32 to vector<128x1xf32>
    %19 = arith.mulf %17, %18 : vector<128x1xf32>
    %20 = math.exp %19 : vector<128x1xf32>
    %21 = vector.broadcast %16 : vector<128x1xf32> to vector<128x128xf32>
    %22 = arith.subf %12, %21 : vector<128x128xf32>
    %cst_13 = arith.constant 0.176776692 : f32
    %23 = vector.broadcast %cst_13 : f32 to vector<128x128xf32>
    %24 = arith.mulf %22, %23 : vector<128x128xf32>
    %25 = math.exp %24 : vector<128x128xf32>
    %c0_14 = arith.constant 0 : index
    %c0_15 = arith.constant 0 : index
    %26 = vector.load %arg8[%c0_14, %c0_15] : memref<128x4xf32, #tpu.memory_space<vmem>>, vector<128x1xf32>
    %27 = arith.mulf %20, %26 : vector<128x1xf32>
    %cst_16 = arith.constant dense<0.000000e+00> : vector<128xf32>
    %28 = vector.multi_reduction <add>, %25, %cst_16 [1] : vector<128x128xf32> to vector<128xf32>
    %29 = vector.shape_cast %28 : vector<128xf32> to vector<128x1xf32>
    %30 = arith.addf %27, %29 : vector<128x1xf32>
    %c0_17 = arith.constant 0 : index
    %c0_18 = arith.constant 0 : index
    %31 = vector.load %arg8[%c0_17, %c0_18] : memref<128x4xf32, #tpu.memory_space<vmem>>, vector<128x1xf32>
    tpu.vector_store %arg8[%c0_17, %c0_18], %30 {strides = array<i32>} : memref<128x4xf32, #tpu.memory_space<vmem>>, vector<128x1xf32>,
    %c0_19 = arith.constant 0 : index
    %c0_20 = arith.constant 0 : index
    %32 = vector.load %arg9[%c0_19, %c0_20] : memref<128x128xf32, #tpu.memory_space<vmem>>, vector<128x32xf32>
    %33 = vector.broadcast %20 : vector<128x1xf32> to vector<128x32xf32>
    %34 = arith.mulf %33, %32 : vector<128x32xf32>
    %35 = arith.truncf %25 : vector<128x128xf32> to vector<128x128xbf16>
    %cst_21 = arith.constant dense<0.000000e+00> : vector<128x32xf32>
    %36 = tpu.matmul %35, %11, %cst_21 {dimension_numbers = #tpu.dot_dimension_numbers<[1], [0], [0], [1], [0, 0, 1, 1], [], []>} : vector<128x128xbf16>, vector<128x32xbf16>, vector<128x32xf32> -> vector<128x32xf32>
    %37 = arith.addf %34, %36 : vector<128x32xf32>
    %c0_22 = arith.constant 0 : index
    %c0_23 = arith.constant 0 : index
    %38 = vector.load %arg9[%c0_22, %c0_23] : memref<128x128xf32, #tpu.memory_space<vmem>>, vector<128x32xf32>
    tpu.vector_store %arg9[%c0_22, %c0_23], %37 {strides = array<i32>} : memref<128x128xf32, #tpu.memory_space<vmem>>, vector<128x32xf32>,
    %c0_24 = arith.constant 0 : index
    %c0_25 = arith.constant 0 : index
    %39 = vector.load %arg7[%c0_24, %c0_25] : memref<128x4xf32, #tpu.memory_space<vmem>>, vector<128x1xf32>
    tpu.vector_store %arg7[%c0_24, %c0_25], %16 {strides = array<i32>} : memref<128x4xf32, #tpu.memory_space<vmem>>, vector<128x1xf32>,
    %40 = vector.extract_strided_slice %4 {offsets = [0, 32], sizes = [128, 32], strides = [1, 1]} : vector<128x128xbf16> to vector<128x32xbf16>
    %41 = vector.extract_strided_slice %6 {offsets = [0, 32], sizes = [128, 32], strides = [1, 1]} : vector<128x128xbf16> to vector<128x32xbf16>
    %42 = vector.extract_strided_slice %8 {offsets = [0, 32], sizes = [128, 32], strides = [1, 1]} : vector<128x128xbf16> to vector<128x32xbf16>
    %cst_26 = arith.constant dense<0.000000e+00> : vector<128x128xf32>
    %43 = tpu.matmul %40, %41, %cst_26 {dimension_numbers = #tpu.dot_dimension_numbers<[1], [1], [0], [0], [0, 0, 1, 0], [], []>} : vector<128x32xbf16>, vector<128x32xbf16>, vector<128x128xf32> -> vector<128x128xf32>
    %c0_27 = arith.constant 0 : index
    %c1 = arith.constant 1 : index
    %44 = vector.load %arg7[%c0_27, %c1] : memref<128x4xf32, #tpu.memory_space<vmem>>, vector<128x1xf32>
    %cst_28 = arith.constant dense<0xFF800000> : vector<128xf32>
    %45 = vector.multi_reduction <maximumf>, %43, %cst_28 [1] : vector<128x128xf32> to vector<128xf32>
    %46 = vector.shape_cast %45 : vector<128xf32> to vector<128x1xf32>
    %47 = arith.maximumf %44, %46 : vector<128x1xf32>
    %48 = arith.subf %44, %47 : vector<128x1xf32>
    %cst_29 = arith.constant 0.176776692 : f32
    %49 = vector.broadcast %cst_29 : f32 to vector<128x1xf32>
    %50 = arith.mulf %48, %49 : vector<128x1xf32>
    %51 = math.exp %50 : vector<128x1xf32>
    %52 = vector.broadcast %47 : vector<128x1xf32> to vector<128x128xf32>
    %53 = arith.subf %43, %52 : vector<128x128xf32>
    %cst_30 = arith.constant 0.176776692 : f32
    %54 = vector.broadcast %cst_30 : f32 to vector<128x128xf32>
    %55 = arith.mulf %53, %54 : vector<128x128xf32>
    %56 = math.exp %55 : vector<128x128xf32>
    %c0_31 = arith.constant 0 : index
    %c1_32 = arith.constant 1 : index
    %57 = vector.load %arg8[%c0_31, %c1_32] : memref<128x4xf32, #tpu.memory_space<vmem>>, vector<128x1xf32>
    %58 = arith.mulf %51, %57 : vector<128x1xf32>
    %cst_33 = arith.constant dense<0.000000e+00> : vector<128xf32>
    %59 = vector.multi_reduction <add>, %56, %cst_33 [1] : vector<128x128xf32> to vector<128xf32>
    %60 = vector.shape_cast %59 : vector<128xf32> to vector<128x1xf32>
    %61 = arith.addf %58, %60 : vector<128x1xf32>
    %c0_34 = arith.constant 0 : index
    %c1_35 = arith.constant 1 : index
    %62 = vector.load %arg8[%c0_34, %c1_35] : memref<128x4xf32, #tpu.memory_space<vmem>>, vector<128x1xf32>
    tpu.vector_store %arg8[%c0_34, %c1_35], %61 {strides = array<i32>} : memref<128x4xf32, #tpu.memory_space<vmem>>, vector<128x1xf32>,
    %c0_36 = arith.constant 0 : index
    %c32 = arith.constant 32 : index
    %63 = vector.load %arg9[%c0_36, %c32] : memref<128x128xf32, #tpu.memory_space<vmem>>, vector<128x32xf32>
    %64 = vector.broadcast %51 : vector<128x1xf32> to vector<128x32xf32>
    %65 = arith.mulf %64, %63 : vector<128x32xf32>
    %66 = arith.truncf %56 : vector<128x128xf32> to vector<128x128xbf16>
    %cst_37 = arith.constant dense<0.000000e+00> : vector<128x32xf32>
    %67 = tpu.matmul %66, %42, %cst_37 {dimension_numbers = #tpu.dot_dimension_numbers<[1], [0], [0], [1], [0, 0, 1, 1], [], []>} : vector<128x128xbf16>, vector<128x32xbf16>, vector<128x32xf32> -> vector<128x32xf32>
    %68 = arith.addf %65, %67 : vector<128x32xf32>
    %c0_38 = arith.constant 0 : index
    %c32_39 = arith.constant 32 : index
    %69 = vector.load %arg9[%c0_38, %c32_39] : memref<128x128xf32, #tpu.memory_space<vmem>>, vector<128x32xf32>
    tpu.vector_store %arg9[%c0_38, %c32_39], %68 {strides = array<i32>} : memref<128x128xf32, #tpu.memory_space<vmem>>, vector<128x32xf32>,
    %c0_40 = arith.constant 0 : index
    %c1_41 = arith.constant 1 : index
    %70 = vector.load %arg7[%c0_40, %c1_41] : memref<128x4xf32, #tpu.memory_space<vmem>>, vector<128x1xf32>
    tpu.vector_store %arg7[%c0_40, %c1_41], %47 {strides = array<i32>} : memref<128x4xf32, #tpu.memory_space<vmem>>, vector<128x1xf32>,
    %71 = vector.extract_strided_slice %4 {offsets = [0, 64], sizes = [128, 32], strides = [1, 1]} : vector<128x128xbf16> to vector<128x32xbf16>
    %72 = vector.extract_strided_slice %6 {offsets = [0, 64], sizes = [128, 32], strides = [1, 1]} : vector<128x128xbf16> to vector<128x32xbf16>
    %73 = vector.extract_strided_slice %8 {offsets = [0, 64], sizes = [128, 32], strides = [1, 1]} : vector<128x128xbf16> to vector<128x32xbf16>
    %cst_42 = arith.constant dense<0.000000e+00> : vector<128x128xf32>
    %74 = tpu.matmul %71, %72, %cst_42 {dimension_numbers = #tpu.dot_dimension_numbers<[1], [1], [0], [0], [0, 0, 1, 0], [], []>} : vector<128x32xbf16>, vector<128x32xbf16>, vector<128x128xf32> -> vector<128x128xf32>
    %c0_43 = arith.constant 0 : index
    %c2 = arith.constant 2 : index
    %75 = vector.load %arg7[%c0_43, %c2] : memref<128x4xf32, #tpu.memory_space<vmem>>, vector<128x1xf32>
    %cst_44 = arith.constant dense<0xFF800000> : vector<128xf32>
    %76 = vector.multi_reduction <maximumf>, %74, %cst_44 [1] : vector<128x128xf32> to vector<128xf32>
    %77 = vector.shape_cast %76 : vector<128xf32> to vector<128x1xf32>
    %78 = arith.maximumf %75, %77 : vector<128x1xf32>
    %79 = arith.subf %75, %78 : vector<128x1xf32>
    %cst_45 = arith.constant 0.176776692 : f32
    %80 = vector.broadcast %cst_45 : f32 to vector<128x1xf32>
    %81 = arith.mulf %79, %80 : vector<128x1xf32>
    %82 = math.exp %81 : vector<128x1xf32>
    %83 = vector.broadcast %78 : vector<128x1xf32> to vector<128x128xf32>
    %84 = arith.subf %74, %83 : vector<128x128xf32>
    %cst_46 = arith.constant 0.176776692 : f32
    %85 = vector.broadcast %cst_46 : f32 to vector<128x128xf32>
    %86 = arith.mulf %84, %85 : vector<128x128xf32>
    %87 = math.exp %86 : vector<128x128xf32>
    %c0_47 = arith.constant 0 : index
    %c2_48 = arith.constant 2 : index
    %88 = vector.load %arg8[%c0_47, %c2_48] : memref<128x4xf32, #tpu.memory_space<vmem>>, vector<128x1xf32>
    %89 = arith.mulf %82, %88 : vector<128x1xf32>
    %cst_49 = arith.constant dense<0.000000e+00> : vector<128xf32>
    %90 = vector.multi_reduction <add>, %87, %cst_49 [1] : vector<128x128xf32> to vector<128xf32>
    %91 = vector.shape_cast %90 : vector<128xf32> to vector<128x1xf32>
    %92 = arith.addf %89, %91 : vector<128x1xf32>
    %c0_50 = arith.constant 0 : index
    %c2_51 = arith.constant 2 : index
    %93 = vector.load %arg8[%c0_50, %c2_51] : memref<128x4xf32, #tpu.memory_space<vmem>>, vector<128x1xf32>
    tpu.vector_store %arg8[%c0_50, %c2_51], %92 {strides = array<i32>} : memref<128x4xf32, #tpu.memory_space<vmem>>, vector<128x1xf32>,
    %c0_52 = arith.constant 0 : index
    %c64 = arith.constant 64 : index
    %94 = vector.load %arg9[%c0_52, %c64] : memref<128x128xf32, #tpu.memory_space<vmem>>, vector<128x32xf32>
    %95 = vector.broadcast %82 : vector<128x1xf32> to vector<128x32xf32>
    %96 = arith.mulf %95, %94 : vector<128x32xf32>
    %97 = arith.truncf %87 : vector<128x128xf32> to vector<128x128xbf16>
    %cst_53 = arith.constant dense<0.000000e+00> : vector<128x32xf32>
    %98 = tpu.matmul %97, %73, %cst_53 {dimension_numbers = #tpu.dot_dimension_numbers<[1], [0], [0], [1], [0, 0, 1, 1], [], []>} : vector<128x128xbf16>, vector<128x32xbf16>, vector<128x32xf32> -> vector<128x32xf32>
    %99 = arith.addf %96, %98 : vector<128x32xf32>
    %c0_54 = arith.constant 0 : index
    %c64_55 = arith.constant 64 : index
    %100 = vector.load %arg9[%c0_54, %c64_55] : memref<128x128xf32, #tpu.memory_space<vmem>>, vector<128x32xf32>
    tpu.vector_store %arg9[%c0_54, %c64_55], %99 {strides = array<i32>} : memref<128x128xf32, #tpu.memory_space<vmem>>, vector<128x32xf32>,
    %c0_56 = arith.constant 0 : index
    %c2_57 = arith.constant 2 : index
    %101 = vector.load %arg7[%c0_56, %c2_57] : memref<128x4xf32, #tpu.memory_space<vmem>>, vector<128x1xf32>
    tpu.vector_store %arg7[%c0_56, %c2_57], %78 {strides = array<i32>} : memref<128x4xf32, #tpu.memory_space<vmem>>, vector<128x1xf32>,
    %102 = vector.extract_strided_slice %4 {offsets = [0, 96], sizes = [128, 32], strides = [1, 1]} : vector<128x128xbf16> to vector<128x32xbf16>
    %103 = vector.extract_strided_slice %6 {offsets = [0, 96], sizes = [128, 32], strides = [1, 1]} : vector<128x128xbf16> to vector<128x32xbf16>
    %104 = vector.extract_strided_slice %8 {offsets = [0, 96], sizes = [128, 32], strides = [1, 1]} : vector<128x128xbf16> to vector<128x32xbf16>
    %cst_58 = arith.constant dense<0.000000e+00> : vector<128x128xf32>
    %105 = tpu.matmul %102, %103, %cst_58 {dimension_numbers = #tpu.dot_dimension_numbers<[1], [1], [0], [0], [0, 0, 1, 0], [], []>} : vector<128x32xbf16>, vector<128x32xbf16>, vector<128x128xf32> -> vector<128x128xf32>
    %c0_59 = arith.constant 0 : index
    %c3 = arith.constant 3 : index
    %106 = vector.load %arg7[%c0_59, %c3] : memref<128x4xf32, #tpu.memory_space<vmem>>, vector<128x1xf32>
    %cst_60 = arith.constant dense<0xFF800000> : vector<128xf32>
    %107 = vector.multi_reduction <maximumf>, %105, %cst_60 [1] : vector<128x128xf32> to vector<128xf32>
    %108 = vector.shape_cast %107 : vector<128xf32> to vector<128x1xf32>
    %109 = arith.maximumf %106, %108 : vector<128x1xf32>
    %110 = arith.subf %106, %109 : vector<128x1xf32>
    %cst_61 = arith.constant 0.176776692 : f32
    %111 = vector.broadcast %cst_61 : f32 to vector<128x1xf32>
    %112 = arith.mulf %110, %111 : vector<128x1xf32>
    %113 = math.exp %112 : vector<128x1xf32>
    %114 = vector.broadcast %109 : vector<128x1xf32> to vector<128x128xf32>
    %115 = arith.subf %105, %114 : vector<128x128xf32>
    %cst_62 = arith.constant 0.176776692 : f32
    %116 = vector.broadcast %cst_62 : f32 to vector<128x128xf32>
    %117 = arith.mulf %115, %116 : vector<128x128xf32>
    %118 = math.exp %117 : vector<128x128xf32>
    %c0_63 = arith.constant 0 : index
    %c3_64 = arith.constant 3 : index
    %119 = vector.load %arg8[%c0_63, %c3_64] : memref<128x4xf32, #tpu.memory_space<vmem>>, vector<128x1xf32>
    %120 = arith.mulf %113, %119 : vector<128x1xf32>
    %cst_65 = arith.constant dense<0.000000e+00> : vector<128xf32>
    %121 = vector.multi_reduction <add>, %118, %cst_65 [1] : vector<128x128xf32> to vector<128xf32>
    %122 = vector.shape_cast %121 : vector<128xf32> to vector<128x1xf32>
    %123 = arith.addf %120, %122 : vector<128x1xf32>
    %c0_66 = arith.constant 0 : index
    %c3_67 = arith.constant 3 : index
    %124 = vector.load %arg8[%c0_66, %c3_67] : memref<128x4xf32, #tpu.memory_space<vmem>>, vector<128x1xf32>
    tpu.vector_store %arg8[%c0_66, %c3_67], %123 {strides = array<i32>} : memref<128x4xf32, #tpu.memory_space<vmem>>, vector<128x1xf32>,
    %c0_68 = arith.constant 0 : index
    %c96 = arith.constant 96 : index
    %125 = vector.load %arg9[%c0_68, %c96] : memref<128x128xf32, #tpu.memory_space<vmem>>, vector<128x32xf32>
    %126 = vector.broadcast %113 : vector<128x1xf32> to vector<128x32xf32>
    %127 = arith.mulf %126, %125 : vector<128x32xf32>
    %128 = arith.truncf %118 : vector<128x128xf32> to vector<128x128xbf16>
    %cst_69 = arith.constant dense<0.000000e+00> : vector<128x32xf32>
    %129 = tpu.matmul %128, %104, %cst_69 {dimension_numbers = #tpu.dot_dimension_numbers<[1], [0], [0], [1], [0, 0, 1, 1], [], []>} : vector<128x128xbf16>, vector<128x32xbf16>, vector<128x32xf32> -> vector<128x32xf32>
    %130 = arith.addf %127, %129 : vector<128x32xf32>
    %c0_70 = arith.constant 0 : index
    %c96_71 = arith.constant 96 : index
    %131 = vector.load %arg9[%c0_70, %c96_71] : memref<128x128xf32, #tpu.memory_space<vmem>>, vector<128x32xf32>
    tpu.vector_store %arg9[%c0_70, %c96_71], %130 {strides = array<i32>} : memref<128x128xf32, #tpu.memory_space<vmem>>, vector<128x32xf32>,
    %c0_72 = arith.constant 0 : index
    %c3_73 = arith.constant 3 : index
    %132 = vector.load %arg7[%c0_72, %c3_73] : memref<128x4xf32, #tpu.memory_space<vmem>>, vector<128x1xf32>
    tpu.vector_store %arg7[%c0_72, %c3_73], %109 {strides = array<i32>} : memref<128x4xf32, #tpu.memory_space<vmem>>, vector<128x1xf32>,
    %c0_i32_74 = arith.constant 0 : i32
    %133 = arith.cmpi eq, %arg2, %c0_i32_74 : i32
    %134 = arith.extui %133 : i1 to i32
    %c0_i32_75 = arith.constant 0 : i32
    %135 = arith.cmpi ne, %134, %c0_i32_75 : i32
    scf.if %135 {
      %c0_76 = arith.constant 0 : index
      %c0_77 = arith.constant 0 : index
      %136 = vector.load %arg8[%c0_76, %c0_77] : memref<128x4xf32, #tpu.memory_space<vmem>>, vector<128x4xf32>
      %137 = tpu.reciprocal %136 {approx = true} : vector<128x4xf32> -> vector<128x4xf32>
      %c0_78 = arith.constant 0 : index
      %c0_79 = arith.constant 0 : index
      %138 = vector.load %arg9[%c0_78, %c0_79] : memref<128x128xf32, #tpu.memory_space<vmem>>, vector<128x32xf32>
      %139 = vector.extract_strided_slice %137 {offsets = [0, 0], sizes = [128, 1], strides = [1, 1]} : vector<128x4xf32> to vector<128x1xf32>
      %140 = vector.broadcast %139 : vector<128x1xf32> to vector<128x32xf32>
      %141 = arith.mulf %138, %140 : vector<128x32xf32>
      %c0_80 = arith.constant 0 : index
      %c0_81 = arith.constant 0 : index
      %142 = vector.load %arg9[%c0_80, %c0_81] : memref<128x128xf32, #tpu.memory_space<vmem>>, vector<128x32xf32>
      tpu.vector_store %arg9[%c0_80, %c0_81], %141 {strides = array<i32>} : memref<128x128xf32, #tpu.memory_space<vmem>>, vector<128x32xf32>,
      %c0_82 = arith.constant 0 : index
      %c32_83 = arith.constant 32 : index
      %143 = vector.load %arg9[%c0_82, %c32_83] : memref<128x128xf32, #tpu.memory_space<vmem>>, vector<128x32xf32>
      %144 = vector.extract_strided_slice %137 {offsets = [0, 1], sizes = [128, 1], strides = [1, 1]} : vector<128x4xf32> to vector<128x1xf32>
      %145 = vector.broadcast %144 : vector<128x1xf32> to vector<128x32xf32>
      %146 = arith.mulf %143, %145 : vector<128x32xf32>
      %c0_84 = arith.constant 0 : index
      %c32_85 = arith.constant 32 : index
      %147 = vector.load %arg9[%c0_84, %c32_85] : memref<128x128xf32, #tpu.memory_space<vmem>>, vector<128x32xf32>
      tpu.vector_store %arg9[%c0_84, %c32_85], %146 {strides = array<i32>} : memref<128x128xf32, #tpu.memory_space<vmem>>, vector<128x32xf32>,
      %c0_86 = arith.constant 0 : index
      %c64_87 = arith.constant 64 : index
      %148 = vector.load %arg9[%c0_86, %c64_87] : memref<128x128xf32, #tpu.memory_space<vmem>>, vector<128x32xf32>
      %149 = vector.extract_strided_slice %137 {offsets = [0, 2], sizes = [128, 1], strides = [1, 1]} : vector<128x4xf32> to vector<128x1xf32>
      %150 = vector.broadcast %149 : vector<128x1xf32> to vector<128x32xf32>
      %151 = arith.mulf %148, %150 : vector<128x32xf32>
      %c0_88 = arith.constant 0 : index
      %c64_89 = arith.constant 64 : index
      %152 = vector.load %arg9[%c0_88, %c64_89] : memref<128x128xf32, #tpu.memory_space<vmem>>, vector<128x32xf32>
      tpu.vector_store %arg9[%c0_88, %c64_89], %151 {strides = array<i32>} : memref<128x128xf32, #tpu.memory_space<vmem>>, vector<128x32xf32>,
      %c0_90 = arith.constant 0 : index
      %c96_91 = arith.constant 96 : index
      %153 = vector.load %arg9[%c0_90, %c96_91] : memref<128x128xf32, #tpu.memory_space<vmem>>, vector<128x32xf32>
      %154 = vector.extract_strided_slice %137 {offsets = [0, 3], sizes = [128, 1], strides = [1, 1]} : vector<128x4xf32> to vector<128x1xf32>
      %155 = vector.broadcast %154 : vector<128x1xf32> to vector<128x32xf32>
      %156 = arith.mulf %153, %155 : vector<128x32xf32>
      %c0_92 = arith.constant 0 : index
      %c96_93 = arith.constant 96 : index
      %157 = vector.load %arg9[%c0_92, %c96_93] : memref<128x128xf32, #tpu.memory_space<vmem>>, vector<128x32xf32>
      tpu.vector_store %arg9[%c0_92, %c96_93], %156 {strides = array<i32>} : memref<128x128xf32, #tpu.memory_space<vmem>>, vector<128x32xf32>,
      %c0_94 = arith.constant 0 : index
      %c0_95 = arith.constant 0 : index
      %158 = vector.load %arg9[%c0_94, %c0_95] : memref<128x128xf32, #tpu.memory_space<vmem>>, vector<128x128xf32>
      %159 = arith.truncf %158 : vector<128x128xf32> to vector<128x128xbf16>
      %c0_96 = arith.constant 0 : index
      %c0_97 = arith.constant 0 : index
      %c0_98 = arith.constant 0 : index
      %160 = vector.load %arg6[%c0_96, %c0_97, %c0_98] : memref<1x128x128xbf16, #tpu.memory_space<vmem>>, vector<1x128x128xbf16>
      %161 = vector.shape_cast %160 : vector<1x128x128xbf16> to vector<128x128xbf16>
      %162 = vector.shape_cast %159 : vector<128x128xbf16> to vector<1x128x128xbf16>
      tpu.vector_store %arg6[%c0_96, %c0_97, %c0_98], %162 {strides = array<i32>} : memref<1x128x128xbf16, #tpu.memory_space<vmem>>, vector<1x128x128xbf16>,
    } else {
    }
    return
  }
  func.func @transform_0(%arg0: i32, %arg1: i32, %arg2: i32) -> (i32, i32, i32) {
    %c0_i32 = arith.constant 0 : i32
    %c0_i32_0 = arith.constant 0 : i32
    return %arg0, %arg1, %c0_i32 : i32, i32, i32
  }
  func.func @transform_1(%arg0: i32, %arg1: i32, %arg2: i32) -> (i32, i32, i32) {
    %c0_i32 = arith.constant 0 : i32
    %c0_i32_0 = arith.constant 0 : i32
    return %arg0, %arg2, %c0_i32 : i32, i32, i32
  }
  func.func @transform_2(%arg0: i32, %arg1: i32, %arg2: i32) -> (i32, i32, i32) {
    %c0_i32 = arith.constant 0 : i32
    %c0_i32_0 = arith.constant 0 : i32
    return %arg0, %arg2, %c0_i32 : i32, i32, i32
  }
  func.func @transform_3(%arg0: i32, %arg1: i32, %arg2: i32) -> (i32, i32, i32) {
    %c0_i32 = arith.constant 0 : i32
    %c0_i32_0 = arith.constant 0 : i32
    return %arg0, %arg1, %c0_i32 : i32, i32, i32
  }
}

</mosaic_0001>

<llo_original>
// kernel: tpu_custom_call.1
$region0: #{tpu_custom_call.1}
  #allocation0 [shape = 'u32[]', space=smem, size = 0x4, offset = 0x4, fixed_abs, tag = 'smem constant byte address 0x4 - core index']
  #allocation1 [shape = 'u32[144,128]{1,0:T(1,128)}', space=vmem, size = 0x12000, scoped, tag = 'internal scratch']
  #allocation2 [shape = 'f32[128,4]{1,0:T(8,128)}', space=vmem, size = 0x10000, scoped, tag = 'scratch operand']
  #allocation3 [shape = 'f32[128,4]{1,0:T(8,128)}', space=vmem, size = 0x10000, scoped, tag = 'scratch operand']
  #allocation4 [shape = 'f32[128,128]{1,0:T(8,128)}', space=vmem, size = 0x10000, scoped, tag = 'scratch operand']
  %s0 = inlined_call_operand.hbm [shape: bf16[2,128,128], index: 0, kind: input, shape index: {}]
  %s1 = inlined_call_operand.hbm [shape: bf16[2,128,128], index: 1, kind: input, shape index: {}]
  %s2 = inlined_call_operand.hbm [shape: bf16[2,128,128], index: 2, kind: input, shape index: {}]
  %s3 = inlined_call_operand.hbm [shape: bf16[2,128,128], index: 3, kind: output, shape index: {}]
  %s4 = sld [smem:[#allocation0]]
  $region65: #{tpu_custom_call.1} parent=0
    _
  %s6 = ssub.s32 1, %s4
  %s7 = scalar_select 0, %s6, %s4
  $region1: #{tpu_custom_call.1} parent=0
    #allocation5 [shape = 'u8[65536]{0}', space=vmem, size = 0x10000, scoped, tag = 'input window, operand 0']
    #allocation6 [shape = 's32[2]{0}', space=sflag, size = 0x8, scoped, tag = 'scoped memory for tpu_custom_call.1']
    #allocation7 [shape = 's32[2]{0}', space=sflag, size = 0x8, scoped, tag = 'scoped memory for tpu_custom_call.1']
    #allocation8 [shape = 'u8[65536]{0}', space=vmem, size = 0x10000, scoped, tag = 'input window, operand 1']
    #allocation9 [shape = 's32[2]{0}', space=sflag, size = 0x8, scoped, tag = 'scoped memory for tpu_custom_call.1']
    #allocation10 [shape = 'u8[65536]{0}', space=vmem, size = 0x10000, scoped, tag = 'input window, operand 2']
    #allocation11 [shape = 'u8[65536]{0}', space=vmem, size = 0x10000, scoped, tag = 'output window, operand 0']
    %8 = vsyncpa [#allocation6], 0
    %s9 = scalar_lea.sflag [#allocation6], 1
    %10 = vsyncpa %s9, 0
    %11 = vsyncpa [#allocation9], 0
    %s12 = scalar_lea.sflag [#allocation9], 1
    %13 = vsyncpa %s12, 0
    %14 = vsyncpa [#allocation7], 0
    %s15 = scalar_lea.sflag [#allocation7], 1
    %16 = vsyncpa %s15, 0
    loop: start=0, step=1, limit=4
    $region2: #{tpu_custom_call.1} parent=1 // loop_pre_header
      _
    $region3: #{tpu_custom_call.1} parent=1 // loop_header
      %s18 = sphi 0, %s22
      %p19 = scmp.ge.s32.totalorder %s18, 4
      %s25 = sphi 0, %s44
      %s26 = sphi 0, %s40
      %s27 = sphi 0, %s36
      %s28 = sphi 0, %s25
      %s29 = sphi 0, %s26
      %s30 = sphi 0, %s27
      %s31 = sphi 0, %s28
      %s32 = sphi 0, %s29
      %s33 = sphi 0, %s30
      %s49 = sphi 0, %s51
      %s52 = sphi 0, %s49
      %s53 = sphi 0, %s52
      %s69 = sphi 0, %s53
      %s77 = sphi 0, %s79
      %s80 = sphi 0, %s77
      %s81 = sphi 0, %s80
      %s97 = sphi 0, %s81
      %s105 = sphi 0, %s107
      %s108 = sphi 0, %s105
      %s109 = sphi 0, %s108
      %s125 = sphi 0, %s109
      %s133 = sphi 0, %s135
      %s136 = sphi 0, %s133
      %s137 = sphi 0, %s136
      %s153 = sphi 0, %s137
    $region4: #{tpu_custom_call.1} parent=1 // loop_header_branch
      %21 = sbr.rel (%p19) target = $region8
    $region5: #{tpu_custom_call.1} parent=1 // loop_body
      %s23 = ssub.s32 %s18, 1
      %s24 = ssub.s32 %s18, 2
      %s34 = sadd.s32 1, %s27
      %p35 = scmp.ge.s32.totalorder %s34, 1
      %s36 = scalar_select %p35, 0, %s34
      %s37 = sadd.s32 1, %s26
      %s38 = scalar_select %p35, %s37, %s26
      %p39 = scmp.ge.s32.totalorder %s38, 1
      %s40 = scalar_select %p39, 0, %s38
      %s41 = sadd.s32 1, %s25
      %s42 = scalar_select %p39, %s41, %s25
      %p43 = scmp.ge.s32.totalorder %s42, 2
      %s44 = scalar_select %p43, 0, %s42
      %s45 = ssub.s32 %s25, %s44
      %s46 = ssub.s32 %s26, %s40
      %s47 = sor.u32 %s45, %s46
      %p48 = scmp.eq.s32.totalorder %s47, 0
      %s50 = sadd.s32 %s49, 1
      %s51 = scalar_select %p48, %s49, %s50
      %p54 = pneg %p48
      %p55 = scmp.eq.s32.totalorder %s18, 1
      %p56 = por %p54, %p55
      %p57 = scmp.ne.s32.totalorder %s49, %s52
      %p58 = scmp.eq.s32.totalorder %s18, 0
      %p59 = por %p57, %p58
      %p60 = scmp.ne.s32.totalorder %s49, %s52
      %p61 = scmp.eq.s32.totalorder %s23, 1
      %p62 = por %p60, %p61
      %p63 = scmp.ne.s32.totalorder %s52, %s53
      %p64 = scmp.eq.s32.totalorder %s23, 0
      %p65 = por %p63, %p64
      %p66 = scmp.ne.s32.totalorder %s52, %s53
      %p67 = scmp.eq.s32.totalorder %s24, 1
      %p68 = por %p66, %p67
      %p70 = scmp.ne.s32.totalorder %s53, %s69
      %p71 = scmp.eq.s32.totalorder %s24, 0
      %p72 = por %p70, %p71
      %s73 = ssub.s32 %s25, %s44
      %s74 = ssub.s32 %s27, %s36
      %s75 = sor.u32 %s73, %s74
      %p76 = scmp.eq.s32.totalorder %s75, 0
      %s78 = sadd.s32 %s77, 1
      %s79 = scalar_select %p76, %s77, %s78
      %p82 = pneg %p76
      %p83 = scmp.eq.s32.totalorder %s18, 1
      %p84 = por %p82, %p83
      %p85 = scmp.ne.s32.totalorder %s77, %s80
      %p86 = scmp.eq.s32.totalorder %s18, 0
      %p87 = por %p85, %p86
      %p88 = scmp.ne.s32.totalorder %s77, %s80
      %p89 = scmp.eq.s32.totalorder %s23, 1
      %p90 = por %p88, %p89
      %p91 = scmp.ne.s32.totalorder %s80, %s81
      %p92 = scmp.eq.s32.totalorder %s23, 0
      %p93 = por %p91, %p92
      %p94 = scmp.ne.s32.totalorder %s80, %s81
      %p95 = scmp.eq.s32.totalorder %s24, 1
      %p96 = por %p94, %p95
      %p98 = scmp.ne.s32.totalorder %s81, %s97
      %p99 = scmp.eq.s32.totalorder %s24, 0
      %p100 = por %p98, %p99
      %s101 = ssub.s32 %s25, %s44
      %s102 = ssub.s32 %s27, %s36
      %s103 = sor.u32 %s101, %s102
      %p104 = scmp.eq.s32.totalorder %s103, 0
      %s106 = sadd.s32 %s105, 1
      %s107 = scalar_select %p104, %s105, %s106
      %p110 = pneg %p104
      %p111 = scmp.eq.s32.totalorder %s18, 1
      %p112 = por %p110, %p111
      %p113 = scmp.ne.s32.totalorder %s105, %s108
      %p114 = scmp.eq.s32.totalorder %s18, 0
      %p115 = por %p113, %p114
      %p116 = scmp.ne.s32.totalorder %s105, %s108
      %p117 = scmp.eq.s32.totalorder %s23, 1
      %p118 = por %p116, %p117
      %p119 = scmp.ne.s32.totalorder %s108, %s109
      %p120 = scmp.eq.s32.totalorder %s23, 0
      %p121 = por %p119, %p120
      %p122 = scmp.ne.s32.totalorder %s108, %s109
      %p123 = scmp.eq.s32.totalorder %s24, 1
      %p124 = por %p122, %p123
      %p126 = scmp.ne.s32.totalorder %s109, %s125
      %p127 = scmp.eq.s32.totalorder %s24, 0
      %p128 = por %p126, %p127
      %s129 = ssub.s32 %s25, %s44
      %s130 = ssub.s32 %s26, %s40
      %s131 = sor.u32 %s129, %s130
      %p132 = scmp.eq.s32.totalorder %s131, 0
      %s134 = sadd.s32 %s133, 1
      %s135 = scalar_select %p132, %s133, %s134
      %p138 = pneg %p132
      %p139 = scmp.eq.s32.totalorder %s18, 1
      %p140 = por %p138, %p139
      %p141 = scmp.ne.s32.totalorder %s133, %s136
      %p142 = scmp.eq.s32.totalorder %s18, 0
      %p143 = por %p141, %p142
      %p144 = scmp.ne.s32.totalorder %s133, %s136
      %p145 = scmp.eq.s32.totalorder %s23, 1
      %p146 = por %p144, %p145
      %p147 = scmp.ne.s32.totalorder %s136, %s137
      %p148 = scmp.eq.s32.totalorder %s23, 0
      %p149 = por %p147, %p148
      %p150 = scmp.ne.s32.totalorder %s136, %s137
      %p151 = scmp.eq.s32.totalorder %s24, 1
      %p152 = por %p150, %p151
      %p154 = scmp.ne.s32.totalorder %s137, %s153
      %p155 = scmp.eq.s32.totalorder %s24, 0
      %p156 = por %p154, %p155
      %p157 = scmp.le.s32.totalorder 1, %s18
      %p158 = scmp.lt.s32.totalorder %s18, 3
      %p159 = pnand %p157, %p158
      %p160 = pneg %p159
      // Predicated region
      $region9: #{tpu_custom_call.1} parent=5 // pred_check
        _
      $region10: #{tpu_custom_call.1} parent=5 // pred_check_branch
        %162 = sbr.rel (%p159) target = $region12
      $region11: #{tpu_custom_call.1} parent=5 // pred_region
        %s163 = ssub.s32 %s18, 1
      $region12: #{tpu_custom_call.1} parent=5 // pred_fallthru
        _
      %p164 = scmp.lt.s32.totalorder %s18, 2
      // Predicated region
      $region13: #{tpu_custom_call.1} parent=5 // pred_check
        %p165 = pneg %p164
      $region14: #{tpu_custom_call.1} parent=5 // pred_check_branch
        %167 = sbr.rel (%p165) target = $region16
      $region15: #{tpu_custom_call.1} parent=5 // pred_region
        // Predicated region
        $region17: #{tpu_custom_call.1} parent=15 // pred_check
          %p168 = pneg %p59
        $region18: #{tpu_custom_call.1} parent=15 // pred_check_branch
          %170 = sbr.rel (%p168) target = $region20
        $region19: #{tpu_custom_call.1} parent=15 // pred_region
          %s171 = sand.u32 %s49, 1
          %s172 = scalar_lea.sflag [#allocation6], %s171
          %s173 = sand.u32 %s49, 1
          %s174 = smul.addr %s173, 64
          %s175 = scalar_lea.vmem [#allocation5], %s174
          %s176 = smul.u32 16, %s26
          %s178 = ssub.s32 1024, 1024
          %179 = vsyncadd %s172, %s178
          %s180 = smul.addr %s25, 16
          %s181 = sadd.s32 %s176, %s180
          %s182 = smul.addr %s181, 64
          %s183 = scalar_lea.hbm %s0, %s182
          %s184 = sshll.u32 %s175, 4
          %s185 = int_to_ptr.vmem [resolvable:$true] %s184
          %190 = dma.hbm_to_vmem [thread:$0]  %s183, 1024, %s185, %s172, 64, 64, 4
        $region20: #{tpu_custom_call.1} parent=15 // pred_fallthru
          _
        // Predicated region
        $region21: #{tpu_custom_call.1} parent=15 // pred_check
          %p191 = pneg %p87
        $region22: #{tpu_custom_call.1} parent=15 // pred_check_branch
          %193 = sbr.rel (%p191) target = $region24
        $region23: #{tpu_custom_call.1} parent=15 // pred_region
          %s194 = sand.u32 %s18, 1
          %s195 = scalar_lea.sflag [#allocation9], %s194
          %s196 = sand.u32 %s77, 1
          %s197 = smul.addr %s196, 64
          %s198 = scalar_lea.vmem [#allocation8], %s197
          %s199 = smul.u32 16, %s27
          %s201 = ssub.s32 1024, 1024
          %202 = vsyncadd %s195, %s201
          %s203 = smul.addr %s25, 16
          %s204 = sadd.s32 %s199, %s203
          %s205 = smul.addr %s204, 64
          %s206 = scalar_lea.hbm %s1, %s205
          %s207 = sshll.u32 %s198, 4
          %s208 = int_to_ptr.vmem [resolvable:$true] %s207
          %213 = dma.hbm_to_vmem [thread:$0]  %s206, 1024, %s208, %s195, 64, 64, 4
        $region24: #{tpu_custom_call.1} parent=15 // pred_fallthru
          _
        // Predicated region
        $region25: #{tpu_custom_call.1} parent=15 // pred_check
          %p214 = pneg %p115
        $region26: #{tpu_custom_call.1} parent=15 // pred_check_branch
          %216 = sbr.rel (%p214) target = $region28
        $region27: #{tpu_custom_call.1} parent=15 // pred_region
          %s217 = sand.u32 %s18, 1
          %s218 = scalar_lea.sflag [#allocation9], %s217
          %s219 = sand.u32 %s105, 1
          %s220 = smul.addr %s219, 64
          %s221 = scalar_lea.vmem [#allocation10], %s220
          %s222 = smul.u32 16, %s27
          %s224 = ssub.s32 1024, 1024
          %225 = vsyncadd %s218, %s224
          %s226 = smul.addr %s25, 16
          %s227 = sadd.s32 %s222, %s226
          %s228 = smul.addr %s227, 64
          %s229 = scalar_lea.hbm %s2, %s228
          %s230 = sshll.u32 %s221, 4
          %s231 = int_to_ptr.vmem [resolvable:$true] %s230
          %236 = dma.hbm_to_vmem [thread:$0]  %s229, 1024, %s231, %s218, 64, 64, 4
        $region28: #{tpu_custom_call.1} parent=15 // pred_fallthru
          _
      $region16: #{tpu_custom_call.1} parent=5 // pred_fallthru
        _
      %p237 = scmp.le.s32.totalorder 1, %s18
      %p238 = scmp.lt.s32.totalorder %s18, 3
      %p239 = pnand %p237, %p238
      %p240 = pneg %p239
      // Predicated region
      $region29: #{tpu_custom_call.1} parent=5 // pred_check
        _
      $region30: #{tpu_custom_call.1} parent=5 // pred_check_branch
        %242 = sbr.rel (%p239) target = $region32
      $region31: #{tpu_custom_call.1} parent=5 // pred_region
        %s243 = ssub.s32 %s18, 1
        %s244 = sand.u32 %s52, 1
        %s245 = scalar_lea.sflag [#allocation6], %s244
        %s246 = sand.u32 %s52, 1
        %s247 = smul.addr %s246, 64
        %s248 = scalar_lea.vmem [#allocation5], %s247
        // Predicated region
        $region33: #{tpu_custom_call.1} parent=31 // pred_check
          %p249 = pneg %p65
        $region34: #{tpu_custom_call.1} parent=31 // pred_check_branch
          %251 = sbr.rel (%p249) target = $region36
        $region35: #{tpu_custom_call.1} parent=31 // pred_region
          %252 = dma.done %s245, 1024
        $region36: #{tpu_custom_call.1} parent=31 // pred_fallthru
          _
        %s253 = sand.u32 %s23, 1
        %s254 = scalar_lea.sflag [#allocation9], %s253
        %s255 = sand.u32 %s80, 1
        %s256 = smul.addr %s255, 64
        %s257 = scalar_lea.vmem [#allocation8], %s256
        // Predicated region
        $region37: #{tpu_custom_call.1} parent=31 // pred_check
          %p258 = pneg %p93
        $region38: #{tpu_custom_call.1} parent=31 // pred_check_branch
          %260 = sbr.rel (%p258) target = $region40
        $region39: #{tpu_custom_call.1} parent=31 // pred_region
          %261 = dma.done %s254, 1024
        $region40: #{tpu_custom_call.1} parent=31 // pred_fallthru
          _
        %s262 = sand.u32 %s23, 1
        %s263 = scalar_lea.sflag [#allocation9], %s262
        %s264 = sand.u32 %s108, 1
        %s265 = smul.addr %s264, 64
        %s266 = scalar_lea.vmem [#allocation10], %s265
        // Predicated region
        $region41: #{tpu_custom_call.1} parent=31 // pred_check
          %p267 = pneg %p121
        $region42: #{tpu_custom_call.1} parent=31 // pred_check_branch
          %269 = sbr.rel (%p267) target = $region44
        $region43: #{tpu_custom_call.1} parent=31 // pred_region
          %270 = dma.done %s263, 1024
        $region44: #{tpu_custom_call.1} parent=31 // pred_fallthru
          _
        %s271 = sand.u32 %s52, 1
        %s272 = scalar_lea.sflag [#allocation6], %s271
        %s273 = sand.u32 %s52, 1
        %s274 = smul.addr %s273, 64
        %s275 = scalar_lea.vmem [#allocation5], %s274
        %p276 = pneg %p65
        %p277 = pneg %p62
        %s278 = sand.u32 %s23, 1
        %s279 = scalar_lea.sflag [#allocation9], %s278
        %s280 = sand.u32 %s80, 1
        %s281 = smul.addr %s280, 64
        %s282 = scalar_lea.vmem [#allocation8], %s281
        %p283 = pneg %p93
        %p284 = pneg %p90
        %s285 = sand.u32 %s23, 1
        %s286 = scalar_lea.sflag [#allocation9], %s285
        %s287 = sand.u32 %s108, 1
        %s288 = smul.addr %s287, 64
        %s289 = scalar_lea.vmem [#allocation10], %s288
        %p290 = pneg %p121
        %p291 = pneg %p118
        %p292 = pneg %p149
        %p293 = pneg %p146
        %s294 = sand.u32 %s136, 1
        %s295 = scalar_lea.sflag [#allocation7], %s294
        %s296 = sand.u32 %s136, 1
        %s297 = smul.addr %s296, 64
        %s298 = scalar_lea.vmem [#allocation11], %s297
        %s299 = smul.u32 16, %s29
        %s300 = smul.u32 16, %s30
        %s301 = smul.u32 16, %s30
        %s302 = smul.u32 16, %s29
        %p304 = scmp.eq.s32.totalorder %s30, 0
        // Predicated region
        $region45: #{tpu_custom_call.1} parent=31 // pred_check
          %p305 = pneg %p304
        $region46: #{tpu_custom_call.1} parent=31 // pred_check_branch
          %307 = sbr.rel (%p305) target = $region48
        $region47: #{tpu_custom_call.1} parent=31 // pred_region
          %vm308 = vcmask 31744
          %309 = vst.msk [vmem:[#allocation2] sm:$0xff] %vm308, -inf
          %310 = vst.msk [vmem:[#allocation2 + $0x8] sm:$0xff] %vm308, -inf
          %311 = vst.msk [vmem:[#allocation2 + $0x10] sm:$0xff] %vm308, -inf
          %312 = vst.msk [vmem:[#allocation2 + $0x18] sm:$0xff] %vm308, -inf
          %313 = vst.msk [vmem:[#allocation2 + $0x20] sm:$0xff] %vm308, -inf
          %314 = vst.msk [vmem:[#allocation2 + $0x28] sm:$0xff] %vm308, -inf
          %315 = vst.msk [vmem:[#allocation2 + $0x30] sm:$0xff] %vm308, -inf
          %316 = vst.msk [vmem:[#allocation2 + $0x38] sm:$0xff] %vm308, -inf
          %317 = vst.msk [vmem:[#allocation2 + $0x40] sm:$0xff] %vm308, -inf
          %318 = vst.msk [vmem:[#allocation2 + $0x48] sm:$0xff] %vm308, -inf
          %319 = vst.msk [vmem:[#allocation2 + $0x50] sm:$0xff] %vm308, -inf
          %320 = vst.msk [vmem:[#allocation2 + $0x58] sm:$0xff] %vm308, -inf
          %321 = vst.msk [vmem:[#allocation2 + $0x60] sm:$0xff] %vm308, -inf
          %322 = vst.msk [vmem:[#allocation2 + $0x68] sm:$0xff] %vm308, -inf
          %323 = vst.msk [vmem:[#allocation2 + $0x70] sm:$0xff] %vm308, -inf
          %324 = vst.msk [vmem:[#allocation2 + $0x78] sm:$0xff] %vm308, -inf
          %325 = vst.msk [vmem:[#allocation3] sm:$0xff] %vm308, 0.0
          %326 = vst.msk [vmem:[#allocation3 + $0x8] sm:$0xff] %vm308, 0.0
          %327 = vst.msk [vmem:[#allocation3 + $0x10] sm:$0xff] %vm308, 0.0
          %328 = vst.msk [vmem:[#allocation3 + $0x18] sm:$0xff] %vm308, 0.0
          %329 = vst.msk [vmem:[#allocation3 + $0x20] sm:$0xff] %vm308, 0.0
          %330 = vst.msk [vmem:[#allocation3 + $0x28] sm:$0xff] %vm308, 0.0
          %331 = vst.msk [vmem:[#allocation3 + $0x30] sm:$0xff] %vm308, 0.0
          %332 = vst.msk [vmem:[#allocation3 + $0x38] sm:$0xff] %vm308, 0.0
          %333 = vst.msk [vmem:[#allocation3 + $0x40] sm:$0xff] %vm308, 0.0
          %334 = vst.msk [vmem:[#allocation3 + $0x48] sm:$0xff] %vm308, 0.0
          %335 = vst.msk [vmem:[#allocation3 + $0x50] sm:$0xff] %vm308, 0.0
          %336 = vst.msk [vmem:[#allocation3 + $0x58] sm:$0xff] %vm308, 0.0
          %337 = vst.msk [vmem:[#allocation3 + $0x60] sm:$0xff] %vm308, 0.0
          %338 = vst.msk [vmem:[#allocation3 + $0x68] sm:$0xff] %vm308, 0.0
          %339 = vst.msk [vmem:[#allocation3 + $0x70] sm:$0xff] %vm308, 0.0
          %340 = vst.msk [vmem:[#allocation3 + $0x78] sm:$0xff] %vm308, 0.0
          %341 = vst [vmem:[#allocation4] sm:$0xff] 0.0
          %342 = vst [vmem:[#allocation4 + $0x8] sm:$0xff] 0.0
          %343 = vst [vmem:[#allocation4 + $0x10] sm:$0xff] 0.0
          %344 = vst [vmem:[#allocation4 + $0x18] sm:$0xff] 0.0
          %345 = vst [vmem:[#allocation4 + $0x20] sm:$0xff] 0.0
          %346 = vst [vmem:[#allocation4 + $0x28] sm:$0xff] 0.0
          %347 = vst [vmem:[#allocation4 + $0x30] sm:$0xff] 0.0
          %348 = vst [vmem:[#allocation4 + $0x38] sm:$0xff] 0.0
          %349 = vst [vmem:[#allocation4 + $0x40] sm:$0xff] 0.0
          %350 = vst [vmem:[#allocation4 + $0x48] sm:$0xff] 0.0
          %351 = vst [vmem:[#allocation4 + $0x50] sm:$0xff] 0.0
          %352 = vst [vmem:[#allocation4 + $0x58] sm:$0xff] 0.0
          %353 = vst [vmem:[#allocation4 + $0x60] sm:$0xff] 0.0
          %354 = vst [vmem:[#allocation4 + $0x68] sm:$0xff] 0.0
          %355 = vst [vmem:[#allocation4 + $0x70] sm:$0xff] 0.0
          %356 = vst [vmem:[#allocation4 + $0x78] sm:$0xff] 0.0
        $region48: #{tpu_custom_call.1} parent=31 // pred_fallthru
          _
        %v357 = vld [vmem:[%s248] sm:$0xf]
        %v358 = vld [vmem:[%s248 + $0x4] sm:$0xf]
        %v359 = vld [vmem:[%s248 + $0x8] sm:$0xf]
        %v360 = vld [vmem:[%s248 + $0xc] sm:$0xf]
        %v361 = vld [vmem:[%s248 + $0x10] sm:$0xf]
        %v362 = vld [vmem:[%s248 + $0x14] sm:$0xf]
        %v363 = vld [vmem:[%s248 + $0x18] sm:$0xf]
        %v364 = vld [vmem:[%s248 + $0x1c] sm:$0xf]
        %v365 = vld [vmem:[%s248 + $0x20] sm:$0xf]
        %v366 = vld [vmem:[%s248 + $0x24] sm:$0xf]
        %v367 = vld [vmem:[%s248 + $0x28] sm:$0xf]
        %v368 = vld [vmem:[%s248 + $0x2c] sm:$0xf]
        %v369 = vld [vmem:[%s248 + $0x30] sm:$0xf]
        %v370 = vld [vmem:[%s248 + $0x34] sm:$0xf]
        %v371 = vld [vmem:[%s248 + $0x38] sm:$0xf]
        %v372 = vld [vmem:[%s248 + $0x3c] sm:$0xf]
        %v373 = vld [vmem:[%s257] sm:$0xf]
        %v374 = vld [vmem:[%s257 + $0x4] sm:$0xf]
        %v375 = vld [vmem:[%s257 + $0x8] sm:$0xf]
        %v376 = vld [vmem:[%s257 + $0xc] sm:$0xf]
        %v377 = vld [vmem:[%s257 + $0x10] sm:$0xf]
        %v378 = vld [vmem:[%s257 + $0x14] sm:$0xf]
        %v379 = vld [vmem:[%s257 + $0x18] sm:$0xf]
        %v380 = vld [vmem:[%s257 + $0x1c] sm:$0xf]
        %v381 = vld [vmem:[%s257 + $0x20] sm:$0xf]
        %v382 = vld [vmem:[%s257 + $0x24] sm:$0xf]
        %v383 = vld [vmem:[%s257 + $0x28] sm:$0xf]
        %v384 = vld [vmem:[%s257 + $0x2c] sm:$0xf]
        %v385 = vld [vmem:[%s257 + $0x30] sm:$0xf]
        %v386 = vld [vmem:[%s257 + $0x34] sm:$0xf]
        %v387 = vld [vmem:[%s257 + $0x38] sm:$0xf]
        %v388 = vld [vmem:[%s257 + $0x3c] sm:$0xf]
        %v389 = vld [vmem:[%s266] sm:$0xf]
        %v390 = vld [vmem:[%s266 + $0x4] sm:$0xf]
        %v391 = vld [vmem:[%s266 + $0x8] sm:$0xf]
        %v392 = vld [vmem:[%s266 + $0xc] sm:$0xf]
        %v393 = vld [vmem:[%s266 + $0x10] sm:$0xf]
        %v394 = vld [vmem:[%s266 + $0x14] sm:$0xf]
        %v395 = vld [vmem:[%s266 + $0x18] sm:$0xf]
        %v396 = vld [vmem:[%s266 + $0x1c] sm:$0xf]
        %v397 = vld [vmem:[%s266 + $0x20] sm:$0xf]
        %v398 = vld [vmem:[%s266 + $0x24] sm:$0xf]
        %v399 = vld [vmem:[%s266 + $0x28] sm:$0xf]
        %v400 = vld [vmem:[%s266 + $0x2c] sm:$0xf]
        %v401 = vld [vmem:[%s266 + $0x30] sm:$0xf]
        %v402 = vld [vmem:[%s266 + $0x34] sm:$0xf]
        %v403 = vld [vmem:[%s266 + $0x38] sm:$0xf]
        %v404 = vld [vmem:[%s266 + $0x3c] sm:$0xf]
        %v421 = vunpack.c.l.b16 %v357
        %v422 = vunpack.c.l.b16 %v358
        %v423 = vunpack.c.l.b16 %v359
        %v424 = vunpack.c.l.b16 %v360
        %v425 = vunpack.c.l.b16 %v361
        %v426 = vunpack.c.l.b16 %v362
        %v427 = vunpack.c.l.b16 %v363
        %v428 = vunpack.c.l.b16 %v364
        %v429 = vunpack.c.l.b16 %v365
        %v430 = vunpack.c.l.b16 %v366
        %v431 = vunpack.c.l.b16 %v367
        %v432 = vunpack.c.l.b16 %v368
        %v433 = vunpack.c.l.b16 %v369
        %v434 = vunpack.c.l.b16 %v370
        %v435 = vunpack.c.l.b16 %v371
        %v436 = vunpack.c.l.b16 %v372
        %v437 = vpack.c.b16 %v422, %v421
        %v438 = vpack.c.b16 %v424, %v423
        %v439 = vpack.c.b16 %v426, %v425
        %v440 = vpack.c.b16 %v428, %v427
        %v441 = vpack.c.b16 %v430, %v429
        %v442 = vpack.c.b16 %v432, %v431
        %v443 = vpack.c.b16 %v434, %v433
        %v444 = vpack.c.b16 %v436, %v435
        %v461 = vunpack.c.l.b16 %v373
        %v462 = vunpack.c.l.b16 %v374
        %v463 = vunpack.c.l.b16 %v375
        %v464 = vunpack.c.l.b16 %v376
        %v465 = vunpack.c.l.b16 %v377
        %v466 = vunpack.c.l.b16 %v378
        %v467 = vunpack.c.l.b16 %v379
        %v468 = vunpack.c.l.b16 %v380
        %v469 = vunpack.c.l.b16 %v381
        %v470 = vunpack.c.l.b16 %v382
        %v471 = vunpack.c.l.b16 %v383
        %v472 = vunpack.c.l.b16 %v384
        %v473 = vunpack.c.l.b16 %v385
        %v474 = vunpack.c.l.b16 %v386
        %v475 = vunpack.c.l.b16 %v387
        %v476 = vunpack.c.l.b16 %v388
        %v477 = vpack.c.b16 %v462, %v461
        %v478 = vpack.c.b16 %v464, %v463
        %v479 = vpack.c.b16 %v466, %v465
        %v480 = vpack.c.b16 %v468, %v467
        %v481 = vpack.c.b16 %v470, %v469
        %v482 = vpack.c.b16 %v472, %v471
        %v483 = vpack.c.b16 %v474, %v473
        %v484 = vpack.c.b16 %v476, %v475
        %vm485 = vcmask 261120
        %v487 = vsel %vm485, %v437, 0
        %v490 = vsel %vm485, %v438, 0
        %v493 = vsel %vm485, %v439, 0
        %v496 = vsel %vm485, %v440, 0
        %v499 = vsel %vm485, %v441, 0
        %v502 = vsel %vm485, %v442, 0
        %v505 = vsel %vm485, %v443, 0
        %v508 = vsel %vm485, %v444, 0
        %v511 = vsel %vm485, %v477, 0
        %v514 = vsel %vm485, %v478, 0
        %v517 = vsel %vm485, %v479, 0
        %v520 = vsel %vm485, %v480, 0
        %v523 = vsel %vm485, %v481, 0
        %v526 = vsel %vm485, %v482, 0
        %v529 = vsel %vm485, %v483, 0
        %v532 = vsel %vm485, %v484, 0
        %534 = vmatprep.subr.bf16.mxu0 0
        %535 = vmatpush1.bf16.xpose.msra.mxu0 %v532
        %536 = vmatprep.subr.bf16.mxu0 0
        %537 = vmatpush1.bf16.xpose.msra.mxu0 %v529
        %538 = vmatprep.subr.bf16.mxu0 0
        %539 = vmatpush1.bf16.xpose.msra.mxu0 %v526
        %540 = vmatprep.subr.bf16.mxu0 0
        %541 = vmatpush1.bf16.xpose.msra.mxu0 %v523
        %542 = vmatprep.subr.bf16.mxu0 0
        %543 = vmatpush1.bf16.xpose.msra.mxu0 %v520
        %544 = vmatprep.subr.bf16.mxu0 0
        %545 = vmatpush1.bf16.xpose.msra.mxu0 %v517
        %546 = vmatprep.subr.bf16.mxu0 0
        %547 = vmatpush1.bf16.xpose.msra.mxu0 %v514
        %548 = vmatprep.subr.bf16.mxu0 0
        %549 = vmatpush1.bf16.xpose.msra.mxu0 %v511
        %550 = vmatprep.subr.bf16.mxu0 0
        %551 = vmatpush2.bf16.xpose.msra.mxu0 0
        %552 = vmatprep.subr.bf16.mxu0 0
        %553 = vmatpush2.bf16.xpose.msra.mxu0 0
        %554 = vmatprep.subr.bf16.mxu0 0
        %555 = vmatpush2.bf16.xpose.msra.mxu0 0
        %556 = vmatprep.subr.bf16.mxu0 0
        %557 = vmatpush2.bf16.xpose.msra.mxu0 0
        %558 = vmatprep.subr.bf16.mxu0 0
        %559 = vmatpush2.bf16.xpose.msra.mxu0 0
        %560 = vmatprep.subr.bf16.mxu0 0
        %561 = vmatpush2.bf16.xpose.msra.mxu0 0
        %562 = vmatprep.subr.bf16.mxu0 0
        %563 = vmatpush2.bf16.xpose.msra.mxu0 0
        %564 = vmatprep.subr.bf16.mxu0 0
        %565 = vmatpush2.bf16.xpose.msra.mxu0 0
        %566 = vmatprep.mubr.bf16.mxu0 0
        %567 = vmatmul.mubr.bf16.gmra.mxu0 %v487
        %v568 = vpop.f32.mrf.mxu0
        %v569 = vadd.f32 0.0, %v568
        %v570 = vpop.f32.mrf.mxu0
        %v571 = vpop.f32.mrf.mxu0
        %v572 = vadd.f32 0.0, %v571
        %v573 = vpop.f32.mrf.mxu0
        %574 = vmatprep.mubr.bf16.mxu0 0
        %575 = vmatmul.mubr.bf16.gmra.mxu0 %v490
        %v576 = vpop.f32.mrf.mxu0
        %v577 = vadd.f32 0.0, %v576
        %v578 = vpop.f32.mrf.mxu0
        %v579 = vpop.f32.mrf.mxu0
        %v580 = vadd.f32 0.0, %v579
        %v581 = vpop.f32.mrf.mxu0
        %582 = vmatprep.mubr.bf16.mxu0 0
        %583 = vmatmul.mubr.bf16.gmra.mxu0 %v493
        %v584 = vpop.f32.mrf.mxu0
        %v585 = vadd.f32 0.0, %v584
        %v586 = vpop.f32.mrf.mxu0
        %v587 = vpop.f32.mrf.mxu0
        %v588 = vadd.f32 0.0, %v587
        %v589 = vpop.f32.mrf.mxu0
        %590 = vmatprep.mubr.bf16.mxu0 0
        %591 = vmatmul.mubr.bf16.gmra.mxu0 %v496
        %v592 = vpop.f32.mrf.mxu0
        %v593 = vadd.f32 0.0, %v592
        %v594 = vpop.f32.mrf.mxu0
        %v595 = vpop.f32.mrf.mxu0
        %v596 = vadd.f32 0.0, %v595
        %v597 = vpop.f32.mrf.mxu0
        %598 = vmatprep.mubr.bf16.mxu0 0
        %599 = vmatmul.mubr.bf16.gmra.mxu0 %v499
        %v600 = vpop.f32.mrf.mxu0
        %v601 = vadd.f32 0.0, %v600
        %v602 = vpop.f32.mrf.mxu0
        %v603 = vpop.f32.mrf.mxu0
        %v604 = vadd.f32 0.0, %v603
        %v605 = vpop.f32.mrf.mxu0
        %606 = vmatprep.mubr.bf16.mxu0 0
        %607 = vmatmul.mubr.bf16.gmra.mxu0 %v502
        %v608 = vpop.f32.mrf.mxu0
        %v609 = vadd.f32 0.0, %v608
        %v610 = vpop.f32.mrf.mxu0
        %v611 = vpop.f32.mrf.mxu0
        %v612 = vadd.f32 0.0, %v611
        %v613 = vpop.f32.mrf.mxu0
        %614 = vmatprep.mubr.bf16.mxu0 0
        %615 = vmatmul.mubr.bf16.gmra.mxu0 %v505
        %v616 = vpop.f32.mrf.mxu0
        %v617 = vadd.f32 0.0, %v616
        %v618 = vpop.f32.mrf.mxu0
        %v619 = vpop.f32.mrf.mxu0
        %v620 = vadd.f32 0.0, %v619
        %v621 = vpop.f32.mrf.mxu0
        %622 = vmatprep.mubr.bf16.mxu0 0
        %623 = vmatmul.mubr.bf16.gmra.mxu0 %v508
        %v624 = vpop.f32.mrf.mxu0
        %v625 = vadd.f32 0.0, %v624
        %v626 = vpop.f32.mrf.mxu0
        %v627 = vpop.f32.mrf.mxu0
        %v628 = vadd.f32 0.0, %v627
        %v629 = vpop.f32.mrf.mxu0
        %630 = vdwg.mxu0
        %v631 = vld [vmem:[#allocation2] sm:$0xff]
        %v632 = vld [vmem:[#allocation2 + $0x8] sm:$0xff]
        %v633 = vld [vmem:[#allocation2 + $0x10] sm:$0xff]
        %v634 = vld [vmem:[#allocation2 + $0x18] sm:$0xff]
        %v635 = vld [vmem:[#allocation2 + $0x20] sm:$0xff]
        %v636 = vld [vmem:[#allocation2 + $0x28] sm:$0xff]
        %v637 = vld [vmem:[#allocation2 + $0x30] sm:$0xff]
        %v638 = vld [vmem:[#allocation2 + $0x38] sm:$0xff]
        %v639 = vld [vmem:[#allocation2 + $0x40] sm:$0xff]
        %v640 = vld [vmem:[#allocation2 + $0x48] sm:$0xff]
        %v641 = vld [vmem:[#allocation2 + $0x50] sm:$0xff]
        %v642 = vld [vmem:[#allocation2 + $0x58] sm:$0xff]
        %v643 = vld [vmem:[#allocation2 + $0x60] sm:$0xff]
        %v644 = vld [vmem:[#allocation2 + $0x68] sm:$0xff]
        %v645 = vld [vmem:[#allocation2 + $0x70] sm:$0xff]
        %v646 = vld [vmem:[#allocation2 + $0x78] sm:$0xff]
        %647 = vmax.xlane.f32.xlu0 %v569
        %v648 = vpop.xlane.xlu0 %647
        %649 = vmax.xlane.f32.xlu0 %v572
        %v650 = vpop.xlane.xlu0 %649
        %651 = vmax.xlane.f32.xlu0 %v577
        %v652 = vpop.xlane.xlu0 %651
        %653 = vmax.xlane.f32.xlu0 %v580
        %v654 = vpop.xlane.xlu0 %653
        %655 = vmax.xlane.f32.xlu0 %v585
        %v656 = vpop.xlane.xlu0 %655
        %657 = vmax.xlane.f32.xlu0 %v588
        %v658 = vpop.xlane.xlu0 %657
        %659 = vmax.xlane.f32.xlu0 %v593
        %v660 = vpop.xlane.xlu0 %659
        %661 = vmax.xlane.f32.xlu0 %v596
        %v662 = vpop.xlane.xlu0 %661
        %663 = vmax.xlane.f32.xlu0 %v601
        %v664 = vpop.xlane.xlu0 %663
        %665 = vmax.xlane.f32.xlu0 %v604
        %v666 = vpop.xlane.xlu0 %665
        %667 = vmax.xlane.f32.xlu0 %v609
        %v668 = vpop.xlane.xlu0 %667
        %669 = vmax.xlane.f32.xlu0 %v612
        %v670 = vpop.xlane.xlu0 %669
        %671 = vmax.xlane.f32.xlu0 %v617
        %v672 = vpop.xlane.xlu0 %671
        %673 = vmax.xlane.f32.xlu0 %v620
        %v674 = vpop.xlane.xlu0 %673
        %675 = vmax.xlane.f32.xlu0 %v625
        %v676 = vpop.xlane.xlu0 %675
        %677 = vmax.xlane.f32.xlu0 %v628
        %v678 = vpop.xlane.xlu0 %677
        %v679 = vmax.f32 %v631, %v648
        %v680 = vmax.f32 %v632, %v650
        %v681 = vmax.f32 %v633, %v652
        %v682 = vmax.f32 %v634, %v654
        %v683 = vmax.f32 %v635, %v656
        %v684 = vmax.f32 %v636, %v658
        %v685 = vmax.f32 %v637, %v660
        %v686 = vmax.f32 %v638, %v662
        %v687 = vmax.f32 %v639, %v664
        %v688 = vmax.f32 %v640, %v666
        %v689 = vmax.f32 %v641, %v668
        %v690 = vmax.f32 %v642, %v670
        %v691 = vmax.f32 %v643, %v672
        %v692 = vmax.f32 %v644, %v674
        %v693 = vmax.f32 %v645, %v676
        %v694 = vmax.f32 %v646, %v678
        %v695 = vsub.f32 %v631, %v679
        %v696 = vsub.f32 %v632, %v680
        %v697 = vsub.f32 %v633, %v681
        %v698 = vsub.f32 %v634, %v682
        %v699 = vsub.f32 %v635, %v683
        %v700 = vsub.f32 %v636, %v684
        %v701 = vsub.f32 %v637, %v685
        %v702 = vsub.f32 %v638, %v686
        %v703 = vsub.f32 %v639, %v687
        %v704 = vsub.f32 %v640, %v688
        %v705 = vsub.f32 %v641, %v689
        %v706 = vsub.f32 %v642, %v690
        %v707 = vsub.f32 %v643, %v691
        %v708 = vsub.f32 %v644, %v692
        %v709 = vsub.f32 %v645, %v693
        %v710 = vsub.f32 %v646, %v694
        %v711 = vmul.f32 %v695, 0.17677669
        %v712 = vmul.f32 %v696, 0.17677669
        %v713 = vmul.f32 %v697, 0.17677669
        %v714 = vmul.f32 %v698, 0.17677669
        %v715 = vmul.f32 %v699, 0.17677669
        %v716 = vmul.f32 %v700, 0.17677669
        %v717 = vmul.f32 %v701, 0.17677669
        %v718 = vmul.f32 %v702, 0.17677669
        %v719 = vmul.f32 %v703, 0.17677669
        %v720 = vmul.f32 %v704, 0.17677669
        %v721 = vmul.f32 %v705, 0.17677669
        %v722 = vmul.f32 %v706, 0.17677669
        %v723 = vmul.f32 %v707, 0.17677669
        %v724 = vmul.f32 %v708, 0.17677669
        %v725 = vmul.f32 %v709, 0.17677669
        %v726 = vmul.f32 %v710, 0.17677669
        %v727 = vmul.f32 %v711, 1.442695
        %v728 = vpow.pop %v727
        %v729 = vmul.f32 %v712, 1.442695
        %v730 = vpow.pop %v729
        %v731 = vmul.f32 %v713, 1.442695
        %v732 = vpow.pop %v731
        %v733 = vmul.f32 %v714, 1.442695
        %v734 = vpow.pop %v733
        %v735 = vmul.f32 %v715, 1.442695
        %v736 = vpow.pop %v735
        %v737 = vmul.f32 %v716, 1.442695
        %v738 = vpow.pop %v737
        %v739 = vmul.f32 %v717, 1.442695
        %v740 = vpow.pop %v739
        %v741 = vmul.f32 %v718, 1.442695
        %v742 = vpow.pop %v741
        %v743 = vmul.f32 %v719, 1.442695
        %v744 = vpow.pop %v743
        %v745 = vmul.f32 %v720, 1.442695
        %v746 = vpow.pop %v745
        %v747 = vmul.f32 %v721, 1.442695
        %v748 = vpow.pop %v747
        %v749 = vmul.f32 %v722, 1.442695
        %v750 = vpow.pop %v749
        %v751 = vmul.f32 %v723, 1.442695
        %v752 = vpow.pop %v751
        %v753 = vmul.f32 %v724, 1.442695
        %v754 = vpow.pop %v753
        %v755 = vmul.f32 %v725, 1.442695
        %v756 = vpow.pop %v755
        %v757 = vmul.f32 %v726, 1.442695
        %v758 = vpow.pop %v757
        %760 = vset.pattern.permute.xlu0 0
        %761 = vperm.xlu0 %760, %v679
        %v762 = vpop.permute.xlu0 %761
        %765 = vset.pattern.permute.xlu0 0
        %766 = vperm.xlu0 %765, %v680
        %v767 = vpop.permute.xlu0 %766
        %770 = vset.pattern.permute.xlu0 0
        %771 = vperm.xlu0 %770, %v681
        %v772 = vpop.permute.xlu0 %771
        %775 = vset.pattern.permute.xlu0 0
        %776 = vperm.xlu0 %775, %v682
        %v777 = vpop.permute.xlu0 %776
        %780 = vset.pattern.permute.xlu0 0
        %781 = vperm.xlu0 %780, %v683
        %v782 = vpop.permute.xlu0 %781
        %785 = vset.pattern.permute.xlu0 0
        %786 = vperm.xlu0 %785, %v684
        %v787 = vpop.permute.xlu0 %786
        %790 = vset.pattern.permute.xlu0 0
        %791 = vperm.xlu0 %790, %v685
        %v792 = vpop.permute.xlu0 %791
        %795 = vset.pattern.permute.xlu0 0
        %796 = vperm.xlu0 %795, %v686
        %v797 = vpop.permute.xlu0 %796
        %800 = vset.pattern.permute.xlu0 0
        %801 = vperm.xlu0 %800, %v687
        %v802 = vpop.permute.xlu0 %801
        %805 = vset.pattern.permute.xlu0 0
        %806 = vperm.xlu0 %805, %v688
        %v807 = vpop.permute.xlu0 %806
        %810 = vset.pattern.permute.xlu0 0
        %811 = vperm.xlu0 %810, %v689
        %v812 = vpop.permute.xlu0 %811
        %815 = vset.pattern.permute.xlu0 0
        %816 = vperm.xlu0 %815, %v690
        %v817 = vpop.permute.xlu0 %816
        %820 = vset.pattern.permute.xlu0 0
        %821 = vperm.xlu0 %820, %v691
        %v822 = vpop.permute.xlu0 %821
        %825 = vset.pattern.permute.xlu0 0
        %826 = vperm.xlu0 %825, %v692
        %v827 = vpop.permute.xlu0 %826
        %830 = vset.pattern.permute.xlu0 0
        %831 = vperm.xlu0 %830, %v693
        %v832 = vpop.permute.xlu0 %831
        %835 = vset.pattern.permute.xlu0 0
        %836 = vperm.xlu0 %835, %v694
        %v837 = vpop.permute.xlu0 %836
        %v839 = vsub.f32 %v569, %v762
        %v840 = vsub.f32 %v572, %v767
        %v841 = vsub.f32 %v577, %v772
        %v842 = vsub.f32 %v580, %v777
        %v843 = vsub.f32 %v585, %v782
        %v844 = vsub.f32 %v588, %v787
        %v845 = vsub.f32 %v593, %v792
        %v846 = vsub.f32 %v596, %v797
        %v847 = vsub.f32 %v601, %v802
        %v848 = vsub.f32 %v604, %v807
        %v849 = vsub.f32 %v609, %v812
        %v850 = vsub.f32 %v612, %v817
        %v851 = vsub.f32 %v617, %v822
        %v852 = vsub.f32 %v620, %v827
        %v853 = vsub.f32 %v625, %v832
        %v854 = vsub.f32 %v628, %v837
        %v855 = vmul.f32 %v839, 0.17677669
        %v856 = vmul.f32 %v840, 0.17677669
        %v857 = vmul.f32 %v841, 0.17677669
        %v858 = vmul.f32 %v842, 0.17677669
        %v859 = vmul.f32 %v843, 0.17677669
        %v860 = vmul.f32 %v844, 0.17677669
        %v861 = vmul.f32 %v845, 0.17677669
        %v862 = vmul.f32 %v846, 0.17677669
        %v863 = vmul.f32 %v847, 0.17677669
        %v864 = vmul.f32 %v848, 0.17677669
        %v865 = vmul.f32 %v849, 0.17677669
        %v866 = vmul.f32 %v850, 0.17677669
        %v867 = vmul.f32 %v851, 0.17677669
        %v868 = vmul.f32 %v852, 0.17677669
        %v869 = vmul.f32 %v853, 0.17677669
        %v870 = vmul.f32 %v854, 0.17677669
        %v871 = vmul.f32 %v855, 1.442695
        %v872 = vpow.pop %v871
        %v873 = vmul.f32 %v856, 1.442695
        %v874 = vpow.pop %v873
        %v875 = vmul.f32 %v857, 1.442695
        %v876 = vpow.pop %v875
        %v877 = vmul.f32 %v858, 1.442695
        %v878 = vpow.pop %v877
        %v879 = vmul.f32 %v859, 1.442695
        %v880 = vpow.pop %v879
        %v881 = vmul.f32 %v860, 1.442695
        %v882 = vpow.pop %v881
        %v883 = vmul.f32 %v861, 1.442695
        %v884 = vpow.pop %v883
        %v885 = vmul.f32 %v862, 1.442695
        %v886 = vpow.pop %v885
        %v887 = vmul.f32 %v863, 1.442695
        %v888 = vpow.pop %v887
        %v889 = vmul.f32 %v864, 1.442695
        %v890 = vpow.pop %v889
        %v891 = vmul.f32 %v865, 1.442695
        %v892 = vpow.pop %v891
        %v893 = vmul.f32 %v866, 1.442695
        %v894 = vpow.pop %v893
        %v895 = vmul.f32 %v867, 1.442695
        %v896 = vpow.pop %v895
        %v897 = vmul.f32 %v868, 1.442695
        %v898 = vpow.pop %v897
        %v899 = vmul.f32 %v869, 1.442695
        %v900 = vpow.pop %v899
        %v901 = vmul.f32 %v870, 1.442695
        %v902 = vpow.pop %v901
        %v903 = vld [vmem:[#allocation3] sm:$0xff]
        %v904 = vld [vmem:[#allocation3 + $0x8] sm:$0xff]
        %v905 = vld [vmem:[#allocation3 + $0x10] sm:$0xff]
        %v906 = vld [vmem:[#allocation3 + $0x18] sm:$0xff]
        %v907 = vld [vmem:[#allocation3 + $0x20] sm:$0xff]
        %v908 = vld [vmem:[#allocation3 + $0x28] sm:$0xff]
        %v909 = vld [vmem:[#allocation3 + $0x30] sm:$0xff]
        %v910 = vld [vmem:[#allocation3 + $0x38] sm:$0xff]
        %v911 = vld [vmem:[#allocation3 + $0x40] sm:$0xff]
        %v912 = vld [vmem:[#allocation3 + $0x48] sm:$0xff]
        %v913 = vld [vmem:[#allocation3 + $0x50] sm:$0xff]
        %v914 = vld [vmem:[#allocation3 + $0x58] sm:$0xff]
        %v915 = vld [vmem:[#allocation3 + $0x60] sm:$0xff]
        %v916 = vld [vmem:[#allocation3 + $0x68] sm:$0xff]
        %v917 = vld [vmem:[#allocation3 + $0x70] sm:$0xff]
        %v918 = vld [vmem:[#allocation3 + $0x78] sm:$0xff]
        %v919 = vmul.f32 %v728, %v903
        %v920 = vmul.f32 %v730, %v904
        %v921 = vmul.f32 %v732, %v905
        %v922 = vmul.f32 %v734, %v906
        %v923 = vmul.f32 %v736, %v907
        %v924 = vmul.f32 %v738, %v908
        %v925 = vmul.f32 %v740, %v909
        %v926 = vmul.f32 %v742, %v910
        %v927 = vmul.f32 %v744, %v911
        %v928 = vmul.f32 %v746, %v912
        %v929 = vmul.f32 %v748, %v913
        %v930 = vmul.f32 %v750, %v914
        %v931 = vmul.f32 %v752, %v915
        %v932 = vmul.f32 %v754, %v916
        %v933 = vmul.f32 %v756, %v917
        %v934 = vmul.f32 %v758, %v918
        %935 = vadd.xlane.f32.xlu0 %v872
        %v936 = vpop.xlane.xlu0 %935
        %937 = vadd.xlane.f32.xlu0 %v874
        %v938 = vpop.xlane.xlu0 %937
        %939 = vadd.xlane.f32.xlu0 %v876
        %v940 = vpop.xlane.xlu0 %939
        %941 = vadd.xlane.f32.xlu0 %v878
        %v942 = vpop.xlane.xlu0 %941
        %943 = vadd.xlane.f32.xlu0 %v880
        %v944 = vpop.xlane.xlu0 %943
        %945 = vadd.xlane.f32.xlu0 %v882
        %v946 = vpop.xlane.xlu0 %945
        %947 = vadd.xlane.f32.xlu0 %v884
        %v948 = vpop.xlane.xlu0 %947
        %949 = vadd.xlane.f32.xlu0 %v886
        %v950 = vpop.xlane.xlu0 %949
        %951 = vadd.xlane.f32.xlu0 %v888
        %v952 = vpop.xlane.xlu0 %951
        %953 = vadd.xlane.f32.xlu0 %v890
        %v954 = vpop.xlane.xlu0 %953
        %955 = vadd.xlane.f32.xlu0 %v892
        %v956 = vpop.xlane.xlu0 %955
        %957 = vadd.xlane.f32.xlu0 %v894
        %v958 = vpop.xlane.xlu0 %957
        %959 = vadd.xlane.f32.xlu0 %v896
        %v960 = vpop.xlane.xlu0 %959
        %961 = vadd.xlane.f32.xlu0 %v898
        %v962 = vpop.xlane.xlu0 %961
        %963 = vadd.xlane.f32.xlu0 %v900
        %v964 = vpop.xlane.xlu0 %963
        %965 = vadd.xlane.f32.xlu0 %v902
        %v966 = vpop.xlane.xlu0 %965
        %v967 = vadd.f32 %v919, %v936
        %v968 = vadd.f32 %v920, %v938
        %v969 = vadd.f32 %v921, %v940
        %v970 = vadd.f32 %v922, %v942
        %v971 = vadd.f32 %v923, %v944
        %v972 = vadd.f32 %v924, %v946
        %v973 = vadd.f32 %v925, %v948
        %v974 = vadd.f32 %v926, %v950
        %v975 = vadd.f32 %v927, %v952
        %v976 = vadd.f32 %v928, %v954
        %v977 = vadd.f32 %v929, %v956
        %v978 = vadd.f32 %v930, %v958
        %v979 = vadd.f32 %v931, %v960
        %v980 = vadd.f32 %v932, %v962
        %v981 = vadd.f32 %v933, %v964
        %v982 = vadd.f32 %v934, %v966
        %vm983 = vcmask 7168
        %984 = vst.msk [vmem:[#allocation3] sm:$0xff] %vm983, %v967
        %985 = vst.msk [vmem:[#allocation3 + $0x8] sm:$0xff] %vm983, %v968
        %986 = vst.msk [vmem:[#allocation3 + $0x10] sm:$0xff] %vm983, %v969
        %987 = vst.msk [vmem:[#allocation3 + $0x18] sm:$0xff] %vm983, %v970
        %988 = vst.msk [vmem:[#allocation3 + $0x20] sm:$0xff] %vm983, %v971
        %989 = vst.msk [vmem:[#allocation3 + $0x28] sm:$0xff] %vm983, %v972
        %990 = vst.msk [vmem:[#allocation3 + $0x30] sm:$0xff] %vm983, %v973
        %991 = vst.msk [vmem:[#allocation3 + $0x38] sm:$0xff] %vm983, %v974
        %992 = vst.msk [vmem:[#allocation3 + $0x40] sm:$0xff] %vm983, %v975
        %993 = vst.msk [vmem:[#allocation3 + $0x48] sm:$0xff] %vm983, %v976
        %994 = vst.msk [vmem:[#allocation3 + $0x50] sm:$0xff] %vm983, %v977
        %995 = vst.msk [vmem:[#allocation3 + $0x58] sm:$0xff] %vm983, %v978
        %996 = vst.msk [vmem:[#allocation3 + $0x60] sm:$0xff] %vm983, %v979
        %997 = vst.msk [vmem:[#allocation3 + $0x68] sm:$0xff] %vm983, %v980
        %998 = vst.msk [vmem:[#allocation3 + $0x70] sm:$0xff] %vm983, %v981
        %999 = vst.msk [vmem:[#allocation3 + $0x78] sm:$0xff] %vm983, %v982
        %v1000 = vld [vmem:[#allocation4] sm:$0xff]
        %v1001 = vld [vmem:[#allocation4 + $0x8] sm:$0xff]
        %v1002 = vld [vmem:[#allocation4 + $0x10] sm:$0xff]
        %v1003 = vld [vmem:[#allocation4 + $0x18] sm:$0xff]
        %v1004 = vld [vmem:[#allocation4 + $0x20] sm:$0xff]
        %v1005 = vld [vmem:[#allocation4 + $0x28] sm:$0xff]
        %v1006 = vld [vmem:[#allocation4 + $0x30] sm:$0xff]
        %v1007 = vld [vmem:[#allocation4 + $0x38] sm:$0xff]
        %v1008 = vld [vmem:[#allocation4 + $0x40] sm:$0xff]
        %v1009 = vld [vmem:[#allocation4 + $0x48] sm:$0xff]
        %v1010 = vld [vmem:[#allocation4 + $0x50] sm:$0xff]
        %v1011 = vld [vmem:[#allocation4 + $0x58] sm:$0xff]
        %v1012 = vld [vmem:[#allocation4 + $0x60] sm:$0xff]
        %v1013 = vld [vmem:[#allocation4 + $0x68] sm:$0xff]
        %v1014 = vld [vmem:[#allocation4 + $0x70] sm:$0xff]
        %v1015 = vld [vmem:[#allocation4 + $0x78] sm:$0xff]
        %1017 = vset.pattern.permute.xlu0 0
        %1018 = vperm.xlu0 %1017, %v728
        %v1019 = vpop.permute.xlu0 %1018
        %1022 = vset.pattern.permute.xlu0 0
        %1023 = vperm.xlu0 %1022, %v730
        %v1024 = vpop.permute.xlu0 %1023
        %1027 = vset.pattern.permute.xlu0 0
        %1028 = vperm.xlu0 %1027, %v732
        %v1029 = vpop.permute.xlu0 %1028
        %1032 = vset.pattern.permute.xlu0 0
        %1033 = vperm.xlu0 %1032, %v734
        %v1034 = vpop.permute.xlu0 %1033
        %1037 = vset.pattern.permute.xlu0 0
        %1038 = vperm.xlu0 %1037, %v736
        %v1039 = vpop.permute.xlu0 %1038
        %1042 = vset.pattern.permute.xlu0 0
        %1043 = vperm.xlu0 %1042, %v738
        %v1044 = vpop.permute.xlu0 %1043
        %1047 = vset.pattern.permute.xlu0 0
        %1048 = vperm.xlu0 %1047, %v740
        %v1049 = vpop.permute.xlu0 %1048
        %1052 = vset.pattern.permute.xlu0 0
        %1053 = vperm.xlu0 %1052, %v742
        %v1054 = vpop.permute.xlu0 %1053
        %1057 = vset.pattern.permute.xlu0 0
        %1058 = vperm.xlu0 %1057, %v744
        %v1059 = vpop.permute.xlu0 %1058
        %1062 = vset.pattern.permute.xlu0 0
        %1063 = vperm.xlu0 %1062, %v746
        %v1064 = vpop.permute.xlu0 %1063
        %1067 = vset.pattern.permute.xlu0 0
        %1068 = vperm.xlu0 %1067, %v748
        %v1069 = vpop.permute.xlu0 %1068
        %1072 = vset.pattern.permute.xlu0 0
        %1073 = vperm.xlu0 %1072, %v750
        %v1074 = vpop.permute.xlu0 %1073
        %1077 = vset.pattern.permute.xlu0 0
        %1078 = vperm.xlu0 %1077, %v752
        %v1079 = vpop.permute.xlu0 %1078
        %1082 = vset.pattern.permute.xlu0 0
        %1083 = vperm.xlu0 %1082, %v754
        %v1084 = vpop.permute.xlu0 %1083
        %1087 = vset.pattern.permute.xlu0 0
        %1088 = vperm.xlu0 %1087, %v756
        %v1089 = vpop.permute.xlu0 %1088
        %1092 = vset.pattern.permute.xlu0 0
        %1093 = vperm.xlu0 %1092, %v758
        %v1094 = vpop.permute.xlu0 %1093
        %v1096 = vmul.f32 %v1019, %v1000
        %v1097 = vmul.f32 %v1024, %v1001
        %v1098 = vmul.f32 %v1029, %v1002
        %v1099 = vmul.f32 %v1034, %v1003
        %v1100 = vmul.f32 %v1039, %v1004
        %v1101 = vmul.f32 %v1044, %v1005
        %v1102 = vmul.f32 %v1049, %v1006
        %v1103 = vmul.f32 %v1054, %v1007
        %v1104 = vmul.f32 %v1059, %v1008
        %v1105 = vmul.f32 %v1064, %v1009
        %v1106 = vmul.f32 %v1069, %v1010
        %v1107 = vmul.f32 %v1074, %v1011
        %v1108 = vmul.f32 %v1079, %v1012
        %v1109 = vmul.f32 %v1084, %v1013
        %v1110 = vmul.f32 %v1089, %v1014
        %v1111 = vmul.f32 %v1094, %v1015
        %v1112 = vpack.c.bf16 %v874, %v872
        %v1113 = vpack.c.bf16 %v878, %v876
        %v1114 = vpack.c.bf16 %v882, %v880
        %v1115 = vpack.c.bf16 %v886, %v884
        %v1116 = vpack.c.bf16 %v890, %v888
        %v1117 = vpack.c.bf16 %v894, %v892
        %v1118 = vpack.c.bf16 %v898, %v896
        %v1119 = vpack.c.bf16 %v902, %v900
        %v1136 = vunpack.c.l.b16 %v389
        %v1137 = vunpack.c.l.b16 %v390
        %v1138 = vunpack.c.l.b16 %v391
        %v1139 = vunpack.c.l.b16 %v392
        %v1140 = vunpack.c.l.b16 %v393
        %v1141 = vunpack.c.l.b16 %v394
        %v1142 = vunpack.c.l.b16 %v395
        %v1143 = vunpack.c.l.b16 %v396
        %v1144 = vunpack.c.l.b16 %v397
        %v1145 = vunpack.c.l.b16 %v398
        %v1146 = vunpack.c.l.b16 %v399
        %v1147 = vunpack.c.l.b16 %v400
        %v1148 = vunpack.c.l.b16 %v401
        %v1149 = vunpack.c.l.b16 %v402
        %v1150 = vunpack.c.l.b16 %v403
        %v1151 = vunpack.c.l.b16 %v404
        %v1152 = vpack.c.b16 %v1137, %v1136
        %v1153 = vpack.c.b16 %v1139, %v1138
        %v1154 = vpack.c.b16 %v1141, %v1140
        %v1155 = vpack.c.b16 %v1143, %v1142
        %v1156 = vpack.c.b16 %v1145, %v1144
        %v1157 = vpack.c.b16 %v1147, %v1146
        %v1158 = vpack.c.b16 %v1149, %v1148
        %v1159 = vpack.c.b16 %v1151, %v1150
        %1168 = vmatprep.subr.bf16.mxu0 0
        %1169 = vmatpush1.bf16.msra.mxu0 %v1159
        %1170 = vmatprep.subr.bf16.mxu0 0
        %1171 = vmatpush1.bf16.msra.mxu0 %v1158
        %1172 = vmatprep.subr.bf16.mxu0 0
        %1173 = vmatpush1.bf16.msra.mxu0 %v1157
        %1174 = vmatprep.subr.bf16.mxu0 0
        %1175 = vmatpush1.bf16.msra.mxu0 %v1156
        %1176 = vmatprep.subr.bf16.mxu0 0
        %1177 = vmatpush1.bf16.msra.mxu0 %v1155
        %1178 = vmatprep.subr.bf16.mxu0 0
        %1179 = vmatpush1.bf16.msra.mxu0 %v1154
        %1180 = vmatprep.subr.bf16.mxu0 0
        %1181 = vmatpush1.bf16.msra.mxu0 %v1153
        %1182 = vmatprep.subr.bf16.mxu0 0
        %1183 = vmatpush1.bf16.msra.mxu0 %v1152
        %1184 = vmatprep.subr.bf16.mxu0 0
        %1185 = vmatpush2.bf16.msra.mxu0 0
        %1186 = vmatprep.subr.bf16.mxu0 0
        %1187 = vmatpush2.bf16.msra.mxu0 0
        %1188 = vmatprep.subr.bf16.mxu0 0
        %1189 = vmatpush2.bf16.msra.mxu0 0
        %1190 = vmatprep.subr.bf16.mxu0 0
        %1191 = vmatpush2.bf16.msra.mxu0 0
        %1192 = vmatprep.subr.bf16.mxu0 0
        %1193 = vmatpush2.bf16.msra.mxu0 0
        %1194 = vmatprep.subr.bf16.mxu0 0
        %1195 = vmatpush2.bf16.msra.mxu0 0
        %1196 = vmatprep.subr.bf16.mxu0 0
        %1197 = vmatpush2.bf16.msra.mxu0 0
        %1198 = vmatprep.subr.bf16.mxu0 0
        %1199 = vmatpush2.bf16.msra.mxu0 0
        %1200 = vmatprep.mubr.bf16.mxu0 0
        %1201 = vmatmul.mubr.bf16.gmra.mxu0 %v1112
        %v1202 = vpop.f32.mrf.mxu0
        %v1203 = vadd.f32 0.0, %v1202
        %v1204 = vpop.f32.mrf.mxu0
        %v1205 = vpop.f32.mrf.mxu0
        %v1206 = vadd.f32 0.0, %v1205
        %v1207 = vpop.f32.mrf.mxu0
        %1208 = vmatprep.mubr.bf16.mxu0 0
        %1209 = vmatmul.mubr.bf16.gmra.mxu0 %v1113
        %v1210 = vpop.f32.mrf.mxu0
        %v1211 = vadd.f32 0.0, %v1210
        %v1212 = vpop.f32.mrf.mxu0
        %v1213 = vpop.f32.mrf.mxu0
        %v1214 = vadd.f32 0.0, %v1213
        %v1215 = vpop.f32.mrf.mxu0
        %1216 = vmatprep.mubr.bf16.mxu0 0
        %1217 = vmatmul.mubr.bf16.gmra.mxu0 %v1114
        %v1218 = vpop.f32.mrf.mxu0
        %v1219 = vadd.f32 0.0, %v1218
        %v1220 = vpop.f32.mrf.mxu0
        %v1221 = vpop.f32.mrf.mxu0
        %v1222 = vadd.f32 0.0, %v1221
        %v1223 = vpop.f32.mrf.mxu0
        %1224 = vmatprep.mubr.bf16.mxu0 0
        %1225 = vmatmul.mubr.bf16.gmra.mxu0 %v1115
        %v1226 = vpop.f32.mrf.mxu0
        %v1227 = vadd.f32 0.0, %v1226
        %v1228 = vpop.f32.mrf.mxu0
        %v1229 = vpop.f32.mrf.mxu0
        %v1230 = vadd.f32 0.0, %v1229
        %v1231 = vpop.f32.mrf.mxu0
        %1232 = vmatprep.mubr.bf16.mxu0 0
        %1233 = vmatmul.mubr.bf16.gmra.mxu0 %v1116
        %v1234 = vpop.f32.mrf.mxu0
        %v1235 = vadd.f32 0.0, %v1234
        %v1236 = vpop.f32.mrf.mxu0
        %v1237 = vpop.f32.mrf.mxu0
        %v1238 = vadd.f32 0.0, %v1237
        %v1239 = vpop.f32.mrf.mxu0
        %1240 = vmatprep.mubr.bf16.mxu0 0
        %1241 = vmatmul.mubr.bf16.gmra.mxu0 %v1117
        %v1242 = vpop.f32.mrf.mxu0
        %v1243 = vadd.f32 0.0, %v1242
        %v1244 = vpop.f32.mrf.mxu0
        %v1245 = vpop.f32.mrf.mxu0
        %v1246 = vadd.f32 0.0, %v1245
        %v1247 = vpop.f32.mrf.mxu0
        %1248 = vmatprep.mubr.bf16.mxu0 0
        %1249 = vmatmul.mubr.bf16.gmra.mxu0 %v1118
        %v1250 = vpop.f32.mrf.mxu0
        %v1251 = vadd.f32 0.0, %v1250
        %v1252 = vpop.f32.mrf.mxu0
        %v1253 = vpop.f32.mrf.mxu0
        %v1254 = vadd.f32 0.0, %v1253
        %v1255 = vpop.f32.mrf.mxu0
        %1256 = vmatprep.mubr.bf16.mxu0 0
        %1257 = vmatmul.mubr.bf16.gmra.mxu0 %v1119
        %v1258 = vpop.f32.mrf.mxu0
        %v1259 = vadd.f32 0.0, %v1258
        %v1260 = vpop.f32.mrf.mxu0
        %v1261 = vpop.f32.mrf.mxu0
        %v1262 = vadd.f32 0.0, %v1261
        %v1263 = vpop.f32.mrf.mxu0
        %1264 = vdwg.mxu0
        %v1265 = vadd.f32 %v1096, %v1203
        %v1266 = vadd.f32 %v1097, %v1206
        %v1267 = vadd.f32 %v1098, %v1211
        %v1268 = vadd.f32 %v1099, %v1214
        %v1269 = vadd.f32 %v1100, %v1219
        %v1270 = vadd.f32 %v1101, %v1222
        %v1271 = vadd.f32 %v1102, %v1227
        %v1272 = vadd.f32 %v1103, %v1230
        %v1273 = vadd.f32 %v1104, %v1235
        %v1274 = vadd.f32 %v1105, %v1238
        %v1275 = vadd.f32 %v1106, %v1243
        %v1276 = vadd.f32 %v1107, %v1246
        %v1277 = vadd.f32 %v1108, %v1251
        %v1278 = vadd.f32 %v1109, %v1254
        %v1279 = vadd.f32 %v1110, %v1259
        %v1280 = vadd.f32 %v1111, %v1262
        %1281 = vst.msk [vmem:[#allocation4] sm:$0xff] %vm485, %v1265
        %1282 = vst.msk [vmem:[#allocation4 + $0x8] sm:$0xff] %vm485, %v1266
        %1283 = vst.msk [vmem:[#allocation4 + $0x10] sm:$0xff] %vm485, %v1267
        %1284 = vst.msk [vmem:[#allocation4 + $0x18] sm:$0xff] %vm485, %v1268
        %1285 = vst.msk [vmem:[#allocation4 + $0x20] sm:$0xff] %vm485, %v1269
        %1286 = vst.msk [vmem:[#allocation4 + $0x28] sm:$0xff] %vm485, %v1270
        %1287 = vst.msk [vmem:[#allocation4 + $0x30] sm:$0xff] %vm485, %v1271
        %1288 = vst.msk [vmem:[#allocation4 + $0x38] sm:$0xff] %vm485, %v1272
        %1289 = vst.msk [vmem:[#allocation4 + $0x40] sm:$0xff] %vm485, %v1273
        %1290 = vst.msk [vmem:[#allocation4 + $0x48] sm:$0xff] %vm485, %v1274
        %1291 = vst.msk [vmem:[#allocation4 + $0x50] sm:$0xff] %vm485, %v1275
        %1292 = vst.msk [vmem:[#allocation4 + $0x58] sm:$0xff] %vm485, %v1276
        %1293 = vst.msk [vmem:[#allocation4 + $0x60] sm:$0xff] %vm485, %v1277
        %1294 = vst.msk [vmem:[#allocation4 + $0x68] sm:$0xff] %vm485, %v1278
        %1295 = vst.msk [vmem:[#allocation4 + $0x70] sm:$0xff] %vm485, %v1279
        %1296 = vst.msk [vmem:[#allocation4 + $0x78] sm:$0xff] %vm485, %v1280
        %1297 = vst.msk [vmem:[#allocation2] sm:$0xff] %vm983, %v679
        %1298 = vst.msk [vmem:[#allocation2 + $0x8] sm:$0xff] %vm983, %v680
        %1299 = vst.msk [vmem:[#allocation2 + $0x10] sm:$0xff] %vm983, %v681
        %1300 = vst.msk [vmem:[#allocation2 + $0x18] sm:$0xff] %vm983, %v682
        %1301 = vst.msk [vmem:[#allocation2 + $0x20] sm:$0xff] %vm983, %v683
        %1302 = vst.msk [vmem:[#allocation2 + $0x28] sm:$0xff] %vm983, %v684
        %1303 = vst.msk [vmem:[#allocation2 + $0x30] sm:$0xff] %vm983, %v685
        %1304 = vst.msk [vmem:[#allocation2 + $0x38] sm:$0xff] %vm983, %v686
        %1305 = vst.msk [vmem:[#allocation2 + $0x40] sm:$0xff] %vm983, %v687
        %1306 = vst.msk [vmem:[#allocation2 + $0x48] sm:$0xff] %vm983, %v688
        %1307 = vst.msk [vmem:[#allocation2 + $0x50] sm:$0xff] %vm983, %v689
        %1308 = vst.msk [vmem:[#allocation2 + $0x58] sm:$0xff] %vm983, %v690
        %1309 = vst.msk [vmem:[#allocation2 + $0x60] sm:$0xff] %vm983, %v691
        %1310 = vst.msk [vmem:[#allocation2 + $0x68] sm:$0xff] %vm983, %v692
        %1311 = vst.msk [vmem:[#allocation2 + $0x70] sm:$0xff] %vm983, %v693
        %1312 = vst.msk [vmem:[#allocation2 + $0x78] sm:$0xff] %vm983, %v694
        %1313 = vrot.lane.b32.xlu0 %v437, 96
        %v1314 = vpop.permute.xlu0 %1313
        %1315 = vrot.lane.b32.xlu0 %v438, 96
        %v1316 = vpop.permute.xlu0 %1315
        %1317 = vrot.lane.b32.xlu0 %v439, 96
        %v1318 = vpop.permute.xlu0 %1317
        %1319 = vrot.lane.b32.xlu0 %v440, 96
        %v1320 = vpop.permute.xlu0 %1319
        %1321 = vrot.lane.b32.xlu0 %v441, 96
        %v1322 = vpop.permute.xlu0 %1321
        %1323 = vrot.lane.b32.xlu0 %v442, 96
        %v1324 = vpop.permute.xlu0 %1323
        %1325 = vrot.lane.b32.xlu0 %v443, 96
        %v1326 = vpop.permute.xlu0 %1325
        %1327 = vrot.lane.b32.xlu0 %v444, 96
        %v1328 = vpop.permute.xlu0 %1327
        %1329 = vrot.lane.b32.xlu0 %v477, 96
        %v1330 = vpop.permute.xlu0 %1329
        %1331 = vrot.lane.b32.xlu0 %v478, 96
        %v1332 = vpop.permute.xlu0 %1331
        %1333 = vrot.lane.b32.xlu0 %v479, 96
        %v1334 = vpop.permute.xlu0 %1333
        %1335 = vrot.lane.b32.xlu0 %v480, 96
        %v1336 = vpop.permute.xlu0 %1335
        %1337 = vrot.lane.b32.xlu0 %v481, 96
        %v1338 = vpop.permute.xlu0 %1337
        %1339 = vrot.lane.b32.xlu0 %v482, 96
        %v1340 = vpop.permute.xlu0 %1339
        %1341 = vrot.lane.b32.xlu0 %v483, 96
        %v1342 = vpop.permute.xlu0 %1341
        %1343 = vrot.lane.b32.xlu0 %v484, 96
        %v1344 = vpop.permute.xlu0 %1343
        %v1346 = vsel %vm485, %v1314, 0
        %v1349 = vsel %vm485, %v1316, 0
        %v1352 = vsel %vm485, %v1318, 0
        %v1355 = vsel %vm485, %v1320, 0
        %v1358 = vsel %vm485, %v1322, 0
        %v1361 = vsel %vm485, %v1324, 0
        %v1364 = vsel %vm485, %v1326, 0
        %v1367 = vsel %vm485, %v1328, 0
        %v1370 = vsel %vm485, %v1330, 0
        %v1373 = vsel %vm485, %v1332, 0
        %v1376 = vsel %vm485, %v1334, 0
        %v1379 = vsel %vm485, %v1336, 0
        %v1382 = vsel %vm485, %v1338, 0
        %v1385 = vsel %vm485, %v1340, 0
        %v1388 = vsel %vm485, %v1342, 0
        %v1391 = vsel %vm485, %v1344, 0
        %1393 = vmatprep.subr.bf16.mxu0 0
        %1394 = vmatpush1.bf16.xpose.msra.mxu0 %v1391
        %1395 = vmatprep.subr.bf16.mxu0 0
        %1396 = vmatpush1.bf16.xpose.msra.mxu0 %v1388
        %1397 = vmatprep.subr.bf16.mxu0 0
        %1398 = vmatpush1.bf16.xpose.msra.mxu0 %v1385
        %1399 = vmatprep.subr.bf16.mxu0 0
        %1400 = vmatpush1.bf16.xpose.msra.mxu0 %v1382
        %1401 = vmatprep.subr.bf16.mxu0 0
        %1402 = vmatpush1.bf16.xpose.msra.mxu0 %v1379
        %1403 = vmatprep.subr.bf16.mxu0 0
        %1404 = vmatpush1.bf16.xpose.msra.mxu0 %v1376
        %1405 = vmatprep.subr.bf16.mxu0 0
        %1406 = vmatpush1.bf16.xpose.msra.mxu0 %v1373
        %1407 = vmatprep.subr.bf16.mxu0 0
        %1408 = vmatpush1.bf16.xpose.msra.mxu0 %v1370
        %1409 = vmatprep.subr.bf16.mxu0 0
        %1410 = vmatpush2.bf16.xpose.msra.mxu0 0
        %1411 = vmatprep.subr.bf16.mxu0 0
        %1412 = vmatpush2.bf16.xpose.msra.mxu0 0
        %1413 = vmatprep.subr.bf16.mxu0 0
        %1414 = vmatpush2.bf16.xpose.msra.mxu0 0
        %1415 = vmatprep.subr.bf16.mxu0 0
        %1416 = vmatpush2.bf16.xpose.msra.mxu0 0
        %1417 = vmatprep.subr.bf16.mxu0 0
        %1418 = vmatpush2.bf16.xpose.msra.mxu0 0
        %1419 = vmatprep.subr.bf16.mxu0 0
        %1420 = vmatpush2.bf16.xpose.msra.mxu0 0
        %1421 = vmatprep.subr.bf16.mxu0 0
        %1422 = vmatpush2.bf16.xpose.msra.mxu0 0
        %1423 = vmatprep.subr.bf16.mxu0 0
        %1424 = vmatpush2.bf16.xpose.msra.mxu0 0
        %1425 = vmatprep.mubr.bf16.mxu0 0
        %1426 = vmatmul.mubr.bf16.gmra.mxu0 %v1346
        %v1427 = vpop.f32.mrf.mxu0
        %v1428 = vadd.f32 0.0, %v1427
        %v1429 = vpop.f32.mrf.mxu0
        %v1430 = vpop.f32.mrf.mxu0
        %v1431 = vadd.f32 0.0, %v1430
        %v1432 = vpop.f32.mrf.mxu0
        %1433 = vmatprep.mubr.bf16.mxu0 0
        %1434 = vmatmul.mubr.bf16.gmra.mxu0 %v1349
        %v1435 = vpop.f32.mrf.mxu0
        %v1436 = vadd.f32 0.0, %v1435
        %v1437 = vpop.f32.mrf.mxu0
        %v1438 = vpop.f32.mrf.mxu0
        %v1439 = vadd.f32 0.0, %v1438
        %v1440 = vpop.f32.mrf.mxu0
        %1441 = vmatprep.mubr.bf16.mxu0 0
        %1442 = vmatmul.mubr.bf16.gmra.mxu0 %v1352
        %v1443 = vpop.f32.mrf.mxu0
        %v1444 = vadd.f32 0.0, %v1443
        %v1445 = vpop.f32.mrf.mxu0
        %v1446 = vpop.f32.mrf.mxu0
        %v1447 = vadd.f32 0.0, %v1446
        %v1448 = vpop.f32.mrf.mxu0
        %1449 = vmatprep.mubr.bf16.mxu0 0
        %1450 = vmatmul.mubr.bf16.gmra.mxu0 %v1355
        %v1451 = vpop.f32.mrf.mxu0
        %v1452 = vadd.f32 0.0, %v1451
        %v1453 = vpop.f32.mrf.mxu0
        %v1454 = vpop.f32.mrf.mxu0
        %v1455 = vadd.f32 0.0, %v1454
        %v1456 = vpop.f32.mrf.mxu0
        %1457 = vmatprep.mubr.bf16.mxu0 0
        %1458 = vmatmul.mubr.bf16.gmra.mxu0 %v1358
        %v1459 = vpop.f32.mrf.mxu0
        %v1460 = vadd.f32 0.0, %v1459
        %v1461 = vpop.f32.mrf.mxu0
        %v1462 = vpop.f32.mrf.mxu0
        %v1463 = vadd.f32 0.0, %v1462
        %v1464 = vpop.f32.mrf.mxu0
        %1465 = vmatprep.mubr.bf16.mxu0 0
        %1466 = vmatmul.mubr.bf16.gmra.mxu0 %v1361
        %v1467 = vpop.f32.mrf.mxu0
        %v1468 = vadd.f32 0.0, %v1467
        %v1469 = vpop.f32.mrf.mxu0
        %v1470 = vpop.f32.mrf.mxu0
        %v1471 = vadd.f32 0.0, %v1470
        %v1472 = vpop.f32.mrf.mxu0
        %1473 = vmatprep.mubr.bf16.mxu0 0
        %1474 = vmatmul.mubr.bf16.gmra.mxu0 %v1364
        %v1475 = vpop.f32.mrf.mxu0
        %v1476 = vadd.f32 0.0, %v1475
        %v1477 = vpop.f32.mrf.mxu0
        %v1478 = vpop.f32.mrf.mxu0
        %v1479 = vadd.f32 0.0, %v1478
        %v1480 = vpop.f32.mrf.mxu0
        %1481 = vmatprep.mubr.bf16.mxu0 0
        %1482 = vmatmul.mubr.bf16.gmra.mxu0 %v1367
        %v1483 = vpop.f32.mrf.mxu0
        %v1484 = vadd.f32 0.0, %v1483
        %v1485 = vpop.f32.mrf.mxu0
        %v1486 = vpop.f32.mrf.mxu0
        %v1487 = vadd.f32 0.0, %v1486
        %v1488 = vpop.f32.mrf.mxu0
        %1489 = vdwg.mxu0
        %v1490 = vld [vmem:[#allocation2] sm:$0xff]
        %v1491 = vld [vmem:[#allocation2 + $0x8] sm:$0xff]
        %v1492 = vld [vmem:[#allocation2 + $0x10] sm:$0xff]
        %v1493 = vld [vmem:[#allocation2 + $0x18] sm:$0xff]
        %v1494 = vld [vmem:[#allocation2 + $0x20] sm:$0xff]
        %v1495 = vld [vmem:[#allocation2 + $0x28] sm:$0xff]
        %v1496 = vld [vmem:[#allocation2 + $0x30] sm:$0xff]
        %v1497 = vld [vmem:[#allocation2 + $0x38] sm:$0xff]
        %v1498 = vld [vmem:[#allocation2 + $0x40] sm:$0xff]
        %v1499 = vld [vmem:[#allocation2 + $0x48] sm:$0xff]
        %v1500 = vld [vmem:[#allocation2 + $0x50] sm:$0xff]
        %v1501 = vld [vmem:[#allocation2 + $0x58] sm:$0xff]
        %v1502 = vld [vmem:[#allocation2 + $0x60] sm:$0xff]
        %v1503 = vld [vmem:[#allocation2 + $0x68] sm:$0xff]
        %v1504 = vld [vmem:[#allocation2 + $0x70] sm:$0xff]
        %v1505 = vld [vmem:[#allocation2 + $0x78] sm:$0xff]
        %1506 = vmax.xlane.f32.xlu0 %v1428
        %v1507 = vpop.xlane.xlu0 %1506
        %1508 = vmax.xlane.f32.xlu0 %v1431
        %v1509 = vpop.xlane.xlu0 %1508
        %1510 = vmax.xlane.f32.xlu0 %v1436
        %v1511 = vpop.xlane.xlu0 %1510
        %1512 = vmax.xlane.f32.xlu0 %v1439
        %v1513 = vpop.xlane.xlu0 %1512
        %1514 = vmax.xlane.f32.xlu0 %v1444
        %v1515 = vpop.xlane.xlu0 %1514
        %1516 = vmax.xlane.f32.xlu0 %v1447
        %v1517 = vpop.xlane.xlu0 %1516
        %1518 = vmax.xlane.f32.xlu0 %v1452
        %v1519 = vpop.xlane.xlu0 %1518
        %1520 = vmax.xlane.f32.xlu0 %v1455
        %v1521 = vpop.xlane.xlu0 %1520
        %1522 = vmax.xlane.f32.xlu0 %v1460
        %v1523 = vpop.xlane.xlu0 %1522
        %1524 = vmax.xlane.f32.xlu0 %v1463
        %v1525 = vpop.xlane.xlu0 %1524
        %1526 = vmax.xlane.f32.xlu0 %v1468
        %v1527 = vpop.xlane.xlu0 %1526
        %1528 = vmax.xlane.f32.xlu0 %v1471
        %v1529 = vpop.xlane.xlu0 %1528
        %1530 = vmax.xlane.f32.xlu0 %v1476
        %v1531 = vpop.xlane.xlu0 %1530
        %1532 = vmax.xlane.f32.xlu0 %v1479
        %v1533 = vpop.xlane.xlu0 %1532
        %1534 = vmax.xlane.f32.xlu0 %v1484
        %v1535 = vpop.xlane.xlu0 %1534
        %1536 = vmax.xlane.f32.xlu0 %v1487
        %v1537 = vpop.xlane.xlu0 %1536
        %v1538 = vmax.f32 %v1490, %v1507
        %v1539 = vmax.f32 %v1491, %v1509
        %v1540 = vmax.f32 %v1492, %v1511
        %v1541 = vmax.f32 %v1493, %v1513
        %v1542 = vmax.f32 %v1494, %v1515
        %v1543 = vmax.f32 %v1495, %v1517
        %v1544 = vmax.f32 %v1496, %v1519
        %v1545 = vmax.f32 %v1497, %v1521
        %v1546 = vmax.f32 %v1498, %v1523
        %v1547 = vmax.f32 %v1499, %v1525
        %v1548 = vmax.f32 %v1500, %v1527
        %v1549 = vmax.f32 %v1501, %v1529
        %v1550 = vmax.f32 %v1502, %v1531
        %v1551 = vmax.f32 %v1503, %v1533
        %v1552 = vmax.f32 %v1504, %v1535
        %v1553 = vmax.f32 %v1505, %v1537
        %v1554 = vsub.f32 %v1490, %v1538
        %v1555 = vsub.f32 %v1491, %v1539
        %v1556 = vsub.f32 %v1492, %v1540
        %v1557 = vsub.f32 %v1493, %v1541
        %v1558 = vsub.f32 %v1494, %v1542
        %v1559 = vsub.f32 %v1495, %v1543
        %v1560 = vsub.f32 %v1496, %v1544
        %v1561 = vsub.f32 %v1497, %v1545
        %v1562 = vsub.f32 %v1498, %v1546
        %v1563 = vsub.f32 %v1499, %v1547
        %v1564 = vsub.f32 %v1500, %v1548
        %v1565 = vsub.f32 %v1501, %v1549
        %v1566 = vsub.f32 %v1502, %v1550
        %v1567 = vsub.f32 %v1503, %v1551
        %v1568 = vsub.f32 %v1504, %v1552
        %v1569 = vsub.f32 %v1505, %v1553
        %v1570 = vmul.f32 %v1554, 0.17677669
        %v1571 = vmul.f32 %v1555, 0.17677669
        %v1572 = vmul.f32 %v1556, 0.17677669
        %v1573 = vmul.f32 %v1557, 0.17677669
        %v1574 = vmul.f32 %v1558, 0.17677669
        %v1575 = vmul.f32 %v1559, 0.17677669
        %v1576 = vmul.f32 %v1560, 0.17677669
        %v1577 = vmul.f32 %v1561, 0.17677669
        %v1578 = vmul.f32 %v1562, 0.17677669
        %v1579 = vmul.f32 %v1563, 0.17677669
        %v1580 = vmul.f32 %v1564, 0.17677669
        %v1581 = vmul.f32 %v1565, 0.17677669
        %v1582 = vmul.f32 %v1566, 0.17677669
        %v1583 = vmul.f32 %v1567, 0.17677669
        %v1584 = vmul.f32 %v1568, 0.17677669
        %v1585 = vmul.f32 %v1569, 0.17677669
        %v1586 = vmul.f32 %v1570, 1.442695
        %v1587 = vpow.pop %v1586
        %v1588 = vmul.f32 %v1571, 1.442695
        %v1589 = vpow.pop %v1588
        %v1590 = vmul.f32 %v1572, 1.442695
        %v1591 = vpow.pop %v1590
        %v1592 = vmul.f32 %v1573, 1.442695
        %v1593 = vpow.pop %v1592
        %v1594 = vmul.f32 %v1574, 1.442695
        %v1595 = vpow.pop %v1594
        %v1596 = vmul.f32 %v1575, 1.442695
        %v1597 = vpow.pop %v1596
        %v1598 = vmul.f32 %v1576, 1.442695
        %v1599 = vpow.pop %v1598
        %v1600 = vmul.f32 %v1577, 1.442695
        %v1601 = vpow.pop %v1600
        %v1602 = vmul.f32 %v1578, 1.442695
        %v1603 = vpow.pop %v1602
        %v1604 = vmul.f32 %v1579, 1.442695
        %v1605 = vpow.pop %v1604
        %v1606 = vmul.f32 %v1580, 1.442695
        %v1607 = vpow.pop %v1606
        %v1608 = vmul.f32 %v1581, 1.442695
        %v1609 = vpow.pop %v1608
        %v1610 = vmul.f32 %v1582, 1.442695
        %v1611 = vpow.pop %v1610
        %v1612 = vmul.f32 %v1583, 1.442695
        %v1613 = vpow.pop %v1612
        %v1614 = vmul.f32 %v1584, 1.442695
        %v1615 = vpow.pop %v1614
        %v1616 = vmul.f32 %v1585, 1.442695
        %v1617 = vpow.pop %v1616
        %1619 = vset.pattern.permute.xlu0 1
        %1620 = vperm.xlu0 %1619, %v1538
        %v1621 = vpop.permute.xlu0 %1620
        %1624 = vset.pattern.permute.xlu0 1
        %1625 = vperm.xlu0 %1624, %v1539
        %v1626 = vpop.permute.xlu0 %1625
        %1629 = vset.pattern.permute.xlu0 1
        %1630 = vperm.xlu0 %1629, %v1540
        %v1631 = vpop.permute.xlu0 %1630
        %1634 = vset.pattern.permute.xlu0 1
        %1635 = vperm.xlu0 %1634, %v1541
        %v1636 = vpop.permute.xlu0 %1635
        %1639 = vset.pattern.permute.xlu0 1
        %1640 = vperm.xlu0 %1639, %v1542
        %v1641 = vpop.permute.xlu0 %1640
        %1644 = vset.pattern.permute.xlu0 1
        %1645 = vperm.xlu0 %1644, %v1543
        %v1646 = vpop.permute.xlu0 %1645
        %1649 = vset.pattern.permute.xlu0 1
        %1650 = vperm.xlu0 %1649, %v1544
        %v1651 = vpop.permute.xlu0 %1650
        %1654 = vset.pattern.permute.xlu0 1
        %1655 = vperm.xlu0 %1654, %v1545
        %v1656 = vpop.permute.xlu0 %1655
        %1659 = vset.pattern.permute.xlu0 1
        %1660 = vperm.xlu0 %1659, %v1546
        %v1661 = vpop.permute.xlu0 %1660
        %1664 = vset.pattern.permute.xlu0 1
        %1665 = vperm.xlu0 %1664, %v1547
        %v1666 = vpop.permute.xlu0 %1665
        %1669 = vset.pattern.permute.xlu0 1
        %1670 = vperm.xlu0 %1669, %v1548
        %v1671 = vpop.permute.xlu0 %1670
        %1674 = vset.pattern.permute.xlu0 1
        %1675 = vperm.xlu0 %1674, %v1549
        %v1676 = vpop.permute.xlu0 %1675
        %1679 = vset.pattern.permute.xlu0 1
        %1680 = vperm.xlu0 %1679, %v1550
        %v1681 = vpop.permute.xlu0 %1680
        %1684 = vset.pattern.permute.xlu0 1
        %1685 = vperm.xlu0 %1684, %v1551
        %v1686 = vpop.permute.xlu0 %1685
        %1689 = vset.pattern.permute.xlu0 1
        %1690 = vperm.xlu0 %1689, %v1552
        %v1691 = vpop.permute.xlu0 %1690
        %1694 = vset.pattern.permute.xlu0 1
        %1695 = vperm.xlu0 %1694, %v1553
        %v1696 = vpop.permute.xlu0 %1695
        %v1698 = vsub.f32 %v1428, %v1621
        %v1699 = vsub.f32 %v1431, %v1626
        %v1700 = vsub.f32 %v1436, %v1631
        %v1701 = vsub.f32 %v1439, %v1636
        %v1702 = vsub.f32 %v1444, %v1641
        %v1703 = vsub.f32 %v1447, %v1646
        %v1704 = vsub.f32 %v1452, %v1651
        %v1705 = vsub.f32 %v1455, %v1656
        %v1706 = vsub.f32 %v1460, %v1661
        %v1707 = vsub.f32 %v1463, %v1666
        %v1708 = vsub.f32 %v1468, %v1671
        %v1709 = vsub.f32 %v1471, %v1676
        %v1710 = vsub.f32 %v1476, %v1681
        %v1711 = vsub.f32 %v1479, %v1686
        %v1712 = vsub.f32 %v1484, %v1691
        %v1713 = vsub.f32 %v1487, %v1696
        %v1714 = vmul.f32 %v1698, 0.17677669
        %v1715 = vmul.f32 %v1699, 0.17677669
        %v1716 = vmul.f32 %v1700, 0.17677669
        %v1717 = vmul.f32 %v1701, 0.17677669
        %v1718 = vmul.f32 %v1702, 0.17677669
        %v1719 = vmul.f32 %v1703, 0.17677669
        %v1720 = vmul.f32 %v1704, 0.17677669
        %v1721 = vmul.f32 %v1705, 0.17677669
        %v1722 = vmul.f32 %v1706, 0.17677669
        %v1723 = vmul.f32 %v1707, 0.17677669
        %v1724 = vmul.f32 %v1708, 0.17677669
        %v1725 = vmul.f32 %v1709, 0.17677669
        %v1726 = vmul.f32 %v1710, 0.17677669
        %v1727 = vmul.f32 %v1711, 0.17677669
        %v1728 = vmul.f32 %v1712, 0.17677669
        %v1729 = vmul.f32 %v1713, 0.17677669
        %v1730 = vmul.f32 %v1714, 1.442695
        %v1731 = vpow.pop %v1730
        %v1732 = vmul.f32 %v1715, 1.442695
        %v1733 = vpow.pop %v1732
        %v1734 = vmul.f32 %v1716, 1.442695
        %v1735 = vpow.pop %v1734
        %v1736 = vmul.f32 %v1717, 1.442695
        %v1737 = vpow.pop %v1736
        %v1738 = vmul.f32 %v1718, 1.442695
        %v1739 = vpow.pop %v1738
        %v1740 = vmul.f32 %v1719, 1.442695
        %v1741 = vpow.pop %v1740
        %v1742 = vmul.f32 %v1720, 1.442695
        %v1743 = vpow.pop %v1742
        %v1744 = vmul.f32 %v1721, 1.442695
        %v1745 = vpow.pop %v1744
        %v1746 = vmul.f32 %v1722, 1.442695
        %v1747 = vpow.pop %v1746
        %v1748 = vmul.f32 %v1723, 1.442695
        %v1749 = vpow.pop %v1748
        %v1750 = vmul.f32 %v1724, 1.442695
        %v1751 = vpow.pop %v1750
        %v1752 = vmul.f32 %v1725, 1.442695
        %v1753 = vpow.pop %v1752
        %v1754 = vmul.f32 %v1726, 1.442695
        %v1755 = vpow.pop %v1754
        %v1756 = vmul.f32 %v1727, 1.442695
        %v1757 = vpow.pop %v1756
        %v1758 = vmul.f32 %v1728, 1.442695
        %v1759 = vpow.pop %v1758
        %v1760 = vmul.f32 %v1729, 1.442695
        %v1761 = vpow.pop %v1760
        %v1762 = vld [vmem:[#allocation3] sm:$0xff]
        %v1763 = vld [vmem:[#allocation3 + $0x8] sm:$0xff]
        %v1764 = vld [vmem:[#allocation3 + $0x10] sm:$0xff]
        %v1765 = vld [vmem:[#allocation3 + $0x18] sm:$0xff]
        %v1766 = vld [vmem:[#allocation3 + $0x20] sm:$0xff]
        %v1767 = vld [vmem:[#allocation3 + $0x28] sm:$0xff]
        %v1768 = vld [vmem:[#allocation3 + $0x30] sm:$0xff]
        %v1769 = vld [vmem:[#allocation3 + $0x38] sm:$0xff]
        %v1770 = vld [vmem:[#allocation3 + $0x40] sm:$0xff]
        %v1771 = vld [vmem:[#allocation3 + $0x48] sm:$0xff]
        %v1772 = vld [vmem:[#allocation3 + $0x50] sm:$0xff]
        %v1773 = vld [vmem:[#allocation3 + $0x58] sm:$0xff]
        %v1774 = vld [vmem:[#allocation3 + $0x60] sm:$0xff]
        %v1775 = vld [vmem:[#allocation3 + $0x68] sm:$0xff]
        %v1776 = vld [vmem:[#allocation3 + $0x70] sm:$0xff]
        %v1777 = vld [vmem:[#allocation3 + $0x78] sm:$0xff]
        %v1778 = vmul.f32 %v1587, %v1762
        %v1779 = vmul.f32 %v1589, %v1763
        %v1780 = vmul.f32 %v1591, %v1764
        %v1781 = vmul.f32 %v1593, %v1765
        %v1782 = vmul.f32 %v1595, %v1766
        %v1783 = vmul.f32 %v1597, %v1767
        %v1784 = vmul.f32 %v1599, %v1768
        %v1785 = vmul.f32 %v1601, %v1769
        %v1786 = vmul.f32 %v1603, %v1770
        %v1787 = vmul.f32 %v1605, %v1771
        %v1788 = vmul.f32 %v1607, %v1772
        %v1789 = vmul.f32 %v1609, %v1773
        %v1790 = vmul.f32 %v1611, %v1774
        %v1791 = vmul.f32 %v1613, %v1775
        %v1792 = vmul.f32 %v1615, %v1776
        %v1793 = vmul.f32 %v1617, %v1777
        %1794 = vadd.xlane.f32.xlu0 %v1731
        %v1795 = vpop.xlane.xlu0 %1794
        %1796 = vadd.xlane.f32.xlu0 %v1733
        %v1797 = vpop.xlane.xlu0 %1796
        %1798 = vadd.xlane.f32.xlu0 %v1735
        %v1799 = vpop.xlane.xlu0 %1798
        %1800 = vadd.xlane.f32.xlu0 %v1737
        %v1801 = vpop.xlane.xlu0 %1800
        %1802 = vadd.xlane.f32.xlu0 %v1739
        %v1803 = vpop.xlane.xlu0 %1802
        %1804 = vadd.xlane.f32.xlu0 %v1741
        %v1805 = vpop.xlane.xlu0 %1804
        %1806 = vadd.xlane.f32.xlu0 %v1743
        %v1807 = vpop.xlane.xlu0 %1806
        %1808 = vadd.xlane.f32.xlu0 %v1745
        %v1809 = vpop.xlane.xlu0 %1808
        %1810 = vadd.xlane.f32.xlu0 %v1747
        %v1811 = vpop.xlane.xlu0 %1810
        %1812 = vadd.xlane.f32.xlu0 %v1749
        %v1813 = vpop.xlane.xlu0 %1812
        %1814 = vadd.xlane.f32.xlu0 %v1751
        %v1815 = vpop.xlane.xlu0 %1814
        %1816 = vadd.xlane.f32.xlu0 %v1753
        %v1817 = vpop.xlane.xlu0 %1816
        %1818 = vadd.xlane.f32.xlu0 %v1755
        %v1819 = vpop.xlane.xlu0 %1818
        %1820 = vadd.xlane.f32.xlu0 %v1757
        %v1821 = vpop.xlane.xlu0 %1820
        %1822 = vadd.xlane.f32.xlu0 %v1759
        %v1823 = vpop.xlane.xlu0 %1822
        %1824 = vadd.xlane.f32.xlu0 %v1761
        %v1825 = vpop.xlane.xlu0 %1824
        %v1826 = vadd.f32 %v1778, %v1795
        %v1827 = vadd.f32 %v1779, %v1797
        %v1828 = vadd.f32 %v1780, %v1799
        %v1829 = vadd.f32 %v1781, %v1801
        %v1830 = vadd.f32 %v1782, %v1803
        %v1831 = vadd.f32 %v1783, %v1805
        %v1832 = vadd.f32 %v1784, %v1807
        %v1833 = vadd.f32 %v1785, %v1809
        %v1834 = vadd.f32 %v1786, %v1811
        %v1835 = vadd.f32 %v1787, %v1813
        %v1836 = vadd.f32 %v1788, %v1815
        %v1837 = vadd.f32 %v1789, %v1817
        %v1838 = vadd.f32 %v1790, %v1819
        %v1839 = vadd.f32 %v1791, %v1821
        %v1840 = vadd.f32 %v1792, %v1823
        %v1841 = vadd.f32 %v1793, %v1825
        %vm1842 = vcmask 15368
        %1843 = vst.msk [vmem:[#allocation3] sm:$0xff] %vm1842, %v1826
        %1844 = vst.msk [vmem:[#allocation3 + $0x8] sm:$0xff] %vm1842, %v1827
        %1845 = vst.msk [vmem:[#allocation3 + $0x10] sm:$0xff] %vm1842, %v1828
        %1846 = vst.msk [vmem:[#allocation3 + $0x18] sm:$0xff] %vm1842, %v1829
        %1847 = vst.msk [vmem:[#allocation3 + $0x20] sm:$0xff] %vm1842, %v1830
        %1848 = vst.msk [vmem:[#allocation3 + $0x28] sm:$0xff] %vm1842, %v1831
        %1849 = vst.msk [vmem:[#allocation3 + $0x30] sm:$0xff] %vm1842, %v1832
        %1850 = vst.msk [vmem:[#allocation3 + $0x38] sm:$0xff] %vm1842, %v1833
        %1851 = vst.msk [vmem:[#allocation3 + $0x40] sm:$0xff] %vm1842, %v1834
        %1852 = vst.msk [vmem:[#allocation3 + $0x48] sm:$0xff] %vm1842, %v1835
        %1853 = vst.msk [vmem:[#allocation3 + $0x50] sm:$0xff] %vm1842, %v1836
        %1854 = vst.msk [vmem:[#allocation3 + $0x58] sm:$0xff] %vm1842, %v1837
        %1855 = vst.msk [vmem:[#allocation3 + $0x60] sm:$0xff] %vm1842, %v1838
        %1856 = vst.msk [vmem:[#allocation3 + $0x68] sm:$0xff] %vm1842, %v1839
        %1857 = vst.msk [vmem:[#allocation3 + $0x70] sm:$0xff] %vm1842, %v1840
        %1858 = vst.msk [vmem:[#allocation3 + $0x78] sm:$0xff] %vm1842, %v1841
        %v1859 = vld [vmem:[#allocation4] sm:$0xff]
        %v1860 = vld [vmem:[#allocation4 + $0x8] sm:$0xff]
        %v1861 = vld [vmem:[#allocation4 + $0x10] sm:$0xff]
        %v1862 = vld [vmem:[#allocation4 + $0x18] sm:$0xff]
        %v1863 = vld [vmem:[#allocation4 + $0x20] sm:$0xff]
        %v1864 = vld [vmem:[#allocation4 + $0x28] sm:$0xff]
        %v1865 = vld [vmem:[#allocation4 + $0x30] sm:$0xff]
        %v1866 = vld [vmem:[#allocation4 + $0x38] sm:$0xff]
        %v1867 = vld [vmem:[#allocation4 + $0x40] sm:$0xff]
        %v1868 = vld [vmem:[#allocation4 + $0x48] sm:$0xff]
        %v1869 = vld [vmem:[#allocation4 + $0x50] sm:$0xff]
        %v1870 = vld [vmem:[#allocation4 + $0x58] sm:$0xff]
        %v1871 = vld [vmem:[#allocation4 + $0x60] sm:$0xff]
        %v1872 = vld [vmem:[#allocation4 + $0x68] sm:$0xff]
        %v1873 = vld [vmem:[#allocation4 + $0x70] sm:$0xff]
        %v1874 = vld [vmem:[#allocation4 + $0x78] sm:$0xff]
        %1876 = vset.pattern.permute.xlu0 1
        %1877 = vperm.xlu0 %1876, %v1587
        %v1878 = vpop.permute.xlu0 %1877
        %1881 = vset.pattern.permute.xlu0 1
        %1882 = vperm.xlu0 %1881, %v1589
        %v1883 = vpop.permute.xlu0 %1882
        %1886 = vset.pattern.permute.xlu0 1
        %1887 = vperm.xlu0 %1886, %v1591
        %v1888 = vpop.permute.xlu0 %1887
        %1891 = vset.pattern.permute.xlu0 1
        %1892 = vperm.xlu0 %1891, %v1593
        %v1893 = vpop.permute.xlu0 %1892
        %1896 = vset.pattern.permute.xlu0 1
        %1897 = vperm.xlu0 %1896, %v1595
        %v1898 = vpop.permute.xlu0 %1897
        %1901 = vset.pattern.permute.xlu0 1
        %1902 = vperm.xlu0 %1901, %v1597
        %v1903 = vpop.permute.xlu0 %1902
        %1906 = vset.pattern.permute.xlu0 1
        %1907 = vperm.xlu0 %1906, %v1599
        %v1908 = vpop.permute.xlu0 %1907
        %1911 = vset.pattern.permute.xlu0 1
        %1912 = vperm.xlu0 %1911, %v1601
        %v1913 = vpop.permute.xlu0 %1912
        %1916 = vset.pattern.permute.xlu0 1
        %1917 = vperm.xlu0 %1916, %v1603
        %v1918 = vpop.permute.xlu0 %1917
        %1921 = vset.pattern.permute.xlu0 1
        %1922 = vperm.xlu0 %1921, %v1605
        %v1923 = vpop.permute.xlu0 %1922
        %1926 = vset.pattern.permute.xlu0 1
        %1927 = vperm.xlu0 %1926, %v1607
        %v1928 = vpop.permute.xlu0 %1927
        %1931 = vset.pattern.permute.xlu0 1
        %1932 = vperm.xlu0 %1931, %v1609
        %v1933 = vpop.permute.xlu0 %1932
        %1936 = vset.pattern.permute.xlu0 1
        %1937 = vperm.xlu0 %1936, %v1611
        %v1938 = vpop.permute.xlu0 %1937
        %1941 = vset.pattern.permute.xlu0 1
        %1942 = vperm.xlu0 %1941, %v1613
        %v1943 = vpop.permute.xlu0 %1942
        %1946 = vset.pattern.permute.xlu0 1
        %1947 = vperm.xlu0 %1946, %v1615
        %v1948 = vpop.permute.xlu0 %1947
        %1951 = vset.pattern.permute.xlu0 1
        %1952 = vperm.xlu0 %1951, %v1617
        %v1953 = vpop.permute.xlu0 %1952
        %v1955 = vmul.f32 %v1878, %v1859
        %v1956 = vmul.f32 %v1883, %v1860
        %v1957 = vmul.f32 %v1888, %v1861
        %v1958 = vmul.f32 %v1893, %v1862
        %v1959 = vmul.f32 %v1898, %v1863
        %v1960 = vmul.f32 %v1903, %v1864
        %v1961 = vmul.f32 %v1908, %v1865
        %v1962 = vmul.f32 %v1913, %v1866
        %v1963 = vmul.f32 %v1918, %v1867
        %v1964 = vmul.f32 %v1923, %v1868
        %v1965 = vmul.f32 %v1928, %v1869
        %v1966 = vmul.f32 %v1933, %v1870
        %v1967 = vmul.f32 %v1938, %v1871
        %v1968 = vmul.f32 %v1943, %v1872
        %v1969 = vmul.f32 %v1948, %v1873
        %v1970 = vmul.f32 %v1953, %v1874
        %v1971 = vpack.c.bf16 %v1733, %v1731
        %v1972 = vpack.c.bf16 %v1737, %v1735
        %v1973 = vpack.c.bf16 %v1741, %v1739
        %v1974 = vpack.c.bf16 %v1745, %v1743
        %v1975 = vpack.c.bf16 %v1749, %v1747
        %v1976 = vpack.c.bf16 %v1753, %v1751
        %v1977 = vpack.c.bf16 %v1757, %v1755
        %v1978 = vpack.c.bf16 %v1761, %v1759
        %1979 = vrot.lane.b32.xlu0 %v1152, 96
        %v1980 = vpop.permute.xlu0 %1979
        %1981 = vrot.lane.b32.xlu0 %v1153, 96
        %v1982 = vpop.permute.xlu0 %1981
        %1983 = vrot.lane.b32.xlu0 %v1154, 96
        %v1984 = vpop.permute.xlu0 %1983
        %1985 = vrot.lane.b32.xlu0 %v1155, 96
        %v1986 = vpop.permute.xlu0 %1985
        %1987 = vrot.lane.b32.xlu0 %v1156, 96
        %v1988 = vpop.permute.xlu0 %1987
        %1989 = vrot.lane.b32.xlu0 %v1157, 96
        %v1990 = vpop.permute.xlu0 %1989
        %1991 = vrot.lane.b32.xlu0 %v1158, 96
        %v1992 = vpop.permute.xlu0 %1991
        %1993 = vrot.lane.b32.xlu0 %v1159, 96
        %v1994 = vpop.permute.xlu0 %1993
        %2003 = vmatprep.subr.bf16.mxu0 0
        %2004 = vmatpush1.bf16.msra.mxu0 %v1994
        %2005 = vmatprep.subr.bf16.mxu0 0
        %2006 = vmatpush1.bf16.msra.mxu0 %v1992
        %2007 = vmatprep.subr.bf16.mxu0 0
        %2008 = vmatpush1.bf16.msra.mxu0 %v1990
        %2009 = vmatprep.subr.bf16.mxu0 0
        %2010 = vmatpush1.bf16.msra.mxu0 %v1988
        %2011 = vmatprep.subr.bf16.mxu0 0
        %2012 = vmatpush1.bf16.msra.mxu0 %v1986
        %2013 = vmatprep.subr.bf16.mxu0 0
        %2014 = vmatpush1.bf16.msra.mxu0 %v1984
        %2015 = vmatprep.subr.bf16.mxu0 0
        %2016 = vmatpush1.bf16.msra.mxu0 %v1982
        %2017 = vmatprep.subr.bf16.mxu0 0
        %2018 = vmatpush1.bf16.msra.mxu0 %v1980
        %2019 = vmatprep.subr.bf16.mxu0 0
        %2020 = vmatpush2.bf16.msra.mxu0 0
        %2021 = vmatprep.subr.bf16.mxu0 0
        %2022 = vmatpush2.bf16.msra.mxu0 0
        %2023 = vmatprep.subr.bf16.mxu0 0
        %2024 = vmatpush2.bf16.msra.mxu0 0
        %2025 = vmatprep.subr.bf16.mxu0 0
        %2026 = vmatpush2.bf16.msra.mxu0 0
        %2027 = vmatprep.subr.bf16.mxu0 0
        %2028 = vmatpush2.bf16.msra.mxu0 0
        %2029 = vmatprep.subr.bf16.mxu0 0
        %2030 = vmatpush2.bf16.msra.mxu0 0
        %2031 = vmatprep.subr.bf16.mxu0 0
        %2032 = vmatpush2.bf16.msra.mxu0 0
        %2033 = vmatprep.subr.bf16.mxu0 0
        %2034 = vmatpush2.bf16.msra.mxu0 0
        %2035 = vmatprep.mubr.bf16.mxu0 0
        %2036 = vmatmul.mubr.bf16.gmra.mxu0 %v1971
        %v2037 = vpop.f32.mrf.mxu0
        %v2038 = vadd.f32 0.0, %v2037
        %v2039 = vpop.f32.mrf.mxu0
        %v2040 = vpop.f32.mrf.mxu0
        %v2041 = vadd.f32 0.0, %v2040
        %v2042 = vpop.f32.mrf.mxu0
        %2043 = vmatprep.mubr.bf16.mxu0 0
        %2044 = vmatmul.mubr.bf16.gmra.mxu0 %v1972
        %v2045 = vpop.f32.mrf.mxu0
        %v2046 = vadd.f32 0.0, %v2045
        %v2047 = vpop.f32.mrf.mxu0
        %v2048 = vpop.f32.mrf.mxu0
        %v2049 = vadd.f32 0.0, %v2048
        %v2050 = vpop.f32.mrf.mxu0
        %2051 = vmatprep.mubr.bf16.mxu0 0
        %2052 = vmatmul.mubr.bf16.gmra.mxu0 %v1973
        %v2053 = vpop.f32.mrf.mxu0
        %v2054 = vadd.f32 0.0, %v2053
        %v2055 = vpop.f32.mrf.mxu0
        %v2056 = vpop.f32.mrf.mxu0
        %v2057 = vadd.f32 0.0, %v2056
        %v2058 = vpop.f32.mrf.mxu0
        %2059 = vmatprep.mubr.bf16.mxu0 0
        %2060 = vmatmul.mubr.bf16.gmra.mxu0 %v1974
        %v2061 = vpop.f32.mrf.mxu0
        %v2062 = vadd.f32 0.0, %v2061
        %v2063 = vpop.f32.mrf.mxu0
        %v2064 = vpop.f32.mrf.mxu0
        %v2065 = vadd.f32 0.0, %v2064
        %v2066 = vpop.f32.mrf.mxu0
        %2067 = vmatprep.mubr.bf16.mxu0 0
        %2068 = vmatmul.mubr.bf16.gmra.mxu0 %v1975
        %v2069 = vpop.f32.mrf.mxu0
        %v2070 = vadd.f32 0.0, %v2069
        %v2071 = vpop.f32.mrf.mxu0
        %v2072 = vpop.f32.mrf.mxu0
        %v2073 = vadd.f32 0.0, %v2072
        %v2074 = vpop.f32.mrf.mxu0
        %2075 = vmatprep.mubr.bf16.mxu0 0
        %2076 = vmatmul.mubr.bf16.gmra.mxu0 %v1976
        %v2077 = vpop.f32.mrf.mxu0
        %v2078 = vadd.f32 0.0, %v2077
        %v2079 = vpop.f32.mrf.mxu0
        %v2080 = vpop.f32.mrf.mxu0
        %v2081 = vadd.f32 0.0, %v2080
        %v2082 = vpop.f32.mrf.mxu0
        %2083 = vmatprep.mubr.bf16.mxu0 0
        %2084 = vmatmul.mubr.bf16.gmra.mxu0 %v1977
        %v2085 = vpop.f32.mrf.mxu0
        %v2086 = vadd.f32 0.0, %v2085
        %v2087 = vpop.f32.mrf.mxu0
        %v2088 = vpop.f32.mrf.mxu0
        %v2089 = vadd.f32 0.0, %v2088
        %v2090 = vpop.f32.mrf.mxu0
        %2091 = vmatprep.mubr.bf16.mxu0 0
        %2092 = vmatmul.mubr.bf16.gmra.mxu0 %v1978
        %v2093 = vpop.f32.mrf.mxu0
        %v2094 = vadd.f32 0.0, %v2093
        %v2095 = vpop.f32.mrf.mxu0
        %v2096 = vpop.f32.mrf.mxu0
        %v2097 = vadd.f32 0.0, %v2096
        %v2098 = vpop.f32.mrf.mxu0
        %2099 = vdwg.mxu0
        %2116 = vrot.lane.b32.xlu0 %v2038, 32
        %v2117 = vpop.permute.xlu0 %2116
        %2118 = vrot.lane.b32.xlu0 %v2041, 32
        %v2119 = vpop.permute.xlu0 %2118
        %2120 = vrot.lane.b32.xlu0 %v2046, 32
        %v2121 = vpop.permute.xlu0 %2120
        %2122 = vrot.lane.b32.xlu0 %v2049, 32
        %v2123 = vpop.permute.xlu0 %2122
        %2124 = vrot.lane.b32.xlu0 %v2054, 32
        %v2125 = vpop.permute.xlu0 %2124
        %2126 = vrot.lane.b32.xlu0 %v2057, 32
        %v2127 = vpop.permute.xlu0 %2126
        %2128 = vrot.lane.b32.xlu0 %v2062, 32
        %v2129 = vpop.permute.xlu0 %2128
        %2130 = vrot.lane.b32.xlu0 %v2065, 32
        %v2131 = vpop.permute.xlu0 %2130
        %2132 = vrot.lane.b32.xlu0 %v2070, 32
        %v2133 = vpop.permute.xlu0 %2132
        %2134 = vrot.lane.b32.xlu0 %v2073, 32
        %v2135 = vpop.permute.xlu0 %2134
        %2136 = vrot.lane.b32.xlu0 %v2078, 32
        %v2137 = vpop.permute.xlu0 %2136
        %2138 = vrot.lane.b32.xlu0 %v2081, 32
        %v2139 = vpop.permute.xlu0 %2138
        %2140 = vrot.lane.b32.xlu0 %v2086, 32
        %v2141 = vpop.permute.xlu0 %2140
        %2142 = vrot.lane.b32.xlu0 %v2089, 32
        %v2143 = vpop.permute.xlu0 %2142
        %2144 = vrot.lane.b32.xlu0 %v2094, 32
        %v2145 = vpop.permute.xlu0 %2144
        %2146 = vrot.lane.b32.xlu0 %v2097, 32
        %v2147 = vpop.permute.xlu0 %2146
        %v2164 = vadd.f32 %v1955, %v2117
        %v2165 = vadd.f32 %v1956, %v2119
        %v2166 = vadd.f32 %v1957, %v2121
        %v2167 = vadd.f32 %v1958, %v2123
        %v2168 = vadd.f32 %v1959, %v2125
        %v2169 = vadd.f32 %v1960, %v2127
        %v2170 = vadd.f32 %v1961, %v2129
        %v2171 = vadd.f32 %v1962, %v2131
        %v2172 = vadd.f32 %v1963, %v2133
        %v2173 = vadd.f32 %v1964, %v2135
        %v2174 = vadd.f32 %v1965, %v2137
        %v2175 = vadd.f32 %v1966, %v2139
        %v2176 = vadd.f32 %v1967, %v2141
        %v2177 = vadd.f32 %v1968, %v2143
        %v2178 = vadd.f32 %v1969, %v2145
        %v2179 = vadd.f32 %v1970, %v2147
        %vm2180 = vcmask 523520
        %2181 = vst.msk [vmem:[#allocation4] sm:$0xff] %vm2180, %v2164
        %2182 = vst.msk [vmem:[#allocation4 + $0x8] sm:$0xff] %vm2180, %v2165
        %2183 = vst.msk [vmem:[#allocation4 + $0x10] sm:$0xff] %vm2180, %v2166
        %2184 = vst.msk [vmem:[#allocation4 + $0x18] sm:$0xff] %vm2180, %v2167
        %2185 = vst.msk [vmem:[#allocation4 + $0x20] sm:$0xff] %vm2180, %v2168
        %2186 = vst.msk [vmem:[#allocation4 + $0x28] sm:$0xff] %vm2180, %v2169
        %2187 = vst.msk [vmem:[#allocation4 + $0x30] sm:$0xff] %vm2180, %v2170
        %2188 = vst.msk [vmem:[#allocation4 + $0x38] sm:$0xff] %vm2180, %v2171
        %2189 = vst.msk [vmem:[#allocation4 + $0x40] sm:$0xff] %vm2180, %v2172
        %2190 = vst.msk [vmem:[#allocation4 + $0x48] sm:$0xff] %vm2180, %v2173
        %2191 = vst.msk [vmem:[#allocation4 + $0x50] sm:$0xff] %vm2180, %v2174
        %2192 = vst.msk [vmem:[#allocation4 + $0x58] sm:$0xff] %vm2180, %v2175
        %2193 = vst.msk [vmem:[#allocation4 + $0x60] sm:$0xff] %vm2180, %v2176
        %2194 = vst.msk [vmem:[#allocation4 + $0x68] sm:$0xff] %vm2180, %v2177
        %2195 = vst.msk [vmem:[#allocation4 + $0x70] sm:$0xff] %vm2180, %v2178
        %2196 = vst.msk [vmem:[#allocation4 + $0x78] sm:$0xff] %vm2180, %v2179
        %2197 = vst.msk [vmem:[#allocation2] sm:$0xff] %vm1842, %v1538
        %2198 = vst.msk [vmem:[#allocation2 + $0x8] sm:$0xff] %vm1842, %v1539
        %2199 = vst.msk [vmem:[#allocation2 + $0x10] sm:$0xff] %vm1842, %v1540
        %2200 = vst.msk [vmem:[#allocation2 + $0x18] sm:$0xff] %vm1842, %v1541
        %2201 = vst.msk [vmem:[#allocation2 + $0x20] sm:$0xff] %vm1842, %v1542
        %2202 = vst.msk [vmem:[#allocation2 + $0x28] sm:$0xff] %vm1842, %v1543
        %2203 = vst.msk [vmem:[#allocation2 + $0x30] sm:$0xff] %vm1842, %v1544
        %2204 = vst.msk [vmem:[#allocation2 + $0x38] sm:$0xff] %vm1842, %v1545
        %2205 = vst.msk [vmem:[#allocation2 + $0x40] sm:$0xff] %vm1842, %v1546
        %2206 = vst.msk [vmem:[#allocation2 + $0x48] sm:$0xff] %vm1842, %v1547
        %2207 = vst.msk [vmem:[#allocation2 + $0x50] sm:$0xff] %vm1842, %v1548
        %2208 = vst.msk [vmem:[#allocation2 + $0x58] sm:$0xff] %vm1842, %v1549
        %2209 = vst.msk [vmem:[#allocation2 + $0x60] sm:$0xff] %vm1842, %v1550
        %2210 = vst.msk [vmem:[#allocation2 + $0x68] sm:$0xff] %vm1842, %v1551
        %2211 = vst.msk [vmem:[#allocation2 + $0x70] sm:$0xff] %vm1842, %v1552
        %2212 = vst.msk [vmem:[#allocation2 + $0x78] sm:$0xff] %vm1842, %v1553
        %2213 = vrot.lane.b32.xlu0 %v437, 64
        %v2214 = vpop.permute.xlu0 %2213
        %2215 = vrot.lane.b32.xlu0 %v438, 64
        %v2216 = vpop.permute.xlu0 %2215
        %2217 = vrot.lane.b32.xlu0 %v439, 64
        %v2218 = vpop.permute.xlu0 %2217
        %2219 = vrot.lane.b32.xlu0 %v440, 64
        %v2220 = vpop.permute.xlu0 %2219
        %2221 = vrot.lane.b32.xlu0 %v441, 64
        %v2222 = vpop.permute.xlu0 %2221
        %2223 = vrot.lane.b32.xlu0 %v442, 64
        %v2224 = vpop.permute.xlu0 %2223
        %2225 = vrot.lane.b32.xlu0 %v443, 64
        %v2226 = vpop.permute.xlu0 %2225
        %2227 = vrot.lane.b32.xlu0 %v444, 64
        %v2228 = vpop.permute.xlu0 %2227
        %2229 = vrot.lane.b32.xlu0 %v477, 64
        %v2230 = vpop.permute.xlu0 %2229
        %2231 = vrot.lane.b32.xlu0 %v478, 64
        %v2232 = vpop.permute.xlu0 %2231
        %2233 = vrot.lane.b32.xlu0 %v479, 64
        %v2234 = vpop.permute.xlu0 %2233
        %2235 = vrot.lane.b32.xlu0 %v480, 64
        %v2236 = vpop.permute.xlu0 %2235
        %2237 = vrot.lane.b32.xlu0 %v481, 64
        %v2238 = vpop.permute.xlu0 %2237
        %2239 = vrot.lane.b32.xlu0 %v482, 64
        %v2240 = vpop.permute.xlu0 %2239
        %2241 = vrot.lane.b32.xlu0 %v483, 64
        %v2242 = vpop.permute.xlu0 %2241
        %2243 = vrot.lane.b32.xlu0 %v484, 64
        %v2244 = vpop.permute.xlu0 %2243
        %v2246 = vsel %vm485, %v2214, 0
        %v2249 = vsel %vm485, %v2216, 0
        %v2252 = vsel %vm485, %v2218, 0
        %v2255 = vsel %vm485, %v2220, 0
        %v2258 = vsel %vm485, %v2222, 0
        %v2261 = vsel %vm485, %v2224, 0
        %v2264 = vsel %vm485, %v2226, 0
        %v2267 = vsel %vm485, %v2228, 0
        %v2270 = vsel %vm485, %v2230, 0
        %v2273 = vsel %vm485, %v2232, 0
        %v2276 = vsel %vm485, %v2234, 0
        %v2279 = vsel %vm485, %v2236, 0
        %v2282 = vsel %vm485, %v2238, 0
        %v2285 = vsel %vm485, %v2240, 0
        %v2288 = vsel %vm485, %v2242, 0
        %v2291 = vsel %vm485, %v2244, 0
        %2293 = vmatprep.subr.bf16.mxu0 0
        %2294 = vmatpush1.bf16.xpose.msra.mxu0 %v2291
        %2295 = vmatprep.subr.bf16.mxu0 0
        %2296 = vmatpush1.bf16.xpose.msra.mxu0 %v2288
        %2297 = vmatprep.subr.bf16.mxu0 0
        %2298 = vmatpush1.bf16.xpose.msra.mxu0 %v2285
        %2299 = vmatprep.subr.bf16.mxu0 0
        %2300 = vmatpush1.bf16.xpose.msra.mxu0 %v2282
        %2301 = vmatprep.subr.bf16.mxu0 0
        %2302 = vmatpush1.bf16.xpose.msra.mxu0 %v2279
        %2303 = vmatprep.subr.bf16.mxu0 0
        %2304 = vmatpush1.bf16.xpose.msra.mxu0 %v2276
        %2305 = vmatprep.subr.bf16.mxu0 0
        %2306 = vmatpush1.bf16.xpose.msra.mxu0 %v2273
        %2307 = vmatprep.subr.bf16.mxu0 0
        %2308 = vmatpush1.bf16.xpose.msra.mxu0 %v2270
        %2309 = vmatprep.subr.bf16.mxu0 0
        %2310 = vmatpush2.bf16.xpose.msra.mxu0 0
        %2311 = vmatprep.subr.bf16.mxu0 0
        %2312 = vmatpush2.bf16.xpose.msra.mxu0 0
        %2313 = vmatprep.subr.bf16.mxu0 0
        %2314 = vmatpush2.bf16.xpose.msra.mxu0 0
        %2315 = vmatprep.subr.bf16.mxu0 0
        %2316 = vmatpush2.bf16.xpose.msra.mxu0 0
        %2317 = vmatprep.subr.bf16.mxu0 0
        %2318 = vmatpush2.bf16.xpose.msra.mxu0 0
        %2319 = vmatprep.subr.bf16.mxu0 0
        %2320 = vmatpush2.bf16.xpose.msra.mxu0 0
        %2321 = vmatprep.subr.bf16.mxu0 0
        %2322 = vmatpush2.bf16.xpose.msra.mxu0 0
        %2323 = vmatprep.subr.bf16.mxu0 0
        %2324 = vmatpush2.bf16.xpose.msra.mxu0 0
        %2325 = vmatprep.mubr.bf16.mxu0 0
        %2326 = vmatmul.mubr.bf16.gmra.mxu0 %v2246
        %v2327 = vpop.f32.mrf.mxu0
        %v2328 = vadd.f32 0.0, %v2327
        %v2329 = vpop.f32.mrf.mxu0
        %v2330 = vpop.f32.mrf.mxu0
        %v2331 = vadd.f32 0.0, %v2330
        %v2332 = vpop.f32.mrf.mxu0
        %2333 = vmatprep.mubr.bf16.mxu0 0
        %2334 = vmatmul.mubr.bf16.gmra.mxu0 %v2249
        %v2335 = vpop.f32.mrf.mxu0
        %v2336 = vadd.f32 0.0, %v2335
        %v2337 = vpop.f32.mrf.mxu0
        %v2338 = vpop.f32.mrf.mxu0
        %v2339 = vadd.f32 0.0, %v2338
        %v2340 = vpop.f32.mrf.mxu0
        %2341 = vmatprep.mubr.bf16.mxu0 0
        %2342 = vmatmul.mubr.bf16.gmra.mxu0 %v2252
        %v2343 = vpop.f32.mrf.mxu0
        %v2344 = vadd.f32 0.0, %v2343
        %v2345 = vpop.f32.mrf.mxu0
        %v2346 = vpop.f32.mrf.mxu0
        %v2347 = vadd.f32 0.0, %v2346
        %v2348 = vpop.f32.mrf.mxu0
        %2349 = vmatprep.mubr.bf16.mxu0 0
        %2350 = vmatmul.mubr.bf16.gmra.mxu0 %v2255
        %v2351 = vpop.f32.mrf.mxu0
        %v2352 = vadd.f32 0.0, %v2351
        %v2353 = vpop.f32.mrf.mxu0
        %v2354 = vpop.f32.mrf.mxu0
        %v2355 = vadd.f32 0.0, %v2354
        %v2356 = vpop.f32.mrf.mxu0
        %2357 = vmatprep.mubr.bf16.mxu0 0
        %2358 = vmatmul.mubr.bf16.gmra.mxu0 %v2258
        %v2359 = vpop.f32.mrf.mxu0
        %v2360 = vadd.f32 0.0, %v2359
        %v2361 = vpop.f32.mrf.mxu0
        %v2362 = vpop.f32.mrf.mxu0
        %v2363 = vadd.f32 0.0, %v2362
        %v2364 = vpop.f32.mrf.mxu0
        %2365 = vmatprep.mubr.bf16.mxu0 0
        %2366 = vmatmul.mubr.bf16.gmra.mxu0 %v2261
        %v2367 = vpop.f32.mrf.mxu0
        %v2368 = vadd.f32 0.0, %v2367
        %v2369 = vpop.f32.mrf.mxu0
        %v2370 = vpop.f32.mrf.mxu0
        %v2371 = vadd.f32 0.0, %v2370
        %v2372 = vpop.f32.mrf.mxu0
        %2373 = vmatprep.mubr.bf16.mxu0 0
        %2374 = vmatmul.mubr.bf16.gmra.mxu0 %v2264
        %v2375 = vpop.f32.mrf.mxu0
        %v2376 = vadd.f32 0.0, %v2375
        %v2377 = vpop.f32.mrf.mxu0
        %v2378 = vpop.f32.mrf.mxu0
        %v2379 = vadd.f32 0.0, %v2378
        %v2380 = vpop.f32.mrf.mxu0
        %2381 = vmatprep.mubr.bf16.mxu0 0
        %2382 = vmatmul.mubr.bf16.gmra.mxu0 %v2267
        %v2383 = vpop.f32.mrf.mxu0
        %v2384 = vadd.f32 0.0, %v2383
        %v2385 = vpop.f32.mrf.mxu0
        %v2386 = vpop.f32.mrf.mxu0
        %v2387 = vadd.f32 0.0, %v2386
        %v2388 = vpop.f32.mrf.mxu0
        %2389 = vdwg.mxu0
        %v2390 = vld [vmem:[#allocation2] sm:$0xff]
        %v2391 = vld [vmem:[#allocation2 + $0x8] sm:$0xff]
        %v2392 = vld [vmem:[#allocation2 + $0x10] sm:$0xff]
        %v2393 = vld [vmem:[#allocation2 + $0x18] sm:$0xff]
        %v2394 = vld [vmem:[#allocation2 + $0x20] sm:$0xff]
        %v2395 = vld [vmem:[#allocation2 + $0x28] sm:$0xff]
        %v2396 = vld [vmem:[#allocation2 + $0x30] sm:$0xff]
        %v2397 = vld [vmem:[#allocation2 + $0x38] sm:$0xff]
        %v2398 = vld [vmem:[#allocation2 + $0x40] sm:$0xff]
        %v2399 = vld [vmem:[#allocation2 + $0x48] sm:$0xff]
        %v2400 = vld [vmem:[#allocation2 + $0x50] sm:$0xff]
        %v2401 = vld [vmem:[#allocation2 + $0x58] sm:$0xff]
        %v2402 = vld [vmem:[#allocation2 + $0x60] sm:$0xff]
        %v2403 = vld [vmem:[#allocation2 + $0x68] sm:$0xff]
        %v2404 = vld [vmem:[#allocation2 + $0x70] sm:$0xff]
        %v2405 = vld [vmem:[#allocation2 + $0x78] sm:$0xff]
        %2406 = vmax.xlane.f32.xlu0 %v2328
        %v2407 = vpop.xlane.xlu0 %2406
        %2408 = vmax.xlane.f32.xlu0 %v2331
        %v2409 = vpop.xlane.xlu0 %2408
        %2410 = vmax.xlane.f32.xlu0 %v2336
        %v2411 = vpop.xlane.xlu0 %2410
        %2412 = vmax.xlane.f32.xlu0 %v2339
        %v2413 = vpop.xlane.xlu0 %2412
        %2414 = vmax.xlane.f32.xlu0 %v2344
        %v2415 = vpop.xlane.xlu0 %2414
        %2416 = vmax.xlane.f32.xlu0 %v2347
        %v2417 = vpop.xlane.xlu0 %2416
        %2418 = vmax.xlane.f32.xlu0 %v2352
        %v2419 = vpop.xlane.xlu0 %2418
        %2420 = vmax.xlane.f32.xlu0 %v2355
        %v2421 = vpop.xlane.xlu0 %2420
        %2422 = vmax.xlane.f32.xlu0 %v2360
        %v2423 = vpop.xlane.xlu0 %2422
        %2424 = vmax.xlane.f32.xlu0 %v2363
        %v2425 = vpop.xlane.xlu0 %2424
        %2426 = vmax.xlane.f32.xlu0 %v2368
        %v2427 = vpop.xlane.xlu0 %2426
        %2428 = vmax.xlane.f32.xlu0 %v2371
        %v2429 = vpop.xlane.xlu0 %2428
        %2430 = vmax.xlane.f32.xlu0 %v2376
        %v2431 = vpop.xlane.xlu0 %2430
        %2432 = vmax.xlane.f32.xlu0 %v2379
        %v2433 = vpop.xlane.xlu0 %2432
        %2434 = vmax.xlane.f32.xlu0 %v2384
        %v2435 = vpop.xlane.xlu0 %2434
        %2436 = vmax.xlane.f32.xlu0 %v2387
        %v2437 = vpop.xlane.xlu0 %2436
        %v2438 = vmax.f32 %v2390, %v2407
        %v2439 = vmax.f32 %v2391, %v2409
        %v2440 = vmax.f32 %v2392, %v2411
        %v2441 = vmax.f32 %v2393, %v2413
        %v2442 = vmax.f32 %v2394, %v2415
        %v2443 = vmax.f32 %v2395, %v2417
        %v2444 = vmax.f32 %v2396, %v2419
        %v2445 = vmax.f32 %v2397, %v2421
        %v2446 = vmax.f32 %v2398, %v2423
        %v2447 = vmax.f32 %v2399, %v2425
        %v2448 = vmax.f32 %v2400, %v2427
        %v2449 = vmax.f32 %v2401, %v2429
        %v2450 = vmax.f32 %v2402, %v2431
        %v2451 = vmax.f32 %v2403, %v2433
        %v2452 = vmax.f32 %v2404, %v2435
        %v2453 = vmax.f32 %v2405, %v2437
        %v2454 = vsub.f32 %v2390, %v2438
        %v2455 = vsub.f32 %v2391, %v2439
        %v2456 = vsub.f32 %v2392, %v2440
        %v2457 = vsub.f32 %v2393, %v2441
        %v2458 = vsub.f32 %v2394, %v2442
        %v2459 = vsub.f32 %v2395, %v2443
        %v2460 = vsub.f32 %v2396, %v2444
        %v2461 = vsub.f32 %v2397, %v2445
        %v2462 = vsub.f32 %v2398, %v2446
        %v2463 = vsub.f32 %v2399, %v2447
        %v2464 = vsub.f32 %v2400, %v2448
        %v2465 = vsub.f32 %v2401, %v2449
        %v2466 = vsub.f32 %v2402, %v2450
        %v2467 = vsub.f32 %v2403, %v2451
        %v2468 = vsub.f32 %v2404, %v2452
        %v2469 = vsub.f32 %v2405, %v2453
        %v2470 = vmul.f32 %v2454, 0.17677669
        %v2471 = vmul.f32 %v2455, 0.17677669
        %v2472 = vmul.f32 %v2456, 0.17677669
        %v2473 = vmul.f32 %v2457, 0.17677669
        %v2474 = vmul.f32 %v2458, 0.17677669
        %v2475 = vmul.f32 %v2459, 0.17677669
        %v2476 = vmul.f32 %v2460, 0.17677669
        %v2477 = vmul.f32 %v2461, 0.17677669
        %v2478 = vmul.f32 %v2462, 0.17677669
        %v2479 = vmul.f32 %v2463, 0.17677669
        %v2480 = vmul.f32 %v2464, 0.17677669
        %v2481 = vmul.f32 %v2465, 0.17677669
        %v2482 = vmul.f32 %v2466, 0.17677669
        %v2483 = vmul.f32 %v2467, 0.17677669
        %v2484 = vmul.f32 %v2468, 0.17677669
        %v2485 = vmul.f32 %v2469, 0.17677669
        %v2486 = vmul.f32 %v2470, 1.442695
        %v2487 = vpow.pop %v2486
        %v2488 = vmul.f32 %v2471, 1.442695
        %v2489 = vpow.pop %v2488
        %v2490 = vmul.f32 %v2472, 1.442695
        %v2491 = vpow.pop %v2490
        %v2492 = vmul.f32 %v2473, 1.442695
        %v2493 = vpow.pop %v2492
        %v2494 = vmul.f32 %v2474, 1.442695
        %v2495 = vpow.pop %v2494
        %v2496 = vmul.f32 %v2475, 1.442695
        %v2497 = vpow.pop %v2496
        %v2498 = vmul.f32 %v2476, 1.442695
        %v2499 = vpow.pop %v2498
        %v2500 = vmul.f32 %v2477, 1.442695
        %v2501 = vpow.pop %v2500
        %v2502 = vmul.f32 %v2478, 1.442695
        %v2503 = vpow.pop %v2502
        %v2504 = vmul.f32 %v2479, 1.442695
        %v2505 = vpow.pop %v2504
        %v2506 = vmul.f32 %v2480, 1.442695
        %v2507 = vpow.pop %v2506
        %v2508 = vmul.f32 %v2481, 1.442695
        %v2509 = vpow.pop %v2508
        %v2510 = vmul.f32 %v2482, 1.442695
        %v2511 = vpow.pop %v2510
        %v2512 = vmul.f32 %v2483, 1.442695
        %v2513 = vpow.pop %v2512
        %v2514 = vmul.f32 %v2484, 1.442695
        %v2515 = vpow.pop %v2514
        %v2516 = vmul.f32 %v2485, 1.442695
        %v2517 = vpow.pop %v2516
        %2519 = vset.pattern.permute.xlu0 2
        %2520 = vperm.xlu0 %2519, %v2438
        %v2521 = vpop.permute.xlu0 %2520
        %2524 = vset.pattern.permute.xlu0 2
        %2525 = vperm.xlu0 %2524, %v2439
        %v2526 = vpop.permute.xlu0 %2525
        %2529 = vset.pattern.permute.xlu0 2
        %2530 = vperm.xlu0 %2529, %v2440
        %v2531 = vpop.permute.xlu0 %2530
        %2534 = vset.pattern.permute.xlu0 2
        %2535 = vperm.xlu0 %2534, %v2441
        %v2536 = vpop.permute.xlu0 %2535
        %2539 = vset.pattern.permute.xlu0 2
        %2540 = vperm.xlu0 %2539, %v2442
        %v2541 = vpop.permute.xlu0 %2540
        %2544 = vset.pattern.permute.xlu0 2
        %2545 = vperm.xlu0 %2544, %v2443
        %v2546 = vpop.permute.xlu0 %2545
        %2549 = vset.pattern.permute.xlu0 2
        %2550 = vperm.xlu0 %2549, %v2444
        %v2551 = vpop.permute.xlu0 %2550
        %2554 = vset.pattern.permute.xlu0 2
        %2555 = vperm.xlu0 %2554, %v2445
        %v2556 = vpop.permute.xlu0 %2555
        %2559 = vset.pattern.permute.xlu0 2
        %2560 = vperm.xlu0 %2559, %v2446
        %v2561 = vpop.permute.xlu0 %2560
        %2564 = vset.pattern.permute.xlu0 2
        %2565 = vperm.xlu0 %2564, %v2447
        %v2566 = vpop.permute.xlu0 %2565
        %2569 = vset.pattern.permute.xlu0 2
        %2570 = vperm.xlu0 %2569, %v2448
        %v2571 = vpop.permute.xlu0 %2570
        %2574 = vset.pattern.permute.xlu0 2
        %2575 = vperm.xlu0 %2574, %v2449
        %v2576 = vpop.permute.xlu0 %2575
        %2579 = vset.pattern.permute.xlu0 2
        %2580 = vperm.xlu0 %2579, %v2450
        %v2581 = vpop.permute.xlu0 %2580
        %2584 = vset.pattern.permute.xlu0 2
        %2585 = vperm.xlu0 %2584, %v2451
        %v2586 = vpop.permute.xlu0 %2585
        %2589 = vset.pattern.permute.xlu0 2
        %2590 = vperm.xlu0 %2589, %v2452
        %v2591 = vpop.permute.xlu0 %2590
        %2594 = vset.pattern.permute.xlu0 2
        %2595 = vperm.xlu0 %2594, %v2453
        %v2596 = vpop.permute.xlu0 %2595
        %v2598 = vsub.f32 %v2328, %v2521
        %v2599 = vsub.f32 %v2331, %v2526
        %v2600 = vsub.f32 %v2336, %v2531
        %v2601 = vsub.f32 %v2339, %v2536
        %v2602 = vsub.f32 %v2344, %v2541
        %v2603 = vsub.f32 %v2347, %v2546
        %v2604 = vsub.f32 %v2352, %v2551
        %v2605 = vsub.f32 %v2355, %v2556
        %v2606 = vsub.f32 %v2360, %v2561
        %v2607 = vsub.f32 %v2363, %v2566
        %v2608 = vsub.f32 %v2368, %v2571
        %v2609 = vsub.f32 %v2371, %v2576
        %v2610 = vsub.f32 %v2376, %v2581
        %v2611 = vsub.f32 %v2379, %v2586
        %v2612 = vsub.f32 %v2384, %v2591
        %v2613 = vsub.f32 %v2387, %v2596
        %v2614 = vmul.f32 %v2598, 0.17677669
        %v2615 = vmul.f32 %v2599, 0.17677669
        %v2616 = vmul.f32 %v2600, 0.17677669
        %v2617 = vmul.f32 %v2601, 0.17677669
        %v2618 = vmul.f32 %v2602, 0.17677669
        %v2619 = vmul.f32 %v2603, 0.17677669
        %v2620 = vmul.f32 %v2604, 0.17677669
        %v2621 = vmul.f32 %v2605, 0.17677669
        %v2622 = vmul.f32 %v2606, 0.17677669
        %v2623 = vmul.f32 %v2607, 0.17677669
        %v2624 = vmul.f32 %v2608, 0.17677669
        %v2625 = vmul.f32 %v2609, 0.17677669
        %v2626 = vmul.f32 %v2610, 0.17677669
        %v2627 = vmul.f32 %v2611, 0.17677669
        %v2628 = vmul.f32 %v2612, 0.17677669
        %v2629 = vmul.f32 %v2613, 0.17677669
        %v2630 = vmul.f32 %v2614, 1.442695
        %v2631 = vpow.pop %v2630
        %v2632 = vmul.f32 %v2615, 1.442695
        %v2633 = vpow.pop %v2632
        %v2634 = vmul.f32 %v2616, 1.442695
        %v2635 = vpow.pop %v2634
        %v2636 = vmul.f32 %v2617, 1.442695
        %v2637 = vpow.pop %v2636
        %v2638 = vmul.f32 %v2618, 1.442695
        %v2639 = vpow.pop %v2638
        %v2640 = vmul.f32 %v2619, 1.442695
        %v2641 = vpow.pop %v2640
        %v2642 = vmul.f32 %v2620, 1.442695
        %v2643 = vpow.pop %v2642
        %v2644 = vmul.f32 %v2621, 1.442695
        %v2645 = vpow.pop %v2644
        %v2646 = vmul.f32 %v2622, 1.442695
        %v2647 = vpow.pop %v2646
        %v2648 = vmul.f32 %v2623, 1.442695
        %v2649 = vpow.pop %v2648
        %v2650 = vmul.f32 %v2624, 1.442695
        %v2651 = vpow.pop %v2650
        %v2652 = vmul.f32 %v2625, 1.442695
        %v2653 = vpow.pop %v2652
        %v2654 = vmul.f32 %v2626, 1.442695
        %v2655 = vpow.pop %v2654
        %v2656 = vmul.f32 %v2627, 1.442695
        %v2657 = vpow.pop %v2656
        %v2658 = vmul.f32 %v2628, 1.442695
        %v2659 = vpow.pop %v2658
        %v2660 = vmul.f32 %v2629, 1.442695
        %v2661 = vpow.pop %v2660
        %v2662 = vld [vmem:[#allocation3] sm:$0xff]
        %v2663 = vld [vmem:[#allocation3 + $0x8] sm:$0xff]
        %v2664 = vld [vmem:[#allocation3 + $0x10] sm:$0xff]
        %v2665 = vld [vmem:[#allocation3 + $0x18] sm:$0xff]
        %v2666 = vld [vmem:[#allocation3 + $0x20] sm:$0xff]
        %v2667 = vld [vmem:[#allocation3 + $0x28] sm:$0xff]
        %v2668 = vld [vmem:[#allocation3 + $0x30] sm:$0xff]
        %v2669 = vld [vmem:[#allocation3 + $0x38] sm:$0xff]
        %v2670 = vld [vmem:[#allocation3 + $0x40] sm:$0xff]
        %v2671 = vld [vmem:[#allocation3 + $0x48] sm:$0xff]
        %v2672 = vld [vmem:[#allocation3 + $0x50] sm:$0xff]
        %v2673 = vld [vmem:[#allocation3 + $0x58] sm:$0xff]
        %v2674 = vld [vmem:[#allocation3 + $0x60] sm:$0xff]
        %v2675 = vld [vmem:[#allocation3 + $0x68] sm:$0xff]
        %v2676 = vld [vmem:[#allocation3 + $0x70] sm:$0xff]
        %v2677 = vld [vmem:[#allocation3 + $0x78] sm:$0xff]
        %v2678 = vmul.f32 %v2487, %v2662
        %v2679 = vmul.f32 %v2489, %v2663
        %v2680 = vmul.f32 %v2491, %v2664
        %v2681 = vmul.f32 %v2493, %v2665
        %v2682 = vmul.f32 %v2495, %v2666
        %v2683 = vmul.f32 %v2497, %v2667
        %v2684 = vmul.f32 %v2499, %v2668
        %v2685 = vmul.f32 %v2501, %v2669
        %v2686 = vmul.f32 %v2503, %v2670
        %v2687 = vmul.f32 %v2505, %v2671
        %v2688 = vmul.f32 %v2507, %v2672
        %v2689 = vmul.f32 %v2509, %v2673
        %v2690 = vmul.f32 %v2511, %v2674
        %v2691 = vmul.f32 %v2513, %v2675
        %v2692 = vmul.f32 %v2515, %v2676
        %v2693 = vmul.f32 %v2517, %v2677
        %2694 = vadd.xlane.f32.xlu0 %v2631
        %v2695 = vpop.xlane.xlu0 %2694
        %2696 = vadd.xlane.f32.xlu0 %v2633
        %v2697 = vpop.xlane.xlu0 %2696
        %2698 = vadd.xlane.f32.xlu0 %v2635
        %v2699 = vpop.xlane.xlu0 %2698
        %2700 = vadd.xlane.f32.xlu0 %v2637
        %v2701 = vpop.xlane.xlu0 %2700
        %2702 = vadd.xlane.f32.xlu0 %v2639
        %v2703 = vpop.xlane.xlu0 %2702
        %2704 = vadd.xlane.f32.xlu0 %v2641
        %v2705 = vpop.xlane.xlu0 %2704
        %2706 = vadd.xlane.f32.xlu0 %v2643
        %v2707 = vpop.xlane.xlu0 %2706
        %2708 = vadd.xlane.f32.xlu0 %v2645
        %v2709 = vpop.xlane.xlu0 %2708
        %2710 = vadd.xlane.f32.xlu0 %v2647
        %v2711 = vpop.xlane.xlu0 %2710
        %2712 = vadd.xlane.f32.xlu0 %v2649
        %v2713 = vpop.xlane.xlu0 %2712
        %2714 = vadd.xlane.f32.xlu0 %v2651
        %v2715 = vpop.xlane.xlu0 %2714
        %2716 = vadd.xlane.f32.xlu0 %v2653
        %v2717 = vpop.xlane.xlu0 %2716
        %2718 = vadd.xlane.f32.xlu0 %v2655
        %v2719 = vpop.xlane.xlu0 %2718
        %2720 = vadd.xlane.f32.xlu0 %v2657
        %v2721 = vpop.xlane.xlu0 %2720
        %2722 = vadd.xlane.f32.xlu0 %v2659
        %v2723 = vpop.xlane.xlu0 %2722
        %2724 = vadd.xlane.f32.xlu0 %v2661
        %v2725 = vpop.xlane.xlu0 %2724
        %v2726 = vadd.f32 %v2678, %v2695
        %v2727 = vadd.f32 %v2679, %v2697
        %v2728 = vadd.f32 %v2680, %v2699
        %v2729 = vadd.f32 %v2681, %v2701
        %v2730 = vadd.f32 %v2682, %v2703
        %v2731 = vadd.f32 %v2683, %v2705
        %v2732 = vadd.f32 %v2684, %v2707
        %v2733 = vadd.f32 %v2685, %v2709
        %v2734 = vadd.f32 %v2686, %v2711
        %v2735 = vadd.f32 %v2687, %v2713
        %v2736 = vadd.f32 %v2688, %v2715
        %v2737 = vadd.f32 %v2689, %v2717
        %v2738 = vadd.f32 %v2690, %v2719
        %v2739 = vadd.f32 %v2691, %v2721
        %v2740 = vadd.f32 %v2692, %v2723
        %v2741 = vadd.f32 %v2693, %v2725
        %vm2742 = vcmask 23568
        %2743 = vst.msk [vmem:[#allocation3] sm:$0xff] %vm2742, %v2726
        %2744 = vst.msk [vmem:[#allocation3 + $0x8] sm:$0xff] %vm2742, %v2727
        %2745 = vst.msk [vmem:[#allocation3 + $0x10] sm:$0xff] %vm2742, %v2728
        %2746 = vst.msk [vmem:[#allocation3 + $0x18] sm:$0xff] %vm2742, %v2729
        %2747 = vst.msk [vmem:[#allocation3 + $0x20] sm:$0xff] %vm2742, %v2730
        %2748 = vst.msk [vmem:[#allocation3 + $0x28] sm:$0xff] %vm2742, %v2731
        %2749 = vst.msk [vmem:[#allocation3 + $0x30] sm:$0xff] %vm2742, %v2732
        %2750 = vst.msk [vmem:[#allocation3 + $0x38] sm:$0xff] %vm2742, %v2733
        %2751 = vst.msk [vmem:[#allocation3 + $0x40] sm:$0xff] %vm2742, %v2734
        %2752 = vst.msk [vmem:[#allocation3 + $0x48] sm:$0xff] %vm2742, %v2735
        %2753 = vst.msk [vmem:[#allocation3 + $0x50] sm:$0xff] %vm2742, %v2736
        %2754 = vst.msk [vmem:[#allocation3 + $0x58] sm:$0xff] %vm2742, %v2737
        %2755 = vst.msk [vmem:[#allocation3 + $0x60] sm:$0xff] %vm2742, %v2738
        %2756 = vst.msk [vmem:[#allocation3 + $0x68] sm:$0xff] %vm2742, %v2739
        %2757 = vst.msk [vmem:[#allocation3 + $0x70] sm:$0xff] %vm2742, %v2740
        %2758 = vst.msk [vmem:[#allocation3 + $0x78] sm:$0xff] %vm2742, %v2741
        %v2759 = vld [vmem:[#allocation4] sm:$0xff]
        %v2760 = vld [vmem:[#allocation4 + $0x8] sm:$0xff]
        %v2761 = vld [vmem:[#allocation4 + $0x10] sm:$0xff]
        %v2762 = vld [vmem:[#allocation4 + $0x18] sm:$0xff]
        %v2763 = vld [vmem:[#allocation4 + $0x20] sm:$0xff]
        %v2764 = vld [vmem:[#allocation4 + $0x28] sm:$0xff]
        %v2765 = vld [vmem:[#allocation4 + $0x30] sm:$0xff]
        %v2766 = vld [vmem:[#allocation4 + $0x38] sm:$0xff]
        %v2767 = vld [vmem:[#allocation4 + $0x40] sm:$0xff]
        %v2768 = vld [vmem:[#allocation4 + $0x48] sm:$0xff]
        %v2769 = vld [vmem:[#allocation4 + $0x50] sm:$0xff]
        %v2770 = vld [vmem:[#allocation4 + $0x58] sm:$0xff]
        %v2771 = vld [vmem:[#allocation4 + $0x60] sm:$0xff]
        %v2772 = vld [vmem:[#allocation4 + $0x68] sm:$0xff]
        %v2773 = vld [vmem:[#allocation4 + $0x70] sm:$0xff]
        %v2774 = vld [vmem:[#allocation4 + $0x78] sm:$0xff]
        %2776 = vset.pattern.permute.xlu0 2
        %2777 = vperm.xlu0 %2776, %v2487
        %v2778 = vpop.permute.xlu0 %2777
        %2781 = vset.pattern.permute.xlu0 2
        %2782 = vperm.xlu0 %2781, %v2489
        %v2783 = vpop.permute.xlu0 %2782
        %2786 = vset.pattern.permute.xlu0 2
        %2787 = vperm.xlu0 %2786, %v2491
        %v2788 = vpop.permute.xlu0 %2787
        %2791 = vset.pattern.permute.xlu0 2
        %2792 = vperm.xlu0 %2791, %v2493
        %v2793 = vpop.permute.xlu0 %2792
        %2796 = vset.pattern.permute.xlu0 2
        %2797 = vperm.xlu0 %2796, %v2495
        %v2798 = vpop.permute.xlu0 %2797
        %2801 = vset.pattern.permute.xlu0 2
        %2802 = vperm.xlu0 %2801, %v2497
        %v2803 = vpop.permute.xlu0 %2802
        %2806 = vset.pattern.permute.xlu0 2
        %2807 = vperm.xlu0 %2806, %v2499
        %v2808 = vpop.permute.xlu0 %2807
        %2811 = vset.pattern.permute.xlu0 2
        %2812 = vperm.xlu0 %2811, %v2501
        %v2813 = vpop.permute.xlu0 %2812
        %2816 = vset.pattern.permute.xlu0 2
        %2817 = vperm.xlu0 %2816, %v2503
        %v2818 = vpop.permute.xlu0 %2817
        %2821 = vset.pattern.permute.xlu0 2
        %2822 = vperm.xlu0 %2821, %v2505
        %v2823 = vpop.permute.xlu0 %2822
        %2826 = vset.pattern.permute.xlu0 2
        %2827 = vperm.xlu0 %2826, %v2507
        %v2828 = vpop.permute.xlu0 %2827
        %2831 = vset.pattern.permute.xlu0 2
        %2832 = vperm.xlu0 %2831, %v2509
        %v2833 = vpop.permute.xlu0 %2832
        %2836 = vset.pattern.permute.xlu0 2
        %2837 = vperm.xlu0 %2836, %v2511
        %v2838 = vpop.permute.xlu0 %2837
        %2841 = vset.pattern.permute.xlu0 2
        %2842 = vperm.xlu0 %2841, %v2513
        %v2843 = vpop.permute.xlu0 %2842
        %2846 = vset.pattern.permute.xlu0 2
        %2847 = vperm.xlu0 %2846, %v2515
        %v2848 = vpop.permute.xlu0 %2847
        %2851 = vset.pattern.permute.xlu0 2
        %2852 = vperm.xlu0 %2851, %v2517
        %v2853 = vpop.permute.xlu0 %2852
        %v2855 = vmul.f32 %v2778, %v2759
        %v2856 = vmul.f32 %v2783, %v2760
        %v2857 = vmul.f32 %v2788, %v2761
        %v2858 = vmul.f32 %v2793, %v2762
        %v2859 = vmul.f32 %v2798, %v2763
        %v2860 = vmul.f32 %v2803, %v2764
        %v2861 = vmul.f32 %v2808, %v2765
        %v2862 = vmul.f32 %v2813, %v2766
        %v2863 = vmul.f32 %v2818, %v2767
        %v2864 = vmul.f32 %v2823, %v2768
        %v2865 = vmul.f32 %v2828, %v2769
        %v2866 = vmul.f32 %v2833, %v2770
        %v2867 = vmul.f32 %v2838, %v2771
        %v2868 = vmul.f32 %v2843, %v2772
        %v2869 = vmul.f32 %v2848, %v2773
        %v2870 = vmul.f32 %v2853, %v2774
        %v2871 = vpack.c.bf16 %v2633, %v2631
        %v2872 = vpack.c.bf16 %v2637, %v2635
        %v2873 = vpack.c.bf16 %v2641, %v2639
        %v2874 = vpack.c.bf16 %v2645, %v2643
        %v2875 = vpack.c.bf16 %v2649, %v2647
        %v2876 = vpack.c.bf16 %v2653, %v2651
        %v2877 = vpack.c.bf16 %v2657, %v2655
        %v2878 = vpack.c.bf16 %v2661, %v2659
        %2879 = vrot.lane.b32.xlu0 %v1152, 64
        %v2880 = vpop.permute.xlu0 %2879
        %2881 = vrot.lane.b32.xlu0 %v1153, 64
        %v2882 = vpop.permute.xlu0 %2881
        %2883 = vrot.lane.b32.xlu0 %v1154, 64
        %v2884 = vpop.permute.xlu0 %2883
        %2885 = vrot.lane.b32.xlu0 %v1155, 64
        %v2886 = vpop.permute.xlu0 %2885
        %2887 = vrot.lane.b32.xlu0 %v1156, 64
        %v2888 = vpop.permute.xlu0 %2887
        %2889 = vrot.lane.b32.xlu0 %v1157, 64
        %v2890 = vpop.permute.xlu0 %2889
        %2891 = vrot.lane.b32.xlu0 %v1158, 64
        %v2892 = vpop.permute.xlu0 %2891
        %2893 = vrot.lane.b32.xlu0 %v1159, 64
        %v2894 = vpop.permute.xlu0 %2893
        %2903 = vmatprep.subr.bf16.mxu0 0
        %2904 = vmatpush1.bf16.msra.mxu0 %v2894
        %2905 = vmatprep.subr.bf16.mxu0 0
        %2906 = vmatpush1.bf16.msra.mxu0 %v2892
        %2907 = vmatprep.subr.bf16.mxu0 0
        %2908 = vmatpush1.bf16.msra.mxu0 %v2890
        %2909 = vmatprep.subr.bf16.mxu0 0
        %2910 = vmatpush1.bf16.msra.mxu0 %v2888
        %2911 = vmatprep.subr.bf16.mxu0 0
        %2912 = vmatpush1.bf16.msra.mxu0 %v2886
        %2913 = vmatprep.subr.bf16.mxu0 0
        %2914 = vmatpush1.bf16.msra.mxu0 %v2884
        %2915 = vmatprep.subr.bf16.mxu0 0
        %2916 = vmatpush1.bf16.msra.mxu0 %v2882
        %2917 = vmatprep.subr.bf16.mxu0 0
        %2918 = vmatpush1.bf16.msra.mxu0 %v2880
        %2919 = vmatprep.subr.bf16.mxu0 0
        %2920 = vmatpush2.bf16.msra.mxu0 0
        %2921 = vmatprep.subr.bf16.mxu0 0
        %2922 = vmatpush2.bf16.msra.mxu0 0
        %2923 = vmatprep.subr.bf16.mxu0 0
        %2924 = vmatpush2.bf16.msra.mxu0 0
        %2925 = vmatprep.subr.bf16.mxu0 0
        %2926 = vmatpush2.bf16.msra.mxu0 0
        %2927 = vmatprep.subr.bf16.mxu0 0
        %2928 = vmatpush2.bf16.msra.mxu0 0
        %2929 = vmatprep.subr.bf16.mxu0 0
        %2930 = vmatpush2.bf16.msra.mxu0 0
        %2931 = vmatprep.subr.bf16.mxu0 0
        %2932 = vmatpush2.bf16.msra.mxu0 0
        %2933 = vmatprep.subr.bf16.mxu0 0
        %2934 = vmatpush2.bf16.msra.mxu0 0
        %2935 = vmatprep.mubr.bf16.mxu0 0
        %2936 = vmatmul.mubr.bf16.gmra.mxu0 %v2871
        %v2937 = vpop.f32.mrf.mxu0
        %v2938 = vadd.f32 0.0, %v2937
        %v2939 = vpop.f32.mrf.mxu0
        %v2940 = vpop.f32.mrf.mxu0
        %v2941 = vadd.f32 0.0, %v2940
        %v2942 = vpop.f32.mrf.mxu0
        %2943 = vmatprep.mubr.bf16.mxu0 0
        %2944 = vmatmul.mubr.bf16.gmra.mxu0 %v2872
        %v2945 = vpop.f32.mrf.mxu0
        %v2946 = vadd.f32 0.0, %v2945
        %v2947 = vpop.f32.mrf.mxu0
        %v2948 = vpop.f32.mrf.mxu0
        %v2949 = vadd.f32 0.0, %v2948
        %v2950 = vpop.f32.mrf.mxu0
        %2951 = vmatprep.mubr.bf16.mxu0 0
        %2952 = vmatmul.mubr.bf16.gmra.mxu0 %v2873
        %v2953 = vpop.f32.mrf.mxu0
        %v2954 = vadd.f32 0.0, %v2953
        %v2955 = vpop.f32.mrf.mxu0
        %v2956 = vpop.f32.mrf.mxu0
        %v2957 = vadd.f32 0.0, %v2956
        %v2958 = vpop.f32.mrf.mxu0
        %2959 = vmatprep.mubr.bf16.mxu0 0
        %2960 = vmatmul.mubr.bf16.gmra.mxu0 %v2874
        %v2961 = vpop.f32.mrf.mxu0
        %v2962 = vadd.f32 0.0, %v2961
        %v2963 = vpop.f32.mrf.mxu0
        %v2964 = vpop.f32.mrf.mxu0
        %v2965 = vadd.f32 0.0, %v2964
        %v2966 = vpop.f32.mrf.mxu0
        %2967 = vmatprep.mubr.bf16.mxu0 0
        %2968 = vmatmul.mubr.bf16.gmra.mxu0 %v2875
        %v2969 = vpop.f32.mrf.mxu0
        %v2970 = vadd.f32 0.0, %v2969
        %v2971 = vpop.f32.mrf.mxu0
        %v2972 = vpop.f32.mrf.mxu0
        %v2973 = vadd.f32 0.0, %v2972
        %v2974 = vpop.f32.mrf.mxu0
        %2975 = vmatprep.mubr.bf16.mxu0 0
        %2976 = vmatmul.mubr.bf16.gmra.mxu0 %v2876
        %v2977 = vpop.f32.mrf.mxu0
        %v2978 = vadd.f32 0.0, %v2977
        %v2979 = vpop.f32.mrf.mxu0
        %v2980 = vpop.f32.mrf.mxu0
        %v2981 = vadd.f32 0.0, %v2980
        %v2982 = vpop.f32.mrf.mxu0
        %2983 = vmatprep.mubr.bf16.mxu0 0
        %2984 = vmatmul.mubr.bf16.gmra.mxu0 %v2877
        %v2985 = vpop.f32.mrf.mxu0
        %v2986 = vadd.f32 0.0, %v2985
        %v2987 = vpop.f32.mrf.mxu0
        %v2988 = vpop.f32.mrf.mxu0
        %v2989 = vadd.f32 0.0, %v2988
        %v2990 = vpop.f32.mrf.mxu0
        %2991 = vmatprep.mubr.bf16.mxu0 0
        %2992 = vmatmul.mubr.bf16.gmra.mxu0 %v2878
        %v2993 = vpop.f32.mrf.mxu0
        %v2994 = vadd.f32 0.0, %v2993
        %v2995 = vpop.f32.mrf.mxu0
        %v2996 = vpop.f32.mrf.mxu0
        %v2997 = vadd.f32 0.0, %v2996
        %v2998 = vpop.f32.mrf.mxu0
        %2999 = vdwg.mxu0
        %3016 = vrot.lane.b32.xlu0 %v2938, 64
        %v3017 = vpop.permute.xlu0 %3016
        %3018 = vrot.lane.b32.xlu0 %v2941, 64
        %v3019 = vpop.permute.xlu0 %3018
        %3020 = vrot.lane.b32.xlu0 %v2946, 64
        %v3021 = vpop.permute.xlu0 %3020
        %3022 = vrot.lane.b32.xlu0 %v2949, 64
        %v3023 = vpop.permute.xlu0 %3022
        %3024 = vrot.lane.b32.xlu0 %v2954, 64
        %v3025 = vpop.permute.xlu0 %3024
        %3026 = vrot.lane.b32.xlu0 %v2957, 64
        %v3027 = vpop.permute.xlu0 %3026
        %3028 = vrot.lane.b32.xlu0 %v2962, 64
        %v3029 = vpop.permute.xlu0 %3028
        %3030 = vrot.lane.b32.xlu0 %v2965, 64
        %v3031 = vpop.permute.xlu0 %3030
        %3032 = vrot.lane.b32.xlu0 %v2970, 64
        %v3033 = vpop.permute.xlu0 %3032
        %3034 = vrot.lane.b32.xlu0 %v2973, 64
        %v3035 = vpop.permute.xlu0 %3034
        %3036 = vrot.lane.b32.xlu0 %v2978, 64
        %v3037 = vpop.permute.xlu0 %3036
        %3038 = vrot.lane.b32.xlu0 %v2981, 64
        %v3039 = vpop.permute.xlu0 %3038
        %3040 = vrot.lane.b32.xlu0 %v2986, 64
        %v3041 = vpop.permute.xlu0 %3040
        %3042 = vrot.lane.b32.xlu0 %v2989, 64
        %v3043 = vpop.permute.xlu0 %3042
        %3044 = vrot.lane.b32.xlu0 %v2994, 64
        %v3045 = vpop.permute.xlu0 %3044
        %3046 = vrot.lane.b32.xlu0 %v2997, 64
        %v3047 = vpop.permute.xlu0 %3046
        %v3064 = vadd.f32 %v2855, %v3017
        %v3065 = vadd.f32 %v2856, %v3019
        %v3066 = vadd.f32 %v2857, %v3021
        %v3067 = vadd.f32 %v2858, %v3023
        %v3068 = vadd.f32 %v2859, %v3025
        %v3069 = vadd.f32 %v2860, %v3027
        %v3070 = vadd.f32 %v2861, %v3029
        %v3071 = vadd.f32 %v2862, %v3031
        %v3072 = vadd.f32 %v2863, %v3033
        %v3073 = vadd.f32 %v2864, %v3035
        %v3074 = vadd.f32 %v2865, %v3037
        %v3075 = vadd.f32 %v2866, %v3039
        %v3076 = vadd.f32 %v2867, %v3041
        %v3077 = vadd.f32 %v2868, %v3043
        %v3078 = vadd.f32 %v2869, %v3045
        %v3079 = vadd.f32 %v2870, %v3047
        %vm3080 = vcmask 785920
        %3081 = vst.msk [vmem:[#allocation4] sm:$0xff] %vm3080, %v3064
        %3082 = vst.msk [vmem:[#allocation4 + $0x8] sm:$0xff] %vm3080, %v3065
        %3083 = vst.msk [vmem:[#allocation4 + $0x10] sm:$0xff] %vm3080, %v3066
        %3084 = vst.msk [vmem:[#allocation4 + $0x18] sm:$0xff] %vm3080, %v3067
        %3085 = vst.msk [vmem:[#allocation4 + $0x20] sm:$0xff] %vm3080, %v3068
        %3086 = vst.msk [vmem:[#allocation4 + $0x28] sm:$0xff] %vm3080, %v3069
        %3087 = vst.msk [vmem:[#allocation4 + $0x30] sm:$0xff] %vm3080, %v3070
        %3088 = vst.msk [vmem:[#allocation4 + $0x38] sm:$0xff] %vm3080, %v3071
        %3089 = vst.msk [vmem:[#allocation4 + $0x40] sm:$0xff] %vm3080, %v3072
        %3090 = vst.msk [vmem:[#allocation4 + $0x48] sm:$0xff] %vm3080, %v3073
        %3091 = vst.msk [vmem:[#allocation4 + $0x50] sm:$0xff] %vm3080, %v3074
        %3092 = vst.msk [vmem:[#allocation4 + $0x58] sm:$0xff] %vm3080, %v3075
        %3093 = vst.msk [vmem:[#allocation4 + $0x60] sm:$0xff] %vm3080, %v3076
        %3094 = vst.msk [vmem:[#allocation4 + $0x68] sm:$0xff] %vm3080, %v3077
        %3095 = vst.msk [vmem:[#allocation4 + $0x70] sm:$0xff] %vm3080, %v3078
        %3096 = vst.msk [vmem:[#allocation4 + $0x78] sm:$0xff] %vm3080, %v3079
        %3097 = vst.msk [vmem:[#allocation2] sm:$0xff] %vm2742, %v2438
        %3098 = vst.msk [vmem:[#allocation2 + $0x8] sm:$0xff] %vm2742, %v2439
        %3099 = vst.msk [vmem:[#allocation2 + $0x10] sm:$0xff] %vm2742, %v2440
        %3100 = vst.msk [vmem:[#allocation2 + $0x18] sm:$0xff] %vm2742, %v2441
        %3101 = vst.msk [vmem:[#allocation2 + $0x20] sm:$0xff] %vm2742, %v2442
        %3102 = vst.msk [vmem:[#allocation2 + $0x28] sm:$0xff] %vm2742, %v2443
        %3103 = vst.msk [vmem:[#allocation2 + $0x30] sm:$0xff] %vm2742, %v2444
        %3104 = vst.msk [vmem:[#allocation2 + $0x38] sm:$0xff] %vm2742, %v2445
        %3105 = vst.msk [vmem:[#allocation2 + $0x40] sm:$0xff] %vm2742, %v2446
        %3106 = vst.msk [vmem:[#allocation2 + $0x48] sm:$0xff] %vm2742, %v2447
        %3107 = vst.msk [vmem:[#allocation2 + $0x50] sm:$0xff] %vm2742, %v2448
        %3108 = vst.msk [vmem:[#allocation2 + $0x58] sm:$0xff] %vm2742, %v2449
        %3109 = vst.msk [vmem:[#allocation2 + $0x60] sm:$0xff] %vm2742, %v2450
        %3110 = vst.msk [vmem:[#allocation2 + $0x68] sm:$0xff] %vm2742, %v2451
        %3111 = vst.msk [vmem:[#allocation2 + $0x70] sm:$0xff] %vm2742, %v2452
        %3112 = vst.msk [vmem:[#allocation2 + $0x78] sm:$0xff] %vm2742, %v2453
        %3113 = vrot.lane.b32.xlu0 %v437, 32
        %v3114 = vpop.permute.xlu0 %3113
        %3115 = vrot.lane.b32.xlu0 %v438, 32
        %v3116 = vpop.permute.xlu0 %3115
        %3117 = vrot.lane.b32.xlu0 %v439, 32
        %v3118 = vpop.permute.xlu0 %3117
        %3119 = vrot.lane.b32.xlu0 %v440, 32
        %v3120 = vpop.permute.xlu0 %3119
        %3121 = vrot.lane.b32.xlu0 %v441, 32
        %v3122 = vpop.permute.xlu0 %3121
        %3123 = vrot.lane.b32.xlu0 %v442, 32
        %v3124 = vpop.permute.xlu0 %3123
        %3125 = vrot.lane.b32.xlu0 %v443, 32
        %v3126 = vpop.permute.xlu0 %3125
        %3127 = vrot.lane.b32.xlu0 %v444, 32
        %v3128 = vpop.permute.xlu0 %3127
        %3129 = vrot.lane.b32.xlu0 %v477, 32
        %v3130 = vpop.permute.xlu0 %3129
        %3131 = vrot.lane.b32.xlu0 %v478, 32
        %v3132 = vpop.permute.xlu0 %3131
        %3133 = vrot.lane.b32.xlu0 %v479, 32
        %v3134 = vpop.permute.xlu0 %3133
        %3135 = vrot.lane.b32.xlu0 %v480, 32
        %v3136 = vpop.permute.xlu0 %3135
        %3137 = vrot.lane.b32.xlu0 %v481, 32
        %v3138 = vpop.permute.xlu0 %3137
        %3139 = vrot.lane.b32.xlu0 %v482, 32
        %v3140 = vpop.permute.xlu0 %3139
        %3141 = vrot.lane.b32.xlu0 %v483, 32
        %v3142 = vpop.permute.xlu0 %3141
        %3143 = vrot.lane.b32.xlu0 %v484, 32
        %v3144 = vpop.permute.xlu0 %3143
        %v3146 = vsel %vm485, %v3114, 0
        %v3149 = vsel %vm485, %v3116, 0
        %v3152 = vsel %vm485, %v3118, 0
        %v3155 = vsel %vm485, %v3120, 0
        %v3158 = vsel %vm485, %v3122, 0
        %v3161 = vsel %vm485, %v3124, 0
        %v3164 = vsel %vm485, %v3126, 0
        %v3167 = vsel %vm485, %v3128, 0
        %v3170 = vsel %vm485, %v3130, 0
        %v3173 = vsel %vm485, %v3132, 0
        %v3176 = vsel %vm485, %v3134, 0
        %v3179 = vsel %vm485, %v3136, 0
        %v3182 = vsel %vm485, %v3138, 0
        %v3185 = vsel %vm485, %v3140, 0
        %v3188 = vsel %vm485, %v3142, 0
        %v3191 = vsel %vm485, %v3144, 0
        %3193 = vmatprep.subr.bf16.mxu0 0
        %3194 = vmatpush1.bf16.xpose.msra.mxu0 %v3191
        %3195 = vmatprep.subr.bf16.mxu0 0
        %3196 = vmatpush1.bf16.xpose.msra.mxu0 %v3188
        %3197 = vmatprep.subr.bf16.mxu0 0
        %3198 = vmatpush1.bf16.xpose.msra.mxu0 %v3185
        %3199 = vmatprep.subr.bf16.mxu0 0
        %3200 = vmatpush1.bf16.xpose.msra.mxu0 %v3182
        %3201 = vmatprep.subr.bf16.mxu0 0
        %3202 = vmatpush1.bf16.xpose.msra.mxu0 %v3179
        %3203 = vmatprep.subr.bf16.mxu0 0
        %3204 = vmatpush1.bf16.xpose.msra.mxu0 %v3176
        %3205 = vmatprep.subr.bf16.mxu0 0
        %3206 = vmatpush1.bf16.xpose.msra.mxu0 %v3173
        %3207 = vmatprep.subr.bf16.mxu0 0
        %3208 = vmatpush1.bf16.xpose.msra.mxu0 %v3170
        %3209 = vmatprep.subr.bf16.mxu0 0
        %3210 = vmatpush2.bf16.xpose.msra.mxu0 0
        %3211 = vmatprep.subr.bf16.mxu0 0
        %3212 = vmatpush2.bf16.xpose.msra.mxu0 0
        %3213 = vmatprep.subr.bf16.mxu0 0
        %3214 = vmatpush2.bf16.xpose.msra.mxu0 0
        %3215 = vmatprep.subr.bf16.mxu0 0
        %3216 = vmatpush2.bf16.xpose.msra.mxu0 0
        %3217 = vmatprep.subr.bf16.mxu0 0
        %3218 = vmatpush2.bf16.xpose.msra.mxu0 0
        %3219 = vmatprep.subr.bf16.mxu0 0
        %3220 = vmatpush2.bf16.xpose.msra.mxu0 0
        %3221 = vmatprep.subr.bf16.mxu0 0
        %3222 = vmatpush2.bf16.xpose.msra.mxu0 0
        %3223 = vmatprep.subr.bf16.mxu0 0
        %3224 = vmatpush2.bf16.xpose.msra.mxu0 0
        %3225 = vmatprep.mubr.bf16.mxu0 0
        %3226 = vmatmul.mubr.bf16.gmra.mxu0 %v3146
        %v3227 = vpop.f32.mrf.mxu0
        %v3228 = vadd.f32 0.0, %v3227
        %v3229 = vpop.f32.mrf.mxu0
        %v3230 = vpop.f32.mrf.mxu0
        %v3231 = vadd.f32 0.0, %v3230
        %v3232 = vpop.f32.mrf.mxu0
        %3233 = vmatprep.mubr.bf16.mxu0 0
        %3234 = vmatmul.mubr.bf16.gmra.mxu0 %v3149
        %v3235 = vpop.f32.mrf.mxu0
        %v3236 = vadd.f32 0.0, %v3235
        %v3237 = vpop.f32.mrf.mxu0
        %v3238 = vpop.f32.mrf.mxu0
        %v3239 = vadd.f32 0.0, %v3238
        %v3240 = vpop.f32.mrf.mxu0
        %3241 = vmatprep.mubr.bf16.mxu0 0
        %3242 = vmatmul.mubr.bf16.gmra.mxu0 %v3152
        %v3243 = vpop.f32.mrf.mxu0
        %v3244 = vadd.f32 0.0, %v3243
        %v3245 = vpop.f32.mrf.mxu0
        %v3246 = vpop.f32.mrf.mxu0
        %v3247 = vadd.f32 0.0, %v3246
        %v3248 = vpop.f32.mrf.mxu0
        %3249 = vmatprep.mubr.bf16.mxu0 0
        %3250 = vmatmul.mubr.bf16.gmra.mxu0 %v3155
        %v3251 = vpop.f32.mrf.mxu0
        %v3252 = vadd.f32 0.0, %v3251
        %v3253 = vpop.f32.mrf.mxu0
        %v3254 = vpop.f32.mrf.mxu0
        %v3255 = vadd.f32 0.0, %v3254
        %v3256 = vpop.f32.mrf.mxu0
        %3257 = vmatprep.mubr.bf16.mxu0 0
        %3258 = vmatmul.mubr.bf16.gmra.mxu0 %v3158
        %v3259 = vpop.f32.mrf.mxu0
        %v3260 = vadd.f32 0.0, %v3259
        %v3261 = vpop.f32.mrf.mxu0
        %v3262 = vpop.f32.mrf.mxu0
        %v3263 = vadd.f32 0.0, %v3262
        %v3264 = vpop.f32.mrf.mxu0
        %3265 = vmatprep.mubr.bf16.mxu0 0
        %3266 = vmatmul.mubr.bf16.gmra.mxu0 %v3161
        %v3267 = vpop.f32.mrf.mxu0
        %v3268 = vadd.f32 0.0, %v3267
        %v3269 = vpop.f32.mrf.mxu0
        %v3270 = vpop.f32.mrf.mxu0
        %v3271 = vadd.f32 0.0, %v3270
        %v3272 = vpop.f32.mrf.mxu0
        %3273 = vmatprep.mubr.bf16.mxu0 0
        %3274 = vmatmul.mubr.bf16.gmra.mxu0 %v3164
        %v3275 = vpop.f32.mrf.mxu0
        %v3276 = vadd.f32 0.0, %v3275
        %v3277 = vpop.f32.mrf.mxu0
        %v3278 = vpop.f32.mrf.mxu0
        %v3279 = vadd.f32 0.0, %v3278
        %v3280 = vpop.f32.mrf.mxu0
        %3281 = vmatprep.mubr.bf16.mxu0 0
        %3282 = vmatmul.mubr.bf16.gmra.mxu0 %v3167
        %v3283 = vpop.f32.mrf.mxu0
        %v3284 = vadd.f32 0.0, %v3283
        %v3285 = vpop.f32.mrf.mxu0
        %v3286 = vpop.f32.mrf.mxu0
        %v3287 = vadd.f32 0.0, %v3286
        %v3288 = vpop.f32.mrf.mxu0
        %3289 = vdwg.mxu0
        %v3290 = vld [vmem:[#allocation2] sm:$0xff]
        %v3291 = vld [vmem:[#allocation2 + $0x8] sm:$0xff]
        %v3292 = vld [vmem:[#allocation2 + $0x10] sm:$0xff]
        %v3293 = vld [vmem:[#allocation2 + $0x18] sm:$0xff]
        %v3294 = vld [vmem:[#allocation2 + $0x20] sm:$0xff]
        %v3295 = vld [vmem:[#allocation2 + $0x28] sm:$0xff]
        %v3296 = vld [vmem:[#allocation2 + $0x30] sm:$0xff]
        %v3297 = vld [vmem:[#allocation2 + $0x38] sm:$0xff]
        %v3298 = vld [vmem:[#allocation2 + $0x40] sm:$0xff]
        %v3299 = vld [vmem:[#allocation2 + $0x48] sm:$0xff]
        %v3300 = vld [vmem:[#allocation2 + $0x50] sm:$0xff]
        %v3301 = vld [vmem:[#allocation2 + $0x58] sm:$0xff]
        %v3302 = vld [vmem:[#allocation2 + $0x60] sm:$0xff]
        %v3303 = vld [vmem:[#allocation2 + $0x68] sm:$0xff]
        %v3304 = vld [vmem:[#allocation2 + $0x70] sm:$0xff]
        %v3305 = vld [vmem:[#allocation2 + $0x78] sm:$0xff]
        %3306 = vmax.xlane.f32.xlu0 %v3228
        %v3307 = vpop.xlane.xlu0 %3306
        %3308 = vmax.xlane.f32.xlu0 %v3231
        %v3309 = vpop.xlane.xlu0 %3308
        %3310 = vmax.xlane.f32.xlu0 %v3236
        %v3311 = vpop.xlane.xlu0 %3310
        %3312 = vmax.xlane.f32.xlu0 %v3239
        %v3313 = vpop.xlane.xlu0 %3312
        %3314 = vmax.xlane.f32.xlu0 %v3244
        %v3315 = vpop.xlane.xlu0 %3314
        %3316 = vmax.xlane.f32.xlu0 %v3247
        %v3317 = vpop.xlane.xlu0 %3316
        %3318 = vmax.xlane.f32.xlu0 %v3252
        %v3319 = vpop.xlane.xlu0 %3318
        %3320 = vmax.xlane.f32.xlu0 %v3255
        %v3321 = vpop.xlane.xlu0 %3320
        %3322 = vmax.xlane.f32.xlu0 %v3260
        %v3323 = vpop.xlane.xlu0 %3322
        %3324 = vmax.xlane.f32.xlu0 %v3263
        %v3325 = vpop.xlane.xlu0 %3324
        %3326 = vmax.xlane.f32.xlu0 %v3268
        %v3327 = vpop.xlane.xlu0 %3326
        %3328 = vmax.xlane.f32.xlu0 %v3271
        %v3329 = vpop.xlane.xlu0 %3328
        %3330 = vmax.xlane.f32.xlu0 %v3276
        %v3331 = vpop.xlane.xlu0 %3330
        %3332 = vmax.xlane.f32.xlu0 %v3279
        %v3333 = vpop.xlane.xlu0 %3332
        %3334 = vmax.xlane.f32.xlu0 %v3284
        %v3335 = vpop.xlane.xlu0 %3334
        %3336 = vmax.xlane.f32.xlu0 %v3287
        %v3337 = vpop.xlane.xlu0 %3336
        %v3338 = vmax.f32 %v3290, %v3307
        %v3339 = vmax.f32 %v3291, %v3309
        %v3340 = vmax.f32 %v3292, %v3311
        %v3341 = vmax.f32 %v3293, %v3313
        %v3342 = vmax.f32 %v3294, %v3315
        %v3343 = vmax.f32 %v3295, %v3317
        %v3344 = vmax.f32 %v3296, %v3319
        %v3345 = vmax.f32 %v3297, %v3321
        %v3346 = vmax.f32 %v3298, %v3323
        %v3347 = vmax.f32 %v3299, %v3325
        %v3348 = vmax.f32 %v3300, %v3327
        %v3349 = vmax.f32 %v3301, %v3329
        %v3350 = vmax.f32 %v3302, %v3331
        %v3351 = vmax.f32 %v3303, %v3333
        %v3352 = vmax.f32 %v3304, %v3335
        %v3353 = vmax.f32 %v3305, %v3337
        %v3354 = vsub.f32 %v3290, %v3338
        %v3355 = vsub.f32 %v3291, %v3339
        %v3356 = vsub.f32 %v3292, %v3340
        %v3357 = vsub.f32 %v3293, %v3341
        %v3358 = vsub.f32 %v3294, %v3342
        %v3359 = vsub.f32 %v3295, %v3343
        %v3360 = vsub.f32 %v3296, %v3344
        %v3361 = vsub.f32 %v3297, %v3345
        %v3362 = vsub.f32 %v3298, %v3346
        %v3363 = vsub.f32 %v3299, %v3347
        %v3364 = vsub.f32 %v3300, %v3348
        %v3365 = vsub.f32 %v3301, %v3349
        %v3366 = vsub.f32 %v3302, %v3350
        %v3367 = vsub.f32 %v3303, %v3351
        %v3368 = vsub.f32 %v3304, %v3352
        %v3369 = vsub.f32 %v3305, %v3353
        %v3370 = vmul.f32 %v3354, 0.17677669
        %v3371 = vmul.f32 %v3355, 0.17677669
        %v3372 = vmul.f32 %v3356, 0.17677669
        %v3373 = vmul.f32 %v3357, 0.17677669
        %v3374 = vmul.f32 %v3358, 0.17677669
        %v3375 = vmul.f32 %v3359, 0.17677669
        %v3376 = vmul.f32 %v3360, 0.17677669
        %v3377 = vmul.f32 %v3361, 0.17677669
        %v3378 = vmul.f32 %v3362, 0.17677669
        %v3379 = vmul.f32 %v3363, 0.17677669
        %v3380 = vmul.f32 %v3364, 0.17677669
        %v3381 = vmul.f32 %v3365, 0.17677669
        %v3382 = vmul.f32 %v3366, 0.17677669
        %v3383 = vmul.f32 %v3367, 0.17677669
        %v3384 = vmul.f32 %v3368, 0.17677669
        %v3385 = vmul.f32 %v3369, 0.17677669
        %v3386 = vmul.f32 %v3370, 1.442695
        %v3387 = vpow.pop %v3386
        %v3388 = vmul.f32 %v3371, 1.442695
        %v3389 = vpow.pop %v3388
        %v3390 = vmul.f32 %v3372, 1.442695
        %v3391 = vpow.pop %v3390
        %v3392 = vmul.f32 %v3373, 1.442695
        %v3393 = vpow.pop %v3392
        %v3394 = vmul.f32 %v3374, 1.442695
        %v3395 = vpow.pop %v3394
        %v3396 = vmul.f32 %v3375, 1.442695
        %v3397 = vpow.pop %v3396
        %v3398 = vmul.f32 %v3376, 1.442695
        %v3399 = vpow.pop %v3398
        %v3400 = vmul.f32 %v3377, 1.442695
        %v3401 = vpow.pop %v3400
        %v3402 = vmul.f32 %v3378, 1.442695
        %v3403 = vpow.pop %v3402
        %v3404 = vmul.f32 %v3379, 1.442695
        %v3405 = vpow.pop %v3404
        %v3406 = vmul.f32 %v3380, 1.442695
        %v3407 = vpow.pop %v3406
        %v3408 = vmul.f32 %v3381, 1.442695
        %v3409 = vpow.pop %v3408
        %v3410 = vmul.f32 %v3382, 1.442695
        %v3411 = vpow.pop %v3410
        %v3412 = vmul.f32 %v3383, 1.442695
        %v3413 = vpow.pop %v3412
        %v3414 = vmul.f32 %v3384, 1.442695
        %v3415 = vpow.pop %v3414
        %v3416 = vmul.f32 %v3385, 1.442695
        %v3417 = vpow.pop %v3416
        %3419 = vset.pattern.permute.xlu0 3
        %3420 = vperm.xlu0 %3419, %v3338
        %v3421 = vpop.permute.xlu0 %3420
        %3424 = vset.pattern.permute.xlu0 3
        %3425 = vperm.xlu0 %3424, %v3339
        %v3426 = vpop.permute.xlu0 %3425
        %3429 = vset.pattern.permute.xlu0 3
        %3430 = vperm.xlu0 %3429, %v3340
        %v3431 = vpop.permute.xlu0 %3430
        %3434 = vset.pattern.permute.xlu0 3
        %3435 = vperm.xlu0 %3434, %v3341
        %v3436 = vpop.permute.xlu0 %3435
        %3439 = vset.pattern.permute.xlu0 3
        %3440 = vperm.xlu0 %3439, %v3342
        %v3441 = vpop.permute.xlu0 %3440
        %3444 = vset.pattern.permute.xlu0 3
        %3445 = vperm.xlu0 %3444, %v3343
        %v3446 = vpop.permute.xlu0 %3445
        %3449 = vset.pattern.permute.xlu0 3
        %3450 = vperm.xlu0 %3449, %v3344
        %v3451 = vpop.permute.xlu0 %3450
        %3454 = vset.pattern.permute.xlu0 3
        %3455 = vperm.xlu0 %3454, %v3345
        %v3456 = vpop.permute.xlu0 %3455
        %3459 = vset.pattern.permute.xlu0 3
        %3460 = vperm.xlu0 %3459, %v3346
        %v3461 = vpop.permute.xlu0 %3460
        %3464 = vset.pattern.permute.xlu0 3
        %3465 = vperm.xlu0 %3464, %v3347
        %v3466 = vpop.permute.xlu0 %3465
        %3469 = vset.pattern.permute.xlu0 3
        %3470 = vperm.xlu0 %3469, %v3348
        %v3471 = vpop.permute.xlu0 %3470
        %3474 = vset.pattern.permute.xlu0 3
        %3475 = vperm.xlu0 %3474, %v3349
        %v3476 = vpop.permute.xlu0 %3475
        %3479 = vset.pattern.permute.xlu0 3
        %3480 = vperm.xlu0 %3479, %v3350
        %v3481 = vpop.permute.xlu0 %3480
        %3484 = vset.pattern.permute.xlu0 3
        %3485 = vperm.xlu0 %3484, %v3351
        %v3486 = vpop.permute.xlu0 %3485
        %3489 = vset.pattern.permute.xlu0 3
        %3490 = vperm.xlu0 %3489, %v3352
        %v3491 = vpop.permute.xlu0 %3490
        %3494 = vset.pattern.permute.xlu0 3
        %3495 = vperm.xlu0 %3494, %v3353
        %v3496 = vpop.permute.xlu0 %3495
        %v3498 = vsub.f32 %v3228, %v3421
        %v3499 = vsub.f32 %v3231, %v3426
        %v3500 = vsub.f32 %v3236, %v3431
        %v3501 = vsub.f32 %v3239, %v3436
        %v3502 = vsub.f32 %v3244, %v3441
        %v3503 = vsub.f32 %v3247, %v3446
        %v3504 = vsub.f32 %v3252, %v3451
        %v3505 = vsub.f32 %v3255, %v3456
        %v3506 = vsub.f32 %v3260, %v3461
        %v3507 = vsub.f32 %v3263, %v3466
        %v3508 = vsub.f32 %v3268, %v3471
        %v3509 = vsub.f32 %v3271, %v3476
        %v3510 = vsub.f32 %v3276, %v3481
        %v3511 = vsub.f32 %v3279, %v3486
        %v3512 = vsub.f32 %v3284, %v3491
        %v3513 = vsub.f32 %v3287, %v3496
        %v3514 = vmul.f32 %v3498, 0.17677669
        %v3515 = vmul.f32 %v3499, 0.17677669
        %v3516 = vmul.f32 %v3500, 0.17677669
        %v3517 = vmul.f32 %v3501, 0.17677669
        %v3518 = vmul.f32 %v3502, 0.17677669
        %v3519 = vmul.f32 %v3503, 0.17677669
        %v3520 = vmul.f32 %v3504, 0.17677669
        %v3521 = vmul.f32 %v3505, 0.17677669
        %v3522 = vmul.f32 %v3506, 0.17677669
        %v3523 = vmul.f32 %v3507, 0.17677669
        %v3524 = vmul.f32 %v3508, 0.17677669
        %v3525 = vmul.f32 %v3509, 0.17677669
        %v3526 = vmul.f32 %v3510, 0.17677669
        %v3527 = vmul.f32 %v3511, 0.17677669
        %v3528 = vmul.f32 %v3512, 0.17677669
        %v3529 = vmul.f32 %v3513, 0.17677669
        %v3530 = vmul.f32 %v3514, 1.442695
        %v3531 = vpow.pop %v3530
        %v3532 = vmul.f32 %v3515, 1.442695
        %v3533 = vpow.pop %v3532
        %v3534 = vmul.f32 %v3516, 1.442695
        %v3535 = vpow.pop %v3534
        %v3536 = vmul.f32 %v3517, 1.442695
        %v3537 = vpow.pop %v3536
        %v3538 = vmul.f32 %v3518, 1.442695
        %v3539 = vpow.pop %v3538
        %v3540 = vmul.f32 %v3519, 1.442695
        %v3541 = vpow.pop %v3540
        %v3542 = vmul.f32 %v3520, 1.442695
        %v3543 = vpow.pop %v3542
        %v3544 = vmul.f32 %v3521, 1.442695
        %v3545 = vpow.pop %v3544
        %v3546 = vmul.f32 %v3522, 1.442695
        %v3547 = vpow.pop %v3546
        %v3548 = vmul.f32 %v3523, 1.442695
        %v3549 = vpow.pop %v3548
        %v3550 = vmul.f32 %v3524, 1.442695
        %v3551 = vpow.pop %v3550
        %v3552 = vmul.f32 %v3525, 1.442695
        %v3553 = vpow.pop %v3552
        %v3554 = vmul.f32 %v3526, 1.442695
        %v3555 = vpow.pop %v3554
        %v3556 = vmul.f32 %v3527, 1.442695
        %v3557 = vpow.pop %v3556
        %v3558 = vmul.f32 %v3528, 1.442695
        %v3559 = vpow.pop %v3558
        %v3560 = vmul.f32 %v3529, 1.442695
        %v3561 = vpow.pop %v3560
        %v3562 = vld [vmem:[#allocation3] sm:$0xff]
        %v3563 = vld [vmem:[#allocation3 + $0x8] sm:$0xff]
        %v3564 = vld [vmem:[#allocation3 + $0x10] sm:$0xff]
        %v3565 = vld [vmem:[#allocation3 + $0x18] sm:$0xff]
        %v3566 = vld [vmem:[#allocation3 + $0x20] sm:$0xff]
        %v3567 = vld [vmem:[#allocation3 + $0x28] sm:$0xff]
        %v3568 = vld [vmem:[#allocation3 + $0x30] sm:$0xff]
        %v3569 = vld [vmem:[#allocation3 + $0x38] sm:$0xff]
        %v3570 = vld [vmem:[#allocation3 + $0x40] sm:$0xff]
        %v3571 = vld [vmem:[#allocation3 + $0x48] sm:$0xff]
        %v3572 = vld [vmem:[#allocation3 + $0x50] sm:$0xff]
        %v3573 = vld [vmem:[#allocation3 + $0x58] sm:$0xff]
        %v3574 = vld [vmem:[#allocation3 + $0x60] sm:$0xff]
        %v3575 = vld [vmem:[#allocation3 + $0x68] sm:$0xff]
        %v3576 = vld [vmem:[#allocation3 + $0x70] sm:$0xff]
        %v3577 = vld [vmem:[#allocation3 + $0x78] sm:$0xff]
        %v3578 = vmul.f32 %v3387, %v3562
        %v3579 = vmul.f32 %v3389, %v3563
        %v3580 = vmul.f32 %v3391, %v3564
        %v3581 = vmul.f32 %v3393, %v3565
        %v3582 = vmul.f32 %v3395, %v3566
        %v3583 = vmul.f32 %v3397, %v3567
        %v3584 = vmul.f32 %v3399, %v3568
        %v3585 = vmul.f32 %v3401, %v3569
        %v3586 = vmul.f32 %v3403, %v3570
        %v3587 = vmul.f32 %v3405, %v3571
        %v3588 = vmul.f32 %v3407, %v3572
        %v3589 = vmul.f32 %v3409, %v3573
        %v3590 = vmul.f32 %v3411, %v3574
        %v3591 = vmul.f32 %v3413, %v3575
        %v3592 = vmul.f32 %v3415, %v3576
        %v3593 = vmul.f32 %v3417, %v3577
        %3594 = vadd.xlane.f32.xlu0 %v3531
        %v3595 = vpop.xlane.xlu0 %3594
        %3596 = vadd.xlane.f32.xlu0 %v3533
        %v3597 = vpop.xlane.xlu0 %3596
        %3598 = vadd.xlane.f32.xlu0 %v3535
        %v3599 = vpop.xlane.xlu0 %3598
        %3600 = vadd.xlane.f32.xlu0 %v3537
        %v3601 = vpop.xlane.xlu0 %3600
        %3602 = vadd.xlane.f32.xlu0 %v3539
        %v3603 = vpop.xlane.xlu0 %3602
        %3604 = vadd.xlane.f32.xlu0 %v3541
        %v3605 = vpop.xlane.xlu0 %3604
        %3606 = vadd.xlane.f32.xlu0 %v3543
        %v3607 = vpop.xlane.xlu0 %3606
        %3608 = vadd.xlane.f32.xlu0 %v3545
        %v3609 = vpop.xlane.xlu0 %3608
        %3610 = vadd.xlane.f32.xlu0 %v3547
        %v3611 = vpop.xlane.xlu0 %3610
        %3612 = vadd.xlane.f32.xlu0 %v3549
        %v3613 = vpop.xlane.xlu0 %3612
        %3614 = vadd.xlane.f32.xlu0 %v3551
        %v3615 = vpop.xlane.xlu0 %3614
        %3616 = vadd.xlane.f32.xlu0 %v3553
        %v3617 = vpop.xlane.xlu0 %3616
        %3618 = vadd.xlane.f32.xlu0 %v3555
        %v3619 = vpop.xlane.xlu0 %3618
        %3620 = vadd.xlane.f32.xlu0 %v3557
        %v3621 = vpop.xlane.xlu0 %3620
        %3622 = vadd.xlane.f32.xlu0 %v3559
        %v3623 = vpop.xlane.xlu0 %3622
        %3624 = vadd.xlane.f32.xlu0 %v3561
        %v3625 = vpop.xlane.xlu0 %3624
        %v3626 = vadd.f32 %v3578, %v3595
        %v3627 = vadd.f32 %v3579, %v3597
        %v3628 = vadd.f32 %v3580, %v3599
        %v3629 = vadd.f32 %v3581, %v3601
        %v3630 = vadd.f32 %v3582, %v3603
        %v3631 = vadd.f32 %v3583, %v3605
        %v3632 = vadd.f32 %v3584, %v3607
        %v3633 = vadd.f32 %v3585, %v3609
        %v3634 = vadd.f32 %v3586, %v3611
        %v3635 = vadd.f32 %v3587, %v3613
        %v3636 = vadd.f32 %v3588, %v3615
        %v3637 = vadd.f32 %v3589, %v3617
        %v3638 = vadd.f32 %v3590, %v3619
        %v3639 = vadd.f32 %v3591, %v3621
        %v3640 = vadd.f32 %v3592, %v3623
        %v3641 = vadd.f32 %v3593, %v3625
        %vm3642 = vcmask 31768
        %3643 = vst.msk [vmem:[#allocation3] sm:$0xff] %vm3642, %v3626
        %3644 = vst.msk [vmem:[#allocation3 + $0x8] sm:$0xff] %vm3642, %v3627
        %3645 = vst.msk [vmem:[#allocation3 + $0x10] sm:$0xff] %vm3642, %v3628
        %3646 = vst.msk [vmem:[#allocation3 + $0x18] sm:$0xff] %vm3642, %v3629
        %3647 = vst.msk [vmem:[#allocation3 + $0x20] sm:$0xff] %vm3642, %v3630
        %3648 = vst.msk [vmem:[#allocation3 + $0x28] sm:$0xff] %vm3642, %v3631
        %3649 = vst.msk [vmem:[#allocation3 + $0x30] sm:$0xff] %vm3642, %v3632
        %3650 = vst.msk [vmem:[#allocation3 + $0x38] sm:$0xff] %vm3642, %v3633
        %3651 = vst.msk [vmem:[#allocation3 + $0x40] sm:$0xff] %vm3642, %v3634
        %3652 = vst.msk [vmem:[#allocation3 + $0x48] sm:$0xff] %vm3642, %v3635
        %3653 = vst.msk [vmem:[#allocation3 + $0x50] sm:$0xff] %vm3642, %v3636
        %3654 = vst.msk [vmem:[#allocation3 + $0x58] sm:$0xff] %vm3642, %v3637
        %3655 = vst.msk [vmem:[#allocation3 + $0x60] sm:$0xff] %vm3642, %v3638
        %3656 = vst.msk [vmem:[#allocation3 + $0x68] sm:$0xff] %vm3642, %v3639
        %3657 = vst.msk [vmem:[#allocation3 + $0x70] sm:$0xff] %vm3642, %v3640
        %3658 = vst.msk [vmem:[#allocation3 + $0x78] sm:$0xff] %vm3642, %v3641
        %v3659 = vld [vmem:[#allocation4] sm:$0xff]
        %v3660 = vld [vmem:[#allocation4 + $0x8] sm:$0xff]
        %v3661 = vld [vmem:[#allocation4 + $0x10] sm:$0xff]
        %v3662 = vld [vmem:[#allocation4 + $0x18] sm:$0xff]
        %v3663 = vld [vmem:[#allocation4 + $0x20] sm:$0xff]
        %v3664 = vld [vmem:[#allocation4 + $0x28] sm:$0xff]
        %v3665 = vld [vmem:[#allocation4 + $0x30] sm:$0xff]
        %v3666 = vld [vmem:[#allocation4 + $0x38] sm:$0xff]
        %v3667 = vld [vmem:[#allocation4 + $0x40] sm:$0xff]
        %v3668 = vld [vmem:[#allocation4 + $0x48] sm:$0xff]
        %v3669 = vld [vmem:[#allocation4 + $0x50] sm:$0xff]
        %v3670 = vld [vmem:[#allocation4 + $0x58] sm:$0xff]
        %v3671 = vld [vmem:[#allocation4 + $0x60] sm:$0xff]
        %v3672 = vld [vmem:[#allocation4 + $0x68] sm:$0xff]
        %v3673 = vld [vmem:[#allocation4 + $0x70] sm:$0xff]
        %v3674 = vld [vmem:[#allocation4 + $0x78] sm:$0xff]
        %3676 = vset.pattern.permute.xlu0 3
        %3677 = vperm.xlu0 %3676, %v3387
        %v3678 = vpop.permute.xlu0 %3677
        %3681 = vset.pattern.permute.xlu0 3
        %3682 = vperm.xlu0 %3681, %v3389
        %v3683 = vpop.permute.xlu0 %3682
        %3686 = vset.pattern.permute.xlu0 3
        %3687 = vperm.xlu0 %3686, %v3391
        %v3688 = vpop.permute.xlu0 %3687
        %3691 = vset.pattern.permute.xlu0 3
        %3692 = vperm.xlu0 %3691, %v3393
        %v3693 = vpop.permute.xlu0 %3692
        %3696 = vset.pattern.permute.xlu0 3
        %3697 = vperm.xlu0 %3696, %v3395
        %v3698 = vpop.permute.xlu0 %3697
        %3701 = vset.pattern.permute.xlu0 3
        %3702 = vperm.xlu0 %3701, %v3397
        %v3703 = vpop.permute.xlu0 %3702
        %3706 = vset.pattern.permute.xlu0 3
        %3707 = vperm.xlu0 %3706, %v3399
        %v3708 = vpop.permute.xlu0 %3707
        %3711 = vset.pattern.permute.xlu0 3
        %3712 = vperm.xlu0 %3711, %v3401
        %v3713 = vpop.permute.xlu0 %3712
        %3716 = vset.pattern.permute.xlu0 3
        %3717 = vperm.xlu0 %3716, %v3403
        %v3718 = vpop.permute.xlu0 %3717
        %3721 = vset.pattern.permute.xlu0 3
        %3722 = vperm.xlu0 %3721, %v3405
        %v3723 = vpop.permute.xlu0 %3722
        %3726 = vset.pattern.permute.xlu0 3
        %3727 = vperm.xlu0 %3726, %v3407
        %v3728 = vpop.permute.xlu0 %3727
        %3731 = vset.pattern.permute.xlu0 3
        %3732 = vperm.xlu0 %3731, %v3409
        %v3733 = vpop.permute.xlu0 %3732
        %3736 = vset.pattern.permute.xlu0 3
        %3737 = vperm.xlu0 %3736, %v3411
        %v3738 = vpop.permute.xlu0 %3737
        %3741 = vset.pattern.permute.xlu0 3
        %3742 = vperm.xlu0 %3741, %v3413
        %v3743 = vpop.permute.xlu0 %3742
        %3746 = vset.pattern.permute.xlu0 3
        %3747 = vperm.xlu0 %3746, %v3415
        %v3748 = vpop.permute.xlu0 %3747
        %3751 = vset.pattern.permute.xlu0 3
        %3752 = vperm.xlu0 %3751, %v3417
        %v3753 = vpop.permute.xlu0 %3752
        %v3755 = vmul.f32 %v3678, %v3659
        %v3756 = vmul.f32 %v3683, %v3660
        %v3757 = vmul.f32 %v3688, %v3661
        %v3758 = vmul.f32 %v3693, %v3662
        %v3759 = vmul.f32 %v3698, %v3663
        %v3760 = vmul.f32 %v3703, %v3664
        %v3761 = vmul.f32 %v3708, %v3665
        %v3762 = vmul.f32 %v3713, %v3666
        %v3763 = vmul.f32 %v3718, %v3667
        %v3764 = vmul.f32 %v3723, %v3668
        %v3765 = vmul.f32 %v3728, %v3669
        %v3766 = vmul.f32 %v3733, %v3670
        %v3767 = vmul.f32 %v3738, %v3671
        %v3768 = vmul.f32 %v3743, %v3672
        %v3769 = vmul.f32 %v3748, %v3673
        %v3770 = vmul.f32 %v3753, %v3674
        %v3771 = vpack.c.bf16 %v3533, %v3531
        %v3772 = vpack.c.bf16 %v3537, %v3535
        %v3773 = vpack.c.bf16 %v3541, %v3539
        %v3774 = vpack.c.bf16 %v3545, %v3543
        %v3775 = vpack.c.bf16 %v3549, %v3547
        %v3776 = vpack.c.bf16 %v3553, %v3551
        %v3777 = vpack.c.bf16 %v3557, %v3555
        %v3778 = vpack.c.bf16 %v3561, %v3559
        %3779 = vrot.lane.b32.xlu0 %v1152, 32
        %v3780 = vpop.permute.xlu0 %3779
        %3781 = vrot.lane.b32.xlu0 %v1153, 32
        %v3782 = vpop.permute.xlu0 %3781
        %3783 = vrot.lane.b32.xlu0 %v1154, 32
        %v3784 = vpop.permute.xlu0 %3783
        %3785 = vrot.lane.b32.xlu0 %v1155, 32
        %v3786 = vpop.permute.xlu0 %3785
        %3787 = vrot.lane.b32.xlu0 %v1156, 32
        %v3788 = vpop.permute.xlu0 %3787
        %3789 = vrot.lane.b32.xlu0 %v1157, 32
        %v3790 = vpop.permute.xlu0 %3789
        %3791 = vrot.lane.b32.xlu0 %v1158, 32
        %v3792 = vpop.permute.xlu0 %3791
        %3793 = vrot.lane.b32.xlu0 %v1159, 32
        %v3794 = vpop.permute.xlu0 %3793
        %3803 = vmatprep.subr.bf16.mxu0 0
        %3804 = vmatpush1.bf16.msra.mxu0 %v3794
        %3805 = vmatprep.subr.bf16.mxu0 0
        %3806 = vmatpush1.bf16.msra.mxu0 %v3792
        %3807 = vmatprep.subr.bf16.mxu0 0
        %3808 = vmatpush1.bf16.msra.mxu0 %v3790
        %3809 = vmatprep.subr.bf16.mxu0 0
        %3810 = vmatpush1.bf16.msra.mxu0 %v3788
        %3811 = vmatprep.subr.bf16.mxu0 0
        %3812 = vmatpush1.bf16.msra.mxu0 %v3786
        %3813 = vmatprep.subr.bf16.mxu0 0
        %3814 = vmatpush1.bf16.msra.mxu0 %v3784
        %3815 = vmatprep.subr.bf16.mxu0 0
        %3816 = vmatpush1.bf16.msra.mxu0 %v3782
        %3817 = vmatprep.subr.bf16.mxu0 0
        %3818 = vmatpush1.bf16.msra.mxu0 %v3780
        %3819 = vmatprep.subr.bf16.mxu0 0
        %3820 = vmatpush2.bf16.msra.mxu0 0
        %3821 = vmatprep.subr.bf16.mxu0 0
        %3822 = vmatpush2.bf16.msra.mxu0 0
        %3823 = vmatprep.subr.bf16.mxu0 0
        %3824 = vmatpush2.bf16.msra.mxu0 0
        %3825 = vmatprep.subr.bf16.mxu0 0
        %3826 = vmatpush2.bf16.msra.mxu0 0
        %3827 = vmatprep.subr.bf16.mxu0 0
        %3828 = vmatpush2.bf16.msra.mxu0 0
        %3829 = vmatprep.subr.bf16.mxu0 0
        %3830 = vmatpush2.bf16.msra.mxu0 0
        %3831 = vmatprep.subr.bf16.mxu0 0
        %3832 = vmatpush2.bf16.msra.mxu0 0
        %3833 = vmatprep.subr.bf16.mxu0 0
        %3834 = vmatpush2.bf16.msra.mxu0 0
        %3835 = vmatprep.mubr.bf16.mxu0 0
        %3836 = vmatmul.mubr.bf16.gmra.mxu0 %v3771
        %v3837 = vpop.f32.mrf.mxu0
        %v3838 = vadd.f32 0.0, %v3837
        %v3839 = vpop.f32.mrf.mxu0
        %v3840 = vpop.f32.mrf.mxu0
        %v3841 = vadd.f32 0.0, %v3840
        %v3842 = vpop.f32.mrf.mxu0
        %3843 = vmatprep.mubr.bf16.mxu0 0
        %3844 = vmatmul.mubr.bf16.gmra.mxu0 %v3772
        %v3845 = vpop.f32.mrf.mxu0
        %v3846 = vadd.f32 0.0, %v3845
        %v3847 = vpop.f32.mrf.mxu0
        %v3848 = vpop.f32.mrf.mxu0
        %v3849 = vadd.f32 0.0, %v3848
        %v3850 = vpop.f32.mrf.mxu0
        %3851 = vmatprep.mubr.bf16.mxu0 0
        %3852 = vmatmul.mubr.bf16.gmra.mxu0 %v3773
        %v3853 = vpop.f32.mrf.mxu0
        %v3854 = vadd.f32 0.0, %v3853
        %v3855 = vpop.f32.mrf.mxu0
        %v3856 = vpop.f32.mrf.mxu0
        %v3857 = vadd.f32 0.0, %v3856
        %v3858 = vpop.f32.mrf.mxu0
        %3859 = vmatprep.mubr.bf16.mxu0 0
        %3860 = vmatmul.mubr.bf16.gmra.mxu0 %v3774
        %v3861 = vpop.f32.mrf.mxu0
        %v3862 = vadd.f32 0.0, %v3861
        %v3863 = vpop.f32.mrf.mxu0
        %v3864 = vpop.f32.mrf.mxu0
        %v3865 = vadd.f32 0.0, %v3864
        %v3866 = vpop.f32.mrf.mxu0
        %3867 = vmatprep.mubr.bf16.mxu0 0
        %3868 = vmatmul.mubr.bf16.gmra.mxu0 %v3775
        %v3869 = vpop.f32.mrf.mxu0
        %v3870 = vadd.f32 0.0, %v3869
        %v3871 = vpop.f32.mrf.mxu0
        %v3872 = vpop.f32.mrf.mxu0
        %v3873 = vadd.f32 0.0, %v3872
        %v3874 = vpop.f32.mrf.mxu0
        %3875 = vmatprep.mubr.bf16.mxu0 0
        %3876 = vmatmul.mubr.bf16.gmra.mxu0 %v3776
        %v3877 = vpop.f32.mrf.mxu0
        %v3878 = vadd.f32 0.0, %v3877
        %v3879 = vpop.f32.mrf.mxu0
        %v3880 = vpop.f32.mrf.mxu0
        %v3881 = vadd.f32 0.0, %v3880
        %v3882 = vpop.f32.mrf.mxu0
        %3883 = vmatprep.mubr.bf16.mxu0 0
        %3884 = vmatmul.mubr.bf16.gmra.mxu0 %v3777
        %v3885 = vpop.f32.mrf.mxu0
        %v3886 = vadd.f32 0.0, %v3885
        %v3887 = vpop.f32.mrf.mxu0
        %v3888 = vpop.f32.mrf.mxu0
        %v3889 = vadd.f32 0.0, %v3888
        %v3890 = vpop.f32.mrf.mxu0
        %3891 = vmatprep.mubr.bf16.mxu0 0
        %3892 = vmatmul.mubr.bf16.gmra.mxu0 %v3778
        %v3893 = vpop.f32.mrf.mxu0
        %v3894 = vadd.f32 0.0, %v3893
        %v3895 = vpop.f32.mrf.mxu0
        %v3896 = vpop.f32.mrf.mxu0
        %v3897 = vadd.f32 0.0, %v3896
        %v3898 = vpop.f32.mrf.mxu0
        %3899 = vdwg.mxu0
        %3916 = vrot.lane.b32.xlu0 %v3838, 96
        %v3917 = vpop.permute.xlu0 %3916
        %3918 = vrot.lane.b32.xlu0 %v3841, 96
        %v3919 = vpop.permute.xlu0 %3918
        %3920 = vrot.lane.b32.xlu0 %v3846, 96
        %v3921 = vpop.permute.xlu0 %3920
        %3922 = vrot.lane.b32.xlu0 %v3849, 96
        %v3923 = vpop.permute.xlu0 %3922
        %3924 = vrot.lane.b32.xlu0 %v3854, 96
        %v3925 = vpop.permute.xlu0 %3924
        %3926 = vrot.lane.b32.xlu0 %v3857, 96
        %v3927 = vpop.permute.xlu0 %3926
        %3928 = vrot.lane.b32.xlu0 %v3862, 96
        %v3929 = vpop.permute.xlu0 %3928
        %3930 = vrot.lane.b32.xlu0 %v3865, 96
        %v3931 = vpop.permute.xlu0 %3930
        %3932 = vrot.lane.b32.xlu0 %v3870, 96
        %v3933 = vpop.permute.xlu0 %3932
        %3934 = vrot.lane.b32.xlu0 %v3873, 96
        %v3935 = vpop.permute.xlu0 %3934
        %3936 = vrot.lane.b32.xlu0 %v3878, 96
        %v3937 = vpop.permute.xlu0 %3936
        %3938 = vrot.lane.b32.xlu0 %v3881, 96
        %v3939 = vpop.permute.xlu0 %3938
        %3940 = vrot.lane.b32.xlu0 %v3886, 96
        %v3941 = vpop.permute.xlu0 %3940
        %3942 = vrot.lane.b32.xlu0 %v3889, 96
        %v3943 = vpop.permute.xlu0 %3942
        %3944 = vrot.lane.b32.xlu0 %v3894, 96
        %v3945 = vpop.permute.xlu0 %3944
        %3946 = vrot.lane.b32.xlu0 %v3897, 96
        %v3947 = vpop.permute.xlu0 %3946
        %v3964 = vadd.f32 %v3755, %v3917
        %v3965 = vadd.f32 %v3756, %v3919
        %v3966 = vadd.f32 %v3757, %v3921
        %v3967 = vadd.f32 %v3758, %v3923
        %v3968 = vadd.f32 %v3759, %v3925
        %v3969 = vadd.f32 %v3760, %v3927
        %v3970 = vadd.f32 %v3761, %v3929
        %v3971 = vadd.f32 %v3762, %v3931
        %v3972 = vadd.f32 %v3763, %v3933
        %v3973 = vadd.f32 %v3764, %v3935
        %v3974 = vadd.f32 %v3765, %v3937
        %v3975 = vadd.f32 %v3766, %v3939
        %v3976 = vadd.f32 %v3767, %v3941
        %v3977 = vadd.f32 %v3768, %v3943
        %v3978 = vadd.f32 %v3769, %v3945
        %v3979 = vadd.f32 %v3770, %v3947
        %vm3980 = vcmask 1048320
        %3981 = vst.msk [vmem:[#allocation4] sm:$0xff] %vm3980, %v3964
        %3982 = vst.msk [vmem:[#allocation4 + $0x8] sm:$0xff] %vm3980, %v3965
        %3983 = vst.msk [vmem:[#allocation4 + $0x10] sm:$0xff] %vm3980, %v3966
        %3984 = vst.msk [vmem:[#allocation4 + $0x18] sm:$0xff] %vm3980, %v3967
        %3985 = vst.msk [vmem:[#allocation4 + $0x20] sm:$0xff] %vm3980, %v3968
        %3986 = vst.msk [vmem:[#allocation4 + $0x28] sm:$0xff] %vm3980, %v3969
        %3987 = vst.msk [vmem:[#allocation4 + $0x30] sm:$0xff] %vm3980, %v3970
        %3988 = vst.msk [vmem:[#allocation4 + $0x38] sm:$0xff] %vm3980, %v3971
        %3989 = vst.msk [vmem:[#allocation4 + $0x40] sm:$0xff] %vm3980, %v3972
        %3990 = vst.msk [vmem:[#allocation4 + $0x48] sm:$0xff] %vm3980, %v3973
        %3991 = vst.msk [vmem:[#allocation4 + $0x50] sm:$0xff] %vm3980, %v3974
        %3992 = vst.msk [vmem:[#allocation4 + $0x58] sm:$0xff] %vm3980, %v3975
        %3993 = vst.msk [vmem:[#allocation4 + $0x60] sm:$0xff] %vm3980, %v3976
        %3994 = vst.msk [vmem:[#allocation4 + $0x68] sm:$0xff] %vm3980, %v3977
        %3995 = vst.msk [vmem:[#allocation4 + $0x70] sm:$0xff] %vm3980, %v3978
        %3996 = vst.msk [vmem:[#allocation4 + $0x78] sm:$0xff] %vm3980, %v3979
        %3997 = vst.msk [vmem:[#allocation2] sm:$0xff] %vm3642, %v3338
        %3998 = vst.msk [vmem:[#allocation2 + $0x8] sm:$0xff] %vm3642, %v3339
        %3999 = vst.msk [vmem:[#allocation2 + $0x10] sm:$0xff] %vm3642, %v3340
        %4000 = vst.msk [vmem:[#allocation2 + $0x18] sm:$0xff] %vm3642, %v3341
        %4001 = vst.msk [vmem:[#allocation2 + $0x20] sm:$0xff] %vm3642, %v3342
        %4002 = vst.msk [vmem:[#allocation2 + $0x28] sm:$0xff] %vm3642, %v3343
        %4003 = vst.msk [vmem:[#allocation2 + $0x30] sm:$0xff] %vm3642, %v3344
        %4004 = vst.msk [vmem:[#allocation2 + $0x38] sm:$0xff] %vm3642, %v3345
        %4005 = vst.msk [vmem:[#allocation2 + $0x40] sm:$0xff] %vm3642, %v3346
        %4006 = vst.msk [vmem:[#allocation2 + $0x48] sm:$0xff] %vm3642, %v3347
        %4007 = vst.msk [vmem:[#allocation2 + $0x50] sm:$0xff] %vm3642, %v3348
        %4008 = vst.msk [vmem:[#allocation2 + $0x58] sm:$0xff] %vm3642, %v3349
        %4009 = vst.msk [vmem:[#allocation2 + $0x60] sm:$0xff] %vm3642, %v3350
        %4010 = vst.msk [vmem:[#allocation2 + $0x68] sm:$0xff] %vm3642, %v3351
        %4011 = vst.msk [vmem:[#allocation2 + $0x70] sm:$0xff] %vm3642, %v3352
        %4012 = vst.msk [vmem:[#allocation2 + $0x78] sm:$0xff] %vm3642, %v3353
        // Predicated region
        $region49: #{tpu_custom_call.1} parent=31 // pred_check
          %p4013 = pneg %p304
        $region50: #{tpu_custom_call.1} parent=31 // pred_check_branch
          %4015 = sbr.rel (%p4013) target = $region52
        $region51: #{tpu_custom_call.1} parent=31 // pred_region
          %v4016 = vld [vmem:[#allocation3] sm:$0xff]
          %v4017 = vld [vmem:[#allocation3 + $0x8] sm:$0xff]
          %v4018 = vld [vmem:[#allocation3 + $0x10] sm:$0xff]
          %v4019 = vld [vmem:[#allocation3 + $0x18] sm:$0xff]
          %v4020 = vld [vmem:[#allocation3 + $0x20] sm:$0xff]
          %v4021 = vld [vmem:[#allocation3 + $0x28] sm:$0xff]
          %v4022 = vld [vmem:[#allocation3 + $0x30] sm:$0xff]
          %v4023 = vld [vmem:[#allocation3 + $0x38] sm:$0xff]
          %v4024 = vld [vmem:[#allocation3 + $0x40] sm:$0xff]
          %v4025 = vld [vmem:[#allocation3 + $0x48] sm:$0xff]
          %v4026 = vld [vmem:[#allocation3 + $0x50] sm:$0xff]
          %v4027 = vld [vmem:[#allocation3 + $0x58] sm:$0xff]
          %v4028 = vld [vmem:[#allocation3 + $0x60] sm:$0xff]
          %v4029 = vld [vmem:[#allocation3 + $0x68] sm:$0xff]
          %v4030 = vld [vmem:[#allocation3 + $0x70] sm:$0xff]
          %v4031 = vld [vmem:[#allocation3 + $0x78] sm:$0xff]
          %v4032 = vrcp.pop %v4016
          %v4033 = vrcp.pop %v4017
          %v4034 = vrcp.pop %v4018
          %v4035 = vrcp.pop %v4019
          %v4036 = vrcp.pop %v4020
          %v4037 = vrcp.pop %v4021
          %v4038 = vrcp.pop %v4022
          %v4039 = vrcp.pop %v4023
          %v4040 = vrcp.pop %v4024
          %v4041 = vrcp.pop %v4025
          %v4042 = vrcp.pop %v4026
          %v4043 = vrcp.pop %v4027
          %v4044 = vrcp.pop %v4028
          %v4045 = vrcp.pop %v4029
          %v4046 = vrcp.pop %v4030
          %v4047 = vrcp.pop %v4031
          %v4048 = vld [vmem:[#allocation4] sm:$0xff]
          %v4049 = vld [vmem:[#allocation4 + $0x8] sm:$0xff]
          %v4050 = vld [vmem:[#allocation4 + $0x10] sm:$0xff]
          %v4051 = vld [vmem:[#allocation4 + $0x18] sm:$0xff]
          %v4052 = vld [vmem:[#allocation4 + $0x20] sm:$0xff]
          %v4053 = vld [vmem:[#allocation4 + $0x28] sm:$0xff]
          %v4054 = vld [vmem:[#allocation4 + $0x30] sm:$0xff]
          %v4055 = vld [vmem:[#allocation4 + $0x38] sm:$0xff]
          %v4056 = vld [vmem:[#allocation4 + $0x40] sm:$0xff]
          %v4057 = vld [vmem:[#allocation4 + $0x48] sm:$0xff]
          %v4058 = vld [vmem:[#allocation4 + $0x50] sm:$0xff]
          %v4059 = vld [vmem:[#allocation4 + $0x58] sm:$0xff]
          %v4060 = vld [vmem:[#allocation4 + $0x60] sm:$0xff]
          %v4061 = vld [vmem:[#allocation4 + $0x68] sm:$0xff]
          %v4062 = vld [vmem:[#allocation4 + $0x70] sm:$0xff]
          %v4063 = vld [vmem:[#allocation4 + $0x78] sm:$0xff]
          %4065 = vset.pattern.permute.xlu0 0
          %4066 = vperm.xlu0 %4065, %v4032
          %v4067 = vpop.permute.xlu0 %4066
          %4070 = vset.pattern.permute.xlu0 0
          %4071 = vperm.xlu0 %4070, %v4033
          %v4072 = vpop.permute.xlu0 %4071
          %4075 = vset.pattern.permute.xlu0 0
          %4076 = vperm.xlu0 %4075, %v4034
          %v4077 = vpop.permute.xlu0 %4076
          %4080 = vset.pattern.permute.xlu0 0
          %4081 = vperm.xlu0 %4080, %v4035
          %v4082 = vpop.permute.xlu0 %4081
          %4085 = vset.pattern.permute.xlu0 0
          %4086 = vperm.xlu0 %4085, %v4036
          %v4087 = vpop.permute.xlu0 %4086
          %4090 = vset.pattern.permute.xlu0 0
          %4091 = vperm.xlu0 %4090, %v4037
          %v4092 = vpop.permute.xlu0 %4091
          %4095 = vset.pattern.permute.xlu0 0
          %4096 = vperm.xlu0 %4095, %v4038
          %v4097 = vpop.permute.xlu0 %4096
          %4100 = vset.pattern.permute.xlu0 0
          %4101 = vperm.xlu0 %4100, %v4039
          %v4102 = vpop.permute.xlu0 %4101
          %4105 = vset.pattern.permute.xlu0 0
          %4106 = vperm.xlu0 %4105, %v4040
          %v4107 = vpop.permute.xlu0 %4106
          %4110 = vset.pattern.permute.xlu0 0
          %4111 = vperm.xlu0 %4110, %v4041
          %v4112 = vpop.permute.xlu0 %4111
          %4115 = vset.pattern.permute.xlu0 0
          %4116 = vperm.xlu0 %4115, %v4042
          %v4117 = vpop.permute.xlu0 %4116
          %4120 = vset.pattern.permute.xlu0 0
          %4121 = vperm.xlu0 %4120, %v4043
          %v4122 = vpop.permute.xlu0 %4121
          %4125 = vset.pattern.permute.xlu0 0
          %4126 = vperm.xlu0 %4125, %v4044
          %v4127 = vpop.permute.xlu0 %4126
          %4130 = vset.pattern.permute.xlu0 0
          %4131 = vperm.xlu0 %4130, %v4045
          %v4132 = vpop.permute.xlu0 %4131
          %4135 = vset.pattern.permute.xlu0 0
          %4136 = vperm.xlu0 %4135, %v4046
          %v4137 = vpop.permute.xlu0 %4136
          %4140 = vset.pattern.permute.xlu0 0
          %4141 = vperm.xlu0 %4140, %v4047
          %v4142 = vpop.permute.xlu0 %4141
          %v4144 = vmul.f32 %v4048, %v4067
          %v4145 = vmul.f32 %v4049, %v4072
          %v4146 = vmul.f32 %v4050, %v4077
          %v4147 = vmul.f32 %v4051, %v4082
          %v4148 = vmul.f32 %v4052, %v4087
          %v4149 = vmul.f32 %v4053, %v4092
          %v4150 = vmul.f32 %v4054, %v4097
          %v4151 = vmul.f32 %v4055, %v4102
          %v4152 = vmul.f32 %v4056, %v4107
          %v4153 = vmul.f32 %v4057, %v4112
          %v4154 = vmul.f32 %v4058, %v4117
          %v4155 = vmul.f32 %v4059, %v4122
          %v4156 = vmul.f32 %v4060, %v4127
          %v4157 = vmul.f32 %v4061, %v4132
          %v4158 = vmul.f32 %v4062, %v4137
          %v4159 = vmul.f32 %v4063, %v4142
          %4160 = vst.msk [vmem:[#allocation4] sm:$0xff] %vm485, %v4144
          %4161 = vst.msk [vmem:[#allocation4 + $0x8] sm:$0xff] %vm485, %v4145
          %4162 = vst.msk [vmem:[#allocation4 + $0x10] sm:$0xff] %vm485, %v4146
          %4163 = vst.msk [vmem:[#allocation4 + $0x18] sm:$0xff] %vm485, %v4147
          %4164 = vst.msk [vmem:[#allocation4 + $0x20] sm:$0xff] %vm485, %v4148
          %4165 = vst.msk [vmem:[#allocation4 + $0x28] sm:$0xff] %vm485, %v4149
          %4166 = vst.msk [vmem:[#allocation4 + $0x30] sm:$0xff] %vm485, %v4150
          %4167 = vst.msk [vmem:[#allocation4 + $0x38] sm:$0xff] %vm485, %v4151
          %4168 = vst.msk [vmem:[#allocation4 + $0x40] sm:$0xff] %vm485, %v4152
          %4169 = vst.msk [vmem:[#allocation4 + $0x48] sm:$0xff] %vm485, %v4153
          %4170 = vst.msk [vmem:[#allocation4 + $0x50] sm:$0xff] %vm485, %v4154
          %4171 = vst.msk [vmem:[#allocation4 + $0x58] sm:$0xff] %vm485, %v4155
          %4172 = vst.msk [vmem:[#allocation4 + $0x60] sm:$0xff] %vm485, %v4156
          %4173 = vst.msk [vmem:[#allocation4 + $0x68] sm:$0xff] %vm485, %v4157
          %4174 = vst.msk [vmem:[#allocation4 + $0x70] sm:$0xff] %vm485, %v4158
          %4175 = vst.msk [vmem:[#allocation4 + $0x78] sm:$0xff] %vm485, %v4159
          %v4176 = vld [vmem:[#allocation4] sm:$0xff]
          %v4177 = vld [vmem:[#allocation4 + $0x8] sm:$0xff]
          %v4178 = vld [vmem:[#allocation4 + $0x10] sm:$0xff]
          %v4179 = vld [vmem:[#allocation4 + $0x18] sm:$0xff]
          %v4180 = vld [vmem:[#allocation4 + $0x20] sm:$0xff]
          %v4181 = vld [vmem:[#allocation4 + $0x28] sm:$0xff]
          %v4182 = vld [vmem:[#allocation4 + $0x30] sm:$0xff]
          %v4183 = vld [vmem:[#allocation4 + $0x38] sm:$0xff]
          %v4184 = vld [vmem:[#allocation4 + $0x40] sm:$0xff]
          %v4185 = vld [vmem:[#allocation4 + $0x48] sm:$0xff]
          %v4186 = vld [vmem:[#allocation4 + $0x50] sm:$0xff]
          %v4187 = vld [vmem:[#allocation4 + $0x58] sm:$0xff]
          %v4188 = vld [vmem:[#allocation4 + $0x60] sm:$0xff]
          %v4189 = vld [vmem:[#allocation4 + $0x68] sm:$0xff]
          %v4190 = vld [vmem:[#allocation4 + $0x70] sm:$0xff]
          %v4191 = vld [vmem:[#allocation4 + $0x78] sm:$0xff]
          %4192 = vset.pattern.permute.xlu0 1
          %4193 = vperm.xlu0 %4192, %v4032
          %v4194 = vpop.permute.xlu0 %4193
          %4196 = vset.pattern.permute.xlu0 1
          %4197 = vperm.xlu0 %4196, %v4033
          %v4198 = vpop.permute.xlu0 %4197
          %4200 = vset.pattern.permute.xlu0 1
          %4201 = vperm.xlu0 %4200, %v4034
          %v4202 = vpop.permute.xlu0 %4201
          %4204 = vset.pattern.permute.xlu0 1
          %4205 = vperm.xlu0 %4204, %v4035
          %v4206 = vpop.permute.xlu0 %4205
          %4208 = vset.pattern.permute.xlu0 1
          %4209 = vperm.xlu0 %4208, %v4036
          %v4210 = vpop.permute.xlu0 %4209
          %4212 = vset.pattern.permute.xlu0 1
          %4213 = vperm.xlu0 %4212, %v4037
          %v4214 = vpop.permute.xlu0 %4213
          %4216 = vset.pattern.permute.xlu0 1
          %4217 = vperm.xlu0 %4216, %v4038
          %v4218 = vpop.permute.xlu0 %4217
          %4220 = vset.pattern.permute.xlu0 1
          %4221 = vperm.xlu0 %4220, %v4039
          %v4222 = vpop.permute.xlu0 %4221
          %4224 = vset.pattern.permute.xlu0 1
          %4225 = vperm.xlu0 %4224, %v4040
          %v4226 = vpop.permute.xlu0 %4225
          %4228 = vset.pattern.permute.xlu0 1
          %4229 = vperm.xlu0 %4228, %v4041
          %v4230 = vpop.permute.xlu0 %4229
          %4232 = vset.pattern.permute.xlu0 1
          %4233 = vperm.xlu0 %4232, %v4042
          %v4234 = vpop.permute.xlu0 %4233
          %4236 = vset.pattern.permute.xlu0 1
          %4237 = vperm.xlu0 %4236, %v4043
          %v4238 = vpop.permute.xlu0 %4237
          %4240 = vset.pattern.permute.xlu0 1
          %4241 = vperm.xlu0 %4240, %v4044
          %v4242 = vpop.permute.xlu0 %4241
          %4244 = vset.pattern.permute.xlu0 1
          %4245 = vperm.xlu0 %4244, %v4045
          %v4246 = vpop.permute.xlu0 %4245
          %4248 = vset.pattern.permute.xlu0 1
          %4249 = vperm.xlu0 %4248, %v4046
          %v4250 = vpop.permute.xlu0 %4249
          %4252 = vset.pattern.permute.xlu0 1
          %4253 = vperm.xlu0 %4252, %v4047
          %v4254 = vpop.permute.xlu0 %4253
          %v4256 = vmul.f32 %v4176, %v4194
          %v4257 = vmul.f32 %v4177, %v4198
          %v4258 = vmul.f32 %v4178, %v4202
          %v4259 = vmul.f32 %v4179, %v4206
          %v4260 = vmul.f32 %v4180, %v4210
          %v4261 = vmul.f32 %v4181, %v4214
          %v4262 = vmul.f32 %v4182, %v4218
          %v4263 = vmul.f32 %v4183, %v4222
          %v4264 = vmul.f32 %v4184, %v4226
          %v4265 = vmul.f32 %v4185, %v4230
          %v4266 = vmul.f32 %v4186, %v4234
          %v4267 = vmul.f32 %v4187, %v4238
          %v4268 = vmul.f32 %v4188, %v4242
          %v4269 = vmul.f32 %v4189, %v4246
          %v4270 = vmul.f32 %v4190, %v4250
          %v4271 = vmul.f32 %v4191, %v4254
          %4272 = vst.msk [vmem:[#allocation4] sm:$0xff] %vm2180, %v4256
          %4273 = vst.msk [vmem:[#allocation4 + $0x8] sm:$0xff] %vm2180, %v4257
          %4274 = vst.msk [vmem:[#allocation4 + $0x10] sm:$0xff] %vm2180, %v4258
          %4275 = vst.msk [vmem:[#allocation4 + $0x18] sm:$0xff] %vm2180, %v4259
          %4276 = vst.msk [vmem:[#allocation4 + $0x20] sm:$0xff] %vm2180, %v4260
          %4277 = vst.msk [vmem:[#allocation4 + $0x28] sm:$0xff] %vm2180, %v4261
          %4278 = vst.msk [vmem:[#allocation4 + $0x30] sm:$0xff] %vm2180, %v4262
          %4279 = vst.msk [vmem:[#allocation4 + $0x38] sm:$0xff] %vm2180, %v4263
          %4280 = vst.msk [vmem:[#allocation4 + $0x40] sm:$0xff] %vm2180, %v4264
          %4281 = vst.msk [vmem:[#allocation4 + $0x48] sm:$0xff] %vm2180, %v4265
          %4282 = vst.msk [vmem:[#allocation4 + $0x50] sm:$0xff] %vm2180, %v4266
          %4283 = vst.msk [vmem:[#allocation4 + $0x58] sm:$0xff] %vm2180, %v4267
          %4284 = vst.msk [vmem:[#allocation4 + $0x60] sm:$0xff] %vm2180, %v4268
          %4285 = vst.msk [vmem:[#allocation4 + $0x68] sm:$0xff] %vm2180, %v4269
          %4286 = vst.msk [vmem:[#allocation4 + $0x70] sm:$0xff] %vm2180, %v4270
          %4287 = vst.msk [vmem:[#allocation4 + $0x78] sm:$0xff] %vm2180, %v4271
          %v4288 = vld [vmem:[#allocation4] sm:$0xff]
          %v4289 = vld [vmem:[#allocation4 + $0x8] sm:$0xff]
          %v4290 = vld [vmem:[#allocation4 + $0x10] sm:$0xff]
          %v4291 = vld [vmem:[#allocation4 + $0x18] sm:$0xff]
          %v4292 = vld [vmem:[#allocation4 + $0x20] sm:$0xff]
          %v4293 = vld [vmem:[#allocation4 + $0x28] sm:$0xff]
          %v4294 = vld [vmem:[#allocation4 + $0x30] sm:$0xff]
          %v4295 = vld [vmem:[#allocation4 + $0x38] sm:$0xff]
          %v4296 = vld [vmem:[#allocation4 + $0x40] sm:$0xff]
          %v4297 = vld [vmem:[#allocation4 + $0x48] sm:$0xff]
          %v4298 = vld [vmem:[#allocation4 + $0x50] sm:$0xff]
          %v4299 = vld [vmem:[#allocation4 + $0x58] sm:$0xff]
          %v4300 = vld [vmem:[#allocation4 + $0x60] sm:$0xff]
          %v4301 = vld [vmem:[#allocation4 + $0x68] sm:$0xff]
          %v4302 = vld [vmem:[#allocation4 + $0x70] sm:$0xff]
          %v4303 = vld [vmem:[#allocation4 + $0x78] sm:$0xff]
          %4304 = vset.pattern.permute.xlu0 2
          %4305 = vperm.xlu0 %4304, %v4032
          %v4306 = vpop.permute.xlu0 %4305
          %4308 = vset.pattern.permute.xlu0 2
          %4309 = vperm.xlu0 %4308, %v4033
          %v4310 = vpop.permute.xlu0 %4309
          %4312 = vset.pattern.permute.xlu0 2
          %4313 = vperm.xlu0 %4312, %v4034
          %v4314 = vpop.permute.xlu0 %4313
          %4316 = vset.pattern.permute.xlu0 2
          %4317 = vperm.xlu0 %4316, %v4035
          %v4318 = vpop.permute.xlu0 %4317
          %4320 = vset.pattern.permute.xlu0 2
          %4321 = vperm.xlu0 %4320, %v4036
          %v4322 = vpop.permute.xlu0 %4321
          %4324 = vset.pattern.permute.xlu0 2
          %4325 = vperm.xlu0 %4324, %v4037
          %v4326 = vpop.permute.xlu0 %4325
          %4328 = vset.pattern.permute.xlu0 2
          %4329 = vperm.xlu0 %4328, %v4038
          %v4330 = vpop.permute.xlu0 %4329
          %4332 = vset.pattern.permute.xlu0 2
          %4333 = vperm.xlu0 %4332, %v4039
          %v4334 = vpop.permute.xlu0 %4333
          %4336 = vset.pattern.permute.xlu0 2
          %4337 = vperm.xlu0 %4336, %v4040
          %v4338 = vpop.permute.xlu0 %4337
          %4340 = vset.pattern.permute.xlu0 2
          %4341 = vperm.xlu0 %4340, %v4041
          %v4342 = vpop.permute.xlu0 %4341
          %4344 = vset.pattern.permute.xlu0 2
          %4345 = vperm.xlu0 %4344, %v4042
          %v4346 = vpop.permute.xlu0 %4345
          %4348 = vset.pattern.permute.xlu0 2
          %4349 = vperm.xlu0 %4348, %v4043
          %v4350 = vpop.permute.xlu0 %4349
          %4352 = vset.pattern.permute.xlu0 2
          %4353 = vperm.xlu0 %4352, %v4044
          %v4354 = vpop.permute.xlu0 %4353
          %4356 = vset.pattern.permute.xlu0 2
          %4357 = vperm.xlu0 %4356, %v4045
          %v4358 = vpop.permute.xlu0 %4357
          %4360 = vset.pattern.permute.xlu0 2
          %4361 = vperm.xlu0 %4360, %v4046
          %v4362 = vpop.permute.xlu0 %4361
          %4364 = vset.pattern.permute.xlu0 2
          %4365 = vperm.xlu0 %4364, %v4047
          %v4366 = vpop.permute.xlu0 %4365
          %v4368 = vmul.f32 %v4288, %v4306
          %v4369 = vmul.f32 %v4289, %v4310
          %v4370 = vmul.f32 %v4290, %v4314
          %v4371 = vmul.f32 %v4291, %v4318
          %v4372 = vmul.f32 %v4292, %v4322
          %v4373 = vmul.f32 %v4293, %v4326
          %v4374 = vmul.f32 %v4294, %v4330
          %v4375 = vmul.f32 %v4295, %v4334
          %v4376 = vmul.f32 %v4296, %v4338
          %v4377 = vmul.f32 %v4297, %v4342
          %v4378 = vmul.f32 %v4298, %v4346
          %v4379 = vmul.f32 %v4299, %v4350
          %v4380 = vmul.f32 %v4300, %v4354
          %v4381 = vmul.f32 %v4301, %v4358
          %v4382 = vmul.f32 %v4302, %v4362
          %v4383 = vmul.f32 %v4303, %v4366
          %4384 = vst.msk [vmem:[#allocation4] sm:$0xff] %vm3080, %v4368
          %4385 = vst.msk [vmem:[#allocation4 + $0x8] sm:$0xff] %vm3080, %v4369
          %4386 = vst.msk [vmem:[#allocation4 + $0x10] sm:$0xff] %vm3080, %v4370
          %4387 = vst.msk [vmem:[#allocation4 + $0x18] sm:$0xff] %vm3080, %v4371
          %4388 = vst.msk [vmem:[#allocation4 + $0x20] sm:$0xff] %vm3080, %v4372
          %4389 = vst.msk [vmem:[#allocation4 + $0x28] sm:$0xff] %vm3080, %v4373
          %4390 = vst.msk [vmem:[#allocation4 + $0x30] sm:$0xff] %vm3080, %v4374
          %4391 = vst.msk [vmem:[#allocation4 + $0x38] sm:$0xff] %vm3080, %v4375
          %4392 = vst.msk [vmem:[#allocation4 + $0x40] sm:$0xff] %vm3080, %v4376
          %4393 = vst.msk [vmem:[#allocation4 + $0x48] sm:$0xff] %vm3080, %v4377
          %4394 = vst.msk [vmem:[#allocation4 + $0x50] sm:$0xff] %vm3080, %v4378
          %4395 = vst.msk [vmem:[#allocation4 + $0x58] sm:$0xff] %vm3080, %v4379
          %4396 = vst.msk [vmem:[#allocation4 + $0x60] sm:$0xff] %vm3080, %v4380
          %4397 = vst.msk [vmem:[#allocation4 + $0x68] sm:$0xff] %vm3080, %v4381
          %4398 = vst.msk [vmem:[#allocation4 + $0x70] sm:$0xff] %vm3080, %v4382
          %4399 = vst.msk [vmem:[#allocation4 + $0x78] sm:$0xff] %vm3080, %v4383
          %v4400 = vld [vmem:[#allocation4] sm:$0xff]
          %v4401 = vld [vmem:[#allocation4 + $0x8] sm:$0xff]
          %v4402 = vld [vmem:[#allocation4 + $0x10] sm:$0xff]
          %v4403 = vld [vmem:[#allocation4 + $0x18] sm:$0xff]
          %v4404 = vld [vmem:[#allocation4 + $0x20] sm:$0xff]
          %v4405 = vld [vmem:[#allocation4 + $0x28] sm:$0xff]
          %v4406 = vld [vmem:[#allocation4 + $0x30] sm:$0xff]
          %v4407 = vld [vmem:[#allocation4 + $0x38] sm:$0xff]
          %v4408 = vld [vmem:[#allocation4 + $0x40] sm:$0xff]
          %v4409 = vld [vmem:[#allocation4 + $0x48] sm:$0xff]
          %v4410 = vld [vmem:[#allocation4 + $0x50] sm:$0xff]
          %v4411 = vld [vmem:[#allocation4 + $0x58] sm:$0xff]
          %v4412 = vld [vmem:[#allocation4 + $0x60] sm:$0xff]
          %v4413 = vld [vmem:[#allocation4 + $0x68] sm:$0xff]
          %v4414 = vld [vmem:[#allocation4 + $0x70] sm:$0xff]
          %v4415 = vld [vmem:[#allocation4 + $0x78] sm:$0xff]
          %4416 = vset.pattern.permute.xlu0 3
          %4417 = vperm.xlu0 %4416, %v4032
          %v4418 = vpop.permute.xlu0 %4417
          %4420 = vset.pattern.permute.xlu0 3
          %4421 = vperm.xlu0 %4420, %v4033
          %v4422 = vpop.permute.xlu0 %4421
          %4424 = vset.pattern.permute.xlu0 3
          %4425 = vperm.xlu0 %4424, %v4034
          %v4426 = vpop.permute.xlu0 %4425
          %4428 = vset.pattern.permute.xlu0 3
          %4429 = vperm.xlu0 %4428, %v4035
          %v4430 = vpop.permute.xlu0 %4429
          %4432 = vset.pattern.permute.xlu0 3
          %4433 = vperm.xlu0 %4432, %v4036
          %v4434 = vpop.permute.xlu0 %4433
          %4436 = vset.pattern.permute.xlu0 3
          %4437 = vperm.xlu0 %4436, %v4037
          %v4438 = vpop.permute.xlu0 %4437
          %4440 = vset.pattern.permute.xlu0 3
          %4441 = vperm.xlu0 %4440, %v4038
          %v4442 = vpop.permute.xlu0 %4441
          %4444 = vset.pattern.permute.xlu0 3
          %4445 = vperm.xlu0 %4444, %v4039
          %v4446 = vpop.permute.xlu0 %4445
          %4448 = vset.pattern.permute.xlu0 3
          %4449 = vperm.xlu0 %4448, %v4040
          %v4450 = vpop.permute.xlu0 %4449
          %4452 = vset.pattern.permute.xlu0 3
          %4453 = vperm.xlu0 %4452, %v4041
          %v4454 = vpop.permute.xlu0 %4453
          %4456 = vset.pattern.permute.xlu0 3
          %4457 = vperm.xlu0 %4456, %v4042
          %v4458 = vpop.permute.xlu0 %4457
          %4460 = vset.pattern.permute.xlu0 3
          %4461 = vperm.xlu0 %4460, %v4043
          %v4462 = vpop.permute.xlu0 %4461
          %4464 = vset.pattern.permute.xlu0 3
          %4465 = vperm.xlu0 %4464, %v4044
          %v4466 = vpop.permute.xlu0 %4465
          %4468 = vset.pattern.permute.xlu0 3
          %4469 = vperm.xlu0 %4468, %v4045
          %v4470 = vpop.permute.xlu0 %4469
          %4472 = vset.pattern.permute.xlu0 3
          %4473 = vperm.xlu0 %4472, %v4046
          %v4474 = vpop.permute.xlu0 %4473
          %4476 = vset.pattern.permute.xlu0 3
          %4477 = vperm.xlu0 %4476, %v4047
          %v4478 = vpop.permute.xlu0 %4477
          %v4480 = vmul.f32 %v4400, %v4418
          %v4481 = vmul.f32 %v4401, %v4422
          %v4482 = vmul.f32 %v4402, %v4426
          %v4483 = vmul.f32 %v4403, %v4430
          %v4484 = vmul.f32 %v4404, %v4434
          %v4485 = vmul.f32 %v4405, %v4438
          %v4486 = vmul.f32 %v4406, %v4442
          %v4487 = vmul.f32 %v4407, %v4446
          %v4488 = vmul.f32 %v4408, %v4450
          %v4489 = vmul.f32 %v4409, %v4454
          %v4490 = vmul.f32 %v4410, %v4458
          %v4491 = vmul.f32 %v4411, %v4462
          %v4492 = vmul.f32 %v4412, %v4466
          %v4493 = vmul.f32 %v4413, %v4470
          %v4494 = vmul.f32 %v4414, %v4474
          %v4495 = vmul.f32 %v4415, %v4478
          %4496 = vst.msk [vmem:[#allocation4] sm:$0xff] %vm3980, %v4480
          %4497 = vst.msk [vmem:[#allocation4 + $0x8] sm:$0xff] %vm3980, %v4481
          %4498 = vst.msk [vmem:[#allocation4 + $0x10] sm:$0xff] %vm3980, %v4482
          %4499 = vst.msk [vmem:[#allocation4 + $0x18] sm:$0xff] %vm3980, %v4483
          %4500 = vst.msk [vmem:[#allocation4 + $0x20] sm:$0xff] %vm3980, %v4484
          %4501 = vst.msk [vmem:[#allocation4 + $0x28] sm:$0xff] %vm3980, %v4485
          %4502 = vst.msk [vmem:[#allocation4 + $0x30] sm:$0xff] %vm3980, %v4486
          %4503 = vst.msk [vmem:[#allocation4 + $0x38] sm:$0xff] %vm3980, %v4487
          %4504 = vst.msk [vmem:[#allocation4 + $0x40] sm:$0xff] %vm3980, %v4488
          %4505 = vst.msk [vmem:[#allocation4 + $0x48] sm:$0xff] %vm3980, %v4489
          %4506 = vst.msk [vmem:[#allocation4 + $0x50] sm:$0xff] %vm3980, %v4490
          %4507 = vst.msk [vmem:[#allocation4 + $0x58] sm:$0xff] %vm3980, %v4491
          %4508 = vst.msk [vmem:[#allocation4 + $0x60] sm:$0xff] %vm3980, %v4492
          %4509 = vst.msk [vmem:[#allocation4 + $0x68] sm:$0xff] %vm3980, %v4493
          %4510 = vst.msk [vmem:[#allocation4 + $0x70] sm:$0xff] %vm3980, %v4494
          %4511 = vst.msk [vmem:[#allocation4 + $0x78] sm:$0xff] %vm3980, %v4495
          %v4512 = vld [vmem:[#allocation4] sm:$0xff]
          %v4513 = vld [vmem:[#allocation4 + $0x8] sm:$0xff]
          %v4514 = vld [vmem:[#allocation4 + $0x10] sm:$0xff]
          %v4515 = vld [vmem:[#allocation4 + $0x18] sm:$0xff]
          %v4516 = vld [vmem:[#allocation4 + $0x20] sm:$0xff]
          %v4517 = vld [vmem:[#allocation4 + $0x28] sm:$0xff]
          %v4518 = vld [vmem:[#allocation4 + $0x30] sm:$0xff]
          %v4519 = vld [vmem:[#allocation4 + $0x38] sm:$0xff]
          %v4520 = vld [vmem:[#allocation4 + $0x40] sm:$0xff]
          %v4521 = vld [vmem:[#allocation4 + $0x48] sm:$0xff]
          %v4522 = vld [vmem:[#allocation4 + $0x50] sm:$0xff]
          %v4523 = vld [vmem:[#allocation4 + $0x58] sm:$0xff]
          %v4524 = vld [vmem:[#allocation4 + $0x60] sm:$0xff]
          %v4525 = vld [vmem:[#allocation4 + $0x68] sm:$0xff]
          %v4526 = vld [vmem:[#allocation4 + $0x70] sm:$0xff]
          %v4527 = vld [vmem:[#allocation4 + $0x78] sm:$0xff]
          %v4528 = vpack.c.bf16 %v4513, %v4512
          %v4529 = vpack.c.bf16 %v4515, %v4514
          %v4530 = vpack.c.bf16 %v4517, %v4516
          %v4531 = vpack.c.bf16 %v4519, %v4518
          %v4532 = vpack.c.bf16 %v4521, %v4520
          %v4533 = vpack.c.bf16 %v4523, %v4522
          %v4534 = vpack.c.bf16 %v4525, %v4524
          %v4535 = vpack.c.bf16 %v4527, %v4526
          %v4544 = vunpack.c.l.b16 %v4528
          %v4545 = vunpack.c.h.b16 %v4528
          %v4546 = vunpack.c.l.b16 %v4529
          %v4547 = vunpack.c.h.b16 %v4529
          %v4548 = vunpack.c.l.b16 %v4530
          %v4549 = vunpack.c.h.b16 %v4530
          %v4550 = vunpack.c.l.b16 %v4531
          %v4551 = vunpack.c.h.b16 %v4531
          %v4552 = vunpack.c.l.b16 %v4532
          %v4553 = vunpack.c.h.b16 %v4532
          %v4554 = vunpack.c.l.b16 %v4533
          %v4555 = vunpack.c.h.b16 %v4533
          %v4556 = vunpack.c.l.b16 %v4534
          %v4557 = vunpack.c.h.b16 %v4534
          %v4558 = vunpack.c.l.b16 %v4535
          %v4559 = vunpack.c.h.b16 %v4535
          %v4560 = vpack.c.b16 %v4544, %v4544
          %v4561 = vpack.c.b16 %v4545, %v4545
          %v4562 = vpack.c.b16 %v4546, %v4546
          %v4563 = vpack.c.b16 %v4547, %v4547
          %v4564 = vpack.c.b16 %v4548, %v4548
          %v4565 = vpack.c.b16 %v4549, %v4549
          %v4566 = vpack.c.b16 %v4550, %v4550
          %v4567 = vpack.c.b16 %v4551, %v4551
          %v4568 = vpack.c.b16 %v4552, %v4552
          %v4569 = vpack.c.b16 %v4553, %v4553
          %v4570 = vpack.c.b16 %v4554, %v4554
          %v4571 = vpack.c.b16 %v4555, %v4555
          %v4572 = vpack.c.b16 %v4556, %v4556
          %v4573 = vpack.c.b16 %v4557, %v4557
          %v4574 = vpack.c.b16 %v4558, %v4558
          %v4575 = vpack.c.b16 %v4559, %v4559
          %4592 = vst [vmem:[%s298] sm:$0xf] %v4560
          %4593 = vst [vmem:[%s298 + $0x4] sm:$0xf] %v4561
          %4594 = vst [vmem:[%s298 + $0x8] sm:$0xf] %v4562
          %4595 = vst [vmem:[%s298 + $0xc] sm:$0xf] %v4563
          %4596 = vst [vmem:[%s298 + $0x10] sm:$0xf] %v4564
          %4597 = vst [vmem:[%s298 + $0x14] sm:$0xf] %v4565
          %4598 = vst [vmem:[%s298 + $0x18] sm:$0xf] %v4566
          %4599 = vst [vmem:[%s298 + $0x1c] sm:$0xf] %v4567
          %4600 = vst [vmem:[%s298 + $0x20] sm:$0xf] %v4568
          %4601 = vst [vmem:[%s298 + $0x24] sm:$0xf] %v4569
          %4602 = vst [vmem:[%s298 + $0x28] sm:$0xf] %v4570
          %4603 = vst [vmem:[%s298 + $0x2c] sm:$0xf] %v4571
          %4604 = vst [vmem:[%s298 + $0x30] sm:$0xf] %v4572
          %4605 = vst [vmem:[%s298 + $0x34] sm:$0xf] %v4573
          %4606 = vst [vmem:[%s298 + $0x38] sm:$0xf] %v4574
          %4607 = vst [vmem:[%s298 + $0x3c] sm:$0xf] %v4575
        $region52: #{tpu_custom_call.1} parent=31 // pred_fallthru
          _
        %s4608 = sand.u32 %s136, 1
        %s4609 = scalar_lea.sflag [#allocation7], %s4608
        %s4610 = sand.u32 %s136, 1
        %s4611 = smul.addr %s4610, 64
        %s4612 = scalar_lea.vmem [#allocation11], %s4611
        // Predicated region
        $region53: #{tpu_custom_call.1} parent=31 // pred_check
          %p4613 = pneg %p146
        $region54: #{tpu_custom_call.1} parent=31 // pred_check_branch
          %4615 = sbr.rel (%p4613) target = $region56
        $region55: #{tpu_custom_call.1} parent=31 // pred_region
          %s4616 = smul.u32 16, %s29
          %s4618 = ssub.s32 1024, 1024
          %4619 = vsyncadd %s4609, %s4618
          %s4620 = smul.addr %s28, 16
          %s4621 = sadd.s32 %s4616, %s4620
          %s4622 = smul.addr %s4621, 64
          %s4623 = scalar_lea.hbm %s3, %s4622
          %s4624 = sshll.u32 %s4612, 4
          %s4625 = int_to_ptr.vmem [resolvable:$true] %s4624
          %4630 = dma.vmem_to_hbm [thread:$0]  %s4625, 1024, %s4623, %s4609, 64, 64, 4
        $region56: #{tpu_custom_call.1} parent=31 // pred_fallthru
          _
      $region32: #{tpu_custom_call.1} parent=5 // pred_fallthru
        _
      %p4631 = scmp.le.s32.totalorder 2, %s18
      // Predicated region
      $region57: #{tpu_custom_call.1} parent=5 // pred_check
        %p4632 = pneg %p4631
      $region58: #{tpu_custom_call.1} parent=5 // pred_check_branch
        %4634 = sbr.rel (%p4632) target = $region60
      $region59: #{tpu_custom_call.1} parent=5 // pred_region
        %s4635 = ssub.s32 %s18, 2
        // Predicated region
        $region61: #{tpu_custom_call.1} parent=59 // pred_check
          %p4636 = pneg %p152
        $region62: #{tpu_custom_call.1} parent=59 // pred_check_branch
          %4638 = sbr.rel (%p4636) target = $region64
        $region63: #{tpu_custom_call.1} parent=59 // pred_region
          %s4639 = sand.u32 %s137, 1
          %s4640 = scalar_lea.sflag [#allocation7], %s4639
          %s4641 = sand.u32 %s137, 1
          %s4642 = smul.addr %s4641, 64
          %s4643 = scalar_lea.vmem [#allocation11], %s4642
          %4644 = dma.done %s4640, 1024
        $region64: #{tpu_custom_call.1} parent=59 // pred_fallthru
          _
      $region60: #{tpu_custom_call.1} parent=5 // pred_fallthru
        _
    $region6: #{tpu_custom_call.1} parent=1 // loop_footer
      %s22 = sadd.s32 1, %s18
    $region7: #{tpu_custom_call.1} parent=1 // loop_footer_branch
      %17 = sbr.rel target = $region3
    $region8: #{tpu_custom_call.1} parent=1 // loop_exit
      _
    %4645 = vsyncpa [#allocation6], 1
    %s4646 = scalar_lea.sflag [#allocation6], 1
    %4647 = vsyncpa %s4646, 1
    %4648 = vsyncpa [#allocation9], 1
    %s4649 = scalar_lea.sflag [#allocation9], 1
    %4650 = vsyncpa %s4649, 1
    %4651 = vsyncpa [#allocation7], 1
    %s4652 = scalar_lea.sflag [#allocation7], 1
    %4653 = vsyncpa %s4652, 1

</llo_original>
